<compile_context>
chip_gen: v6e
topology: v6e:2x2x1
jax: 0.10.0
libtpu: 0.0.40
codegen_flags: <defaults>
</compile_context>

<pallas_src>
import functools

import numpy as np
import jax
import jax.numpy as jnp
from jax.experimental import pallas as pl
from jax.experimental.pallas import tpu as pltpu

STRIDE = 4
PADDING = 12
DILATION = 3
KSIZE = 10


def _round_up(x, m):
    return ((x + m - 1) // m) * m


def _phase_taps(stride, padding, dilation, K):
    """Static polyphase tap table.

    For output time t = stride*q + r, ConvTranspose1d gives
      y[t] = sum over (k, l) with l*stride - padding + k*dilation == t
    i.e. per phase r only the taps with k ≡ 3r (mod 4) contribute, each reading
    x[q + off].  Returns, per phase r, the list of (k, off).
    """
    taps = []
    for r in range(stride):
        row = []
        for k in range(K):
            num = r + padding - dilation * k
            if num % stride == 0:
                row.append((k, num // stride))
        taps.append(row)
    return taps


def _polyphase_kernel(x_ref, xh_ref, w_ref, b_ref, o_ref, *, taps, Q, CO, relu):
    # x_ref:  (Q, CI)      main input tile (q on sublanes, channels on lanes)
    # xh_ref: (H, CI)      halo rows just past the tile (same padded array)
    # w_ref:  (CI, K*CO)   all K taps packed side by side on the lane axis
    # b_ref:  (1, S*CO)    bias tiled once per phase (f32)
    # o_ref:  (Q, S*CO)    phase-major output tile: phase r at cols [r*CO,(r+1)*CO)
    x_full = jnp.concatenate([x_ref[...], xh_ref[...]], axis=0)          # (Q+H, CI)

    # One wide matmul computes every tap for every row.  Output width K*CO fills
    # the 256-wide MXU even for CO=128 (layer 2) or CO=1 (layer 3), and the f32
    # accumulation happens on the MXU regardless of the input dtype.
    m = jnp.dot(x_full, w_ref[...], preferred_element_type=jnp.float32)  # (Q+H, K*CO)

    cols = []
    for tap_list in taps:                       # static python loop over phases
        acc = jnp.zeros((Q, CO), jnp.float32)
        for (k, off) in tap_list:               # 2-3 static taps per phase
            acc = acc + m[off:off + Q, k * CO:(k + 1) * CO]
        cols.append(acc)

    y = jnp.concatenate(cols, axis=-1) + b_ref[...]                      # (Q, S*CO)
    if relu:
        y = jnp.maximum(y, 0.0)
    o_ref[...] = y.astype(o_ref.dtype)


def conv_transpose1d_polyphase(x_nlc, W, b, *, stride, padding, dilation,
                               relu, q_tile=256, compute_dtype=jnp.float32):
    """ConvTranspose1d matching torch semantics, polyphase + q-tiled.

    x_nlc: (N, L, CI) time-major input.
    W:     (CI, CO, K) PyTorch ConvTranspose1d weight layout.
    b:     (CO,)
    returns (N, T, CO) with T = (L-1)*stride - 2*padding + dilation*(K-1) + 1.
    """
    N, L, CI = x_nlc.shape
    CIw, CO, K = W.shape
    assert CIw == CI
    T = (L - 1) * stride - 2 * padding + dilation * (K - 1) + 1
    assert T == stride * L, "polyphase kernel assumes T == stride*L (true for k=10,s=4,d=3,p=12)"

    taps_raw = _phase_taps(stride, padding, dilation, K)
    offs = [o for row in taps_raw for (_, o) in row]
    left = max(0, -min(offs))                       # left zero-pad (3 here)
    halo = max(8, _round_up(max(offs) + left, 8))   # halo rows past each tile (8 here)
    taps = [[(k, o + left) for (k, o) in row] for row in taps_raw]

    # ---- q (time) tiling: grid = (N, n_qt), both parallel -------------------
    q_tile = min(q_tile, _round_up(L, halo))
    q_tile = _round_up(q_tile, halo)
    Lq_pad = _round_up(L, q_tile)
    n_qt = Lq_pad // q_tile
    P_total = Lq_pad + halo                          # padded input length

    xt = x_nlc.astype(compute_dtype)
    x_pad = jnp.zeros((N, P_total, CI), compute_dtype).at[:, left:left + L, :].set(xt)

    # Pack the K taps side by side on the lane axis: tap k at cols [k*CO,(k+1)*CO).
    W_packed = jnp.transpose(W, (0, 2, 1)).reshape(CI, K * CO).astype(compute_dtype)
    b_tiled = jnp.tile(b.astype(jnp.float32), (stride,)).reshape(1, stride * CO)

    KCO = K * CO
    SCO = stride * CO
    hb = q_tile // halo                              # halo-block index stride

    kernel = functools.partial(_polyphase_kernel, taps=taps, Q=q_tile, CO=CO, relu=relu)

    itemsize = jnp.dtype(compute_dtype).itemsize
    flops = int(2.0 * N * n_qt * (q_tile + halo) * CI * KCO)
    bytes_accessed = int(x_pad.size * itemsize + W_packed.size * itemsize
                         + b_tiled.size * 4 + N * Lq_pad * SCO * itemsize)

    out = pl.pallas_call(
        kernel,
        out_shape=jax.ShapeDtypeStruct((N, Lq_pad, SCO), compute_dtype),
        grid=(N, n_qt),
        in_specs=[
            # main q-tile: default pipeline double-buffering hides the DMA
            pl.BlockSpec((None, q_tile, CI), lambda n, qt: (n, qt, 0)),
            # halo rows just past the tile (second view of the same padded array)
            pl.BlockSpec((None, halo, CI), lambda n, qt: (n, (qt + 1) * hb, 0)),
            # packed weights + bias: constant index map -> resident, no re-DMA
            pl.BlockSpec((CI, KCO), lambda n, qt: (0, 0)),
            pl.BlockSpec((1, SCO), lambda n, qt: (0, 0)),
        ],
        out_specs=pl.BlockSpec((None, q_tile, SCO), lambda n, qt: (n, qt, 0)),
        compiler_params=pltpu.CompilerParams(
            dimension_semantics=("parallel", "parallel")),
        cost_estimate=pl.CostEstimate(flops=flops, transcendentals=0,
                                      bytes_accessed=bytes_accessed),
    )(x_pad, x_pad, W_packed, b_tiled)

    out = out[:, :L, :]                       # drop q-padding rows
    # free interleave: row-major (q, r, co) flatten is exactly t = stride*q + r
    return out.reshape(N, stride * L, CO)


def init_params(key, rate=1, cond_ch=0, complexity=1):
    c_in = (16 - cond_ch) * rate + cond_ch
    layer_dims = [(c_in, 512 * complexity),
                  (512 * complexity, 128 * complexity),
                  (128 * complexity, 1)]
    params = []
    for (ci, co) in layer_dims:
        key, kw, kb = jax.random.split(key, 3)
        bound = 1.0 / np.sqrt(ci * KSIZE)  # PyTorch-style uniform fan-in init
        W = jax.random.uniform(kw, (ci, co, KSIZE), jnp.float32, -bound, bound)
        b = jax.random.uniform(kb, (co,), jnp.float32, -bound, bound)
        params.append((W, b))
    return params


def decoder_forward(z, params, compute_dtype=jnp.float32, q_tile=256):
    # z: (N, C_in, L) NCL, like the PyTorch module.
    x = jnp.transpose(z, (0, 2, 1))  # -> q-major (N, L, C)
    relus = (True, True, False)
    for (W, b), relu in zip(params, relus):
        x = conv_transpose1d_polyphase(x, W, b, stride=STRIDE, padding=PADDING,
                                       dilation=DILATION, relu=relu,
                                       q_tile=q_tile, compute_dtype=compute_dtype)
    # final layer has CO=1, so this "transpose" is just a free reshape to NCL
    return jnp.transpose(x, (0, 2, 1)).astype(jnp.float32)


# ---------------- independent numpy reference (direct scatter formula) -------
def _convT_ref_np(x, W, b, s, p, d, relu):
    # x: (N, CI, L), W: (CI, CO, K), b: (CO,)
    N, CI, L = x.shape
    _, CO, K = W.shape
    T = (L - 1) * s - 2 * p + d * (K - 1) + 1
    y = np.zeros((N, CO, T), np.float32)
    for l in range(L):
        for k in range(K):
            t = l * s - p + k * d
            if 0 <= t < T:
                y[:, :, t] += np.einsum("nc,cd->nd", x[:, :, l], W[:, :, k])
    y += b[None, :, None]
    if relu:
        y = np.maximum(y, 0.0)
    return y


if __name__ == "__main__":
    key = jax.random.PRNGKey(0)
    key, kz = jax.random.split(key)

    rate, cond_ch, complexity = 1, 0, 1
    N, L = 2, 8
    C_in = (16 - cond_ch) * rate + cond_ch  # 16

    params = init_params(key, rate=rate, cond_ch=cond_ch, complexity=complexity)
    z = jax.random.normal(kz, (N, C_in, L), jnp.float32)

    # f32 path (exact module semantics)
    fwd = jax.jit(lambda zz: decoder_forward(zz, params))
    y = jax.block_until_ready(fwd(z))
    assert y.shape == (N, 1, L * STRIDE ** 3), y.shape  # (2, 1, 512)

    # Verify against an independent numpy reference of ConvTranspose1d.
    x_np = np.asarray(z, np.float32)
    for (W, b), relu in zip(params, (True, True, False)):
        x_np = _convT_ref_np(x_np, np.asarray(W), np.asarray(b),
                             STRIDE, PADDING, DILATION, relu)
    np.testing.assert_allclose(np.asarray(y), x_np, rtol=2e-2, atol=2e-2)

    # bf16 activations/weights with f32 MXU accumulation (perf mode); loose check.
    fwd_bf16 = jax.jit(lambda zz: decoder_forward(zz, params,
                                                  compute_dtype=jnp.bfloat16))
    y_bf16 = jax.block_until_ready(fwd_bf16(z))
    assert y_bf16.shape == y.shape
    np.testing.assert_allclose(np.asarray(y_bf16, np.float32), x_np,
                               rtol=1e-1, atol=1e-1)

    print("KERNEL_OK")
</pallas_src>

<mosaic_0001>
module attributes {stable_mosaic.version = 11 : i64} {
  func.func @_polyphase_kernel(%arg0: i32, %arg1: i32, %arg2: memref<1x8x16xf32, #tpu.memory_space<vmem>>, %arg3: memref<1x8x16xf32, #tpu.memory_space<vmem>>, %arg4: memref<16x5120xf32, #tpu.memory_space<vmem>>, %arg5: memref<1x2048xf32, #tpu.memory_space<vmem>>, %arg6: memref<1x8x2048xf32, #tpu.memory_space<vmem>>) attributes {dimension_semantics = [#tpu.dimension_semantics<parallel>, #tpu.dimension_semantics<parallel>], iteration_bounds = array<i64: 2, 1>, scalar_prefetch = 0 : i64, scratch_operands = 0 : i64, tpu.core_type = #tpu.core_type<tc>, window_params = [{transform_indices = @transform_0, window_bounds = array<i64: 1, 8, 16>}, {transform_indices = @transform_1, window_bounds = array<i64: 1, 8, 16>}, {pipeline_mode = #tpu.pipeline_mode<synchronous>, transform_indices = @transform_2, window_bounds = array<i64: 16, 5120>}, {pipeline_mode = #tpu.pipeline_mode<synchronous>, transform_indices = @transform_3, window_bounds = array<i64: 1, 2048>}, {transform_indices = @transform_4, window_bounds = array<i64: 1, 8, 2048>}]} {
    %c0 = arith.constant 0 : index
    %c0_0 = arith.constant 0 : index
    %c0_1 = arith.constant 0 : index
    %0 = vector.load %arg2[%c0, %c0_0, %c0_1] : memref<1x8x16xf32, #tpu.memory_space<vmem>>, vector<1x8x16xf32>
    %1 = vector.shape_cast %0 : vector<1x8x16xf32> to vector<8x16xf32>
    %c0_2 = arith.constant 0 : index
    %c0_3 = arith.constant 0 : index
    %c0_4 = arith.constant 0 : index
    %2 = vector.load %arg3[%c0_2, %c0_3, %c0_4] : memref<1x8x16xf32, #tpu.memory_space<vmem>>, vector<1x8x16xf32>
    %3 = vector.shape_cast %2 : vector<1x8x16xf32> to vector<8x16xf32>
    %4 = tpu.concatenate %1, %3 in 0 : vector<8x16xf32>, vector<8x16xf32> -> vector<16x16xf32>
    %c0_5 = arith.constant 0 : index
    %c0_6 = arith.constant 0 : index
    %5 = vector.load %arg4[%c0_5, %c0_6] : memref<16x5120xf32, #tpu.memory_space<vmem>>, vector<16x5120xf32>
    %cst = arith.constant dense<0.000000e+00> : vector<16x5120xf32>
    %6 = tpu.matmul %4, %5, %cst {dimension_numbers = #tpu.dot_dimension_numbers<[1], [0], [0], [1], [0, 0, 1, 1], [], []>} : vector<16x16xf32>, vector<16x5120xf32>, vector<16x5120xf32> -> vector<16x5120xf32>
    %cst_7 = arith.constant 0.000000e+00 : f32
    %7 = vector.broadcast %cst_7 : f32 to vector<8x512xf32>
    %8 = vector.extract_strided_slice %6 {offsets = [6, 0], sizes = [8, 512], strides = [1, 1]} : vector<16x5120xf32> to vector<8x512xf32>
    %9 = arith.addf %7, %8 : vector<8x512xf32>
    %10 = vector.extract_strided_slice %6 {offsets = [3, 2048], sizes = [8, 512], strides = [1, 1]} : vector<16x5120xf32> to vector<8x512xf32>
    %11 = arith.addf %9, %10 : vector<8x512xf32>
    %12 = vector.extract_strided_slice %6 {offsets = [0, 4096], sizes = [8, 512], strides = [1, 1]} : vector<16x5120xf32> to vector<8x512xf32>
    %13 = arith.addf %11, %12 : vector<8x512xf32>
    %cst_8 = arith.constant 0.000000e+00 : f32
    %14 = vector.broadcast %cst_8 : f32 to vector<8x512xf32>
    %15 = vector.extract_strided_slice %6 {offsets = [4, 1536], sizes = [8, 512], strides = [1, 1]} : vector<16x5120xf32> to vector<8x512xf32>
    %16 = arith.addf %14, %15 : vector<8x512xf32>
    %17 = vector.extract_strided_slice %6 {offsets = [1, 3584], sizes = [8, 512], strides = [1, 1]} : vector<16x5120xf32> to vector<8x512xf32>
    %18 = arith.addf %16, %17 : vector<8x512xf32>
    %cst_9 = arith.constant 0.000000e+00 : f32
    %19 = vector.broadcast %cst_9 : f32 to vector<8x512xf32>
    %20 = vector.extract_strided_slice %6 {offsets = [5, 1024], sizes = [8, 512], strides = [1, 1]} : vector<16x5120xf32> to vector<8x512xf32>
    %21 = arith.addf %19, %20 : vector<8x512xf32>
    %22 = vector.extract_strided_slice %6 {offsets = [2, 3072], sizes = [8, 512], strides = [1, 1]} : vector<16x5120xf32> to vector<8x512xf32>
    %23 = arith.addf %21, %22 : vector<8x512xf32>
    %cst_10 = arith.constant 0.000000e+00 : f32
    %24 = vector.broadcast %cst_10 : f32 to vector<8x512xf32>
    %25 = vector.extract_strided_slice %6 {offsets = [6, 512], sizes = [8, 512], strides = [1, 1]} : vector<16x5120xf32> to vector<8x512xf32>
    %26 = arith.addf %24, %25 : vector<8x512xf32>
    %27 = vector.extract_strided_slice %6 {offsets = [3, 2560], sizes = [8, 512], strides = [1, 1]} : vector<16x5120xf32> to vector<8x512xf32>
    %28 = arith.addf %26, %27 : vector<8x512xf32>
    %29 = vector.extract_strided_slice %6 {offsets = [0, 4608], sizes = [8, 512], strides = [1, 1]} : vector<16x5120xf32> to vector<8x512xf32>
    %30 = arith.addf %28, %29 : vector<8x512xf32>
    %31 = tpu.concatenate %13, %18, %23, %30 in 1 : vector<8x512xf32>, vector<8x512xf32>, vector<8x512xf32>, vector<8x512xf32> -> vector<8x2048xf32>
    %c0_11 = arith.constant 0 : index
    %c0_12 = arith.constant 0 : index
    %32 = vector.load %arg5[%c0_11, %c0_12] : memref<1x2048xf32, #tpu.memory_space<vmem>>, vector<1x2048xf32>
    %33 = vector.broadcast %32 : vector<1x2048xf32> to vector<8x2048xf32>
    %34 = arith.addf %31, %33 : vector<8x2048xf32>
    %cst_13 = arith.constant 0.000000e+00 : f32
    %35 = vector.broadcast %cst_13 : f32 to vector<8x2048xf32>
    %36 = arith.maximumf %34, %35 : vector<8x2048xf32>
    %c0_14 = arith.constant 0 : index
    %c0_15 = arith.constant 0 : index
    %c0_16 = arith.constant 0 : index
    %37 = vector.load %arg6[%c0_14, %c0_15, %c0_16] : memref<1x8x2048xf32, #tpu.memory_space<vmem>>, vector<1x8x2048xf32>
    %38 = vector.shape_cast %37 : vector<1x8x2048xf32> to vector<8x2048xf32>
    %39 = vector.shape_cast %36 : vector<8x2048xf32> to vector<1x8x2048xf32>
    tpu.vector_store %arg6[%c0_14, %c0_15, %c0_16], %39 {strides = array<i32>} : memref<1x8x2048xf32, #tpu.memory_space<vmem>>, vector<1x8x2048xf32>,
    return
  }
  func.func @transform_0(%arg0: i32, %arg1: i32) -> (i32, i32, i32) {
    %c0_i32 = arith.constant 0 : i32
    %c0_i32_0 = arith.constant 0 : i32
    return %arg0, %arg1, %c0_i32 : i32, i32, i32
  }
  func.func @transform_1(%arg0: i32, %arg1: i32) -> (i32, i32, i32) {
    %c1_i32 = arith.constant 1 : i32
    %0 = arith.addi %arg1, %c1_i32 : i32
    %c1_i32_0 = arith.constant 1 : i32
    %1 = arith.muli %0, %c1_i32_0 : i32
    %c0_i32 = arith.constant 0 : i32
    %c0_i32_1 = arith.constant 0 : i32
    return %arg0, %1, %c0_i32 : i32, i32, i32
  }
  func.func @transform_2(%arg0: i32, %arg1: i32) -> (i32, i32) {
    %c0_i32 = arith.constant 0 : i32
    %c0_i32_0 = arith.constant 0 : i32
    %c0_i32_1 = arith.constant 0 : i32
    return %c0_i32, %c0_i32_0 : i32, i32
  }
  func.func @transform_3(%arg0: i32, %arg1: i32) -> (i32, i32) {
    %c0_i32 = arith.constant 0 : i32
    %c0_i32_0 = arith.constant 0 : i32
    %c0_i32_1 = arith.constant 0 : i32
    return %c0_i32, %c0_i32_0 : i32, i32
  }
  func.func @transform_4(%arg0: i32, %arg1: i32) -> (i32, i32, i32) {
    %c0_i32 = arith.constant 0 : i32
    %c0_i32_0 = arith.constant 0 : i32
    return %arg0, %arg1, %c0_i32 : i32, i32, i32
  }
}

module attributes {stable_mosaic.version = 11 : i64} {
  func.func @_polyphase_kernel(%arg0: i32, %arg1: i32, %arg2: memref<1x32x512xf32, #tpu.memory_space<vmem>>, %arg3: memref<1x8x512xf32, #tpu.memory_space<vmem>>, %arg4: memref<512x1280xf32, #tpu.memory_space<vmem>>, %arg5: memref<1x512xf32, #tpu.memory_space<vmem>>, %arg6: memref<1x32x512xf32, #tpu.memory_space<vmem>>) attributes {dimension_semantics = [#tpu.dimension_semantics<parallel>, #tpu.dimension_semantics<parallel>], iteration_bounds = array<i64: 2, 1>, scalar_prefetch = 0 : i64, scratch_operands = 0 : i64, tpu.core_type = #tpu.core_type<tc>, window_params = [{transform_indices = @transform_0, window_bounds = array<i64: 1, 32, 512>}, {transform_indices = @transform_1, window_bounds = array<i64: 1, 8, 512>}, {pipeline_mode = #tpu.pipeline_mode<synchronous>, transform_indices = @transform_2, window_bounds = array<i64: 512, 1280>}, {pipeline_mode = #tpu.pipeline_mode<synchronous>, transform_indices = @transform_3, window_bounds = array<i64: 1, 512>}, {transform_indices = @transform_4, window_bounds = array<i64: 1, 32, 512>}]} {
    %c0 = arith.constant 0 : index
    %c0_0 = arith.constant 0 : index
    %c0_1 = arith.constant 0 : index
    %0 = vector.load %arg2[%c0, %c0_0, %c0_1] : memref<1x32x512xf32, #tpu.memory_space<vmem>>, vector<1x32x512xf32>
    %1 = vector.shape_cast %0 : vector<1x32x512xf32> to vector<32x512xf32>
    %c0_2 = arith.constant 0 : index
    %c0_3 = arith.constant 0 : index
    %c0_4 = arith.constant 0 : index
    %2 = vector.load %arg3[%c0_2, %c0_3, %c0_4] : memref<1x8x512xf32, #tpu.memory_space<vmem>>, vector<1x8x512xf32>
    %3 = vector.shape_cast %2 : vector<1x8x512xf32> to vector<8x512xf32>
    %4 = tpu.concatenate %1, %3 in 0 : vector<32x512xf32>, vector<8x512xf32> -> vector<40x512xf32>
    %c0_5 = arith.constant 0 : index
    %c0_6 = arith.constant 0 : index
    %5 = vector.load %arg4[%c0_5, %c0_6] : memref<512x1280xf32, #tpu.memory_space<vmem>>, vector<512x1280xf32>
    %cst = arith.constant dense<0.000000e+00> : vector<40x1280xf32>
    %6 = tpu.matmul %4, %5, %cst {dimension_numbers = #tpu.dot_dimension_numbers<[1], [0], [0], [1], [0, 0, 1, 1], [], []>} : vector<40x512xf32>, vector<512x1280xf32>, vector<40x1280xf32> -> vector<40x1280xf32>
    %cst_7 = arith.constant 0.000000e+00 : f32
    %7 = vector.broadcast %cst_7 : f32 to vector<32x128xf32>
    %8 = vector.extract_strided_slice %6 {offsets = [6, 0], sizes = [32, 128], strides = [1, 1]} : vector<40x1280xf32> to vector<32x128xf32>
    %9 = arith.addf %7, %8 : vector<32x128xf32>
    %10 = vector.extract_strided_slice %6 {offsets = [3, 512], sizes = [32, 128], strides = [1, 1]} : vector<40x1280xf32> to vector<32x128xf32>
    %11 = arith.addf %9, %10 : vector<32x128xf32>
    %12 = vector.extract_strided_slice %6 {offsets = [0, 1024], sizes = [32, 128], strides = [1, 1]} : vector<40x1280xf32> to vector<32x128xf32>
    %13 = arith.addf %11, %12 : vector<32x128xf32>
    %cst_8 = arith.constant 0.000000e+00 : f32
    %14 = vector.broadcast %cst_8 : f32 to vector<32x128xf32>
    %15 = vector.extract_strided_slice %6 {offsets = [4, 384], sizes = [32, 128], strides = [1, 1]} : vector<40x1280xf32> to vector<32x128xf32>
    %16 = arith.addf %14, %15 : vector<32x128xf32>
    %17 = vector.extract_strided_slice %6 {offsets = [1, 896], sizes = [32, 128], strides = [1, 1]} : vector<40x1280xf32> to vector<32x128xf32>
    %18 = arith.addf %16, %17 : vector<32x128xf32>
    %cst_9 = arith.constant 0.000000e+00 : f32
    %19 = vector.broadcast %cst_9 : f32 to vector<32x128xf32>
    %20 = vector.extract_strided_slice %6 {offsets = [5, 256], sizes = [32, 128], strides = [1, 1]} : vector<40x1280xf32> to vector<32x128xf32>
    %21 = arith.addf %19, %20 : vector<32x128xf32>
    %22 = vector.extract_strided_slice %6 {offsets = [2, 768], sizes = [32, 128], strides = [1, 1]} : vector<40x1280xf32> to vector<32x128xf32>
    %23 = arith.addf %21, %22 : vector<32x128xf32>
    %cst_10 = arith.constant 0.000000e+00 : f32
    %24 = vector.broadcast %cst_10 : f32 to vector<32x128xf32>
    %25 = vector.extract_strided_slice %6 {offsets = [6, 128], sizes = [32, 128], strides = [1, 1]} : vector<40x1280xf32> to vector<32x128xf32>
    %26 = arith.addf %24, %25 : vector<32x128xf32>
    %27 = vector.extract_strided_slice %6 {offsets = [3, 640], sizes = [32, 128], strides = [1, 1]} : vector<40x1280xf32> to vector<32x128xf32>
    %28 = arith.addf %26, %27 : vector<32x128xf32>
    %29 = vector.extract_strided_slice %6 {offsets = [0, 1152], sizes = [32, 128], strides = [1, 1]} : vector<40x1280xf32> to vector<32x128xf32>
    %30 = arith.addf %28, %29 : vector<32x128xf32>
    %31 = tpu.concatenate %13, %18, %23, %30 in 1 : vector<32x128xf32>, vector<32x128xf32>, vector<32x128xf32>, vector<32x128xf32> -> vector<32x512xf32>
    %c0_11 = arith.constant 0 : index
    %c0_12 = arith.constant 0 : index
    %32 = vector.load %arg5[%c0_11, %c0_12] : memref<1x512xf32, #tpu.memory_space<vmem>>, vector<1x512xf32>
    %33 = vector.broadcast %32 : vector<1x512xf32> to vector<32x512xf32>
    %34 = arith.addf %31, %33 : vector<32x512xf32>
    %cst_13 = arith.constant 0.000000e+00 : f32
    %35 = vector.broadcast %cst_13 : f32 to vector<32x512xf32>
    %36 = arith.maximumf %34, %35 : vector<32x512xf32>
    %c0_14 = arith.constant 0 : index
    %c0_15 = arith.constant 0 : index
    %c0_16 = arith.constant 0 : index
    %37 = vector.load %arg6[%c0_14, %c0_15, %c0_16] : memref<1x32x512xf32, #tpu.memory_space<vmem>>, vector<1x32x512xf32>
    %38 = vector.shape_cast %37 : vector<1x32x512xf32> to vector<32x512xf32>
    %39 = vector.shape_cast %36 : vector<32x512xf32> to vector<1x32x512xf32>
    tpu.vector_store %arg6[%c0_14, %c0_15, %c0_16], %39 {strides = array<i32>} : memref<1x32x512xf32, #tpu.memory_space<vmem>>, vector<1x32x512xf32>,
    return
  }
  func.func @transform_0(%arg0: i32, %arg1: i32) -> (i32, i32, i32) {
    %c0_i32 = arith.constant 0 : i32
    %c0_i32_0 = arith.constant 0 : i32
    return %arg0, %arg1, %c0_i32 : i32, i32, i32
  }
  func.func @transform_1(%arg0: i32, %arg1: i32) -> (i32, i32, i32) {
    %c1_i32 = arith.constant 1 : i32
    %0 = arith.addi %arg1, %c1_i32 : i32
    %c4_i32 = arith.constant 4 : i32
    %1 = arith.muli %0, %c4_i32 : i32
    %c0_i32 = arith.constant 0 : i32
    %c0_i32_0 = arith.constant 0 : i32
    return %arg0, %1, %c0_i32 : i32, i32, i32
  }
  func.func @transform_2(%arg0: i32, %arg1: i32) -> (i32, i32) {
    %c0_i32 = arith.constant 0 : i32
    %c0_i32_0 = arith.constant 0 : i32
    %c0_i32_1 = arith.constant 0 : i32
    return %c0_i32, %c0_i32_0 : i32, i32
  }
  func.func @transform_3(%arg0: i32, %arg1: i32) -> (i32, i32) {
    %c0_i32 = arith.constant 0 : i32
    %c0_i32_0 = arith.constant 0 : i32
    %c0_i32_1 = arith.constant 0 : i32
    return %c0_i32, %c0_i32_0 : i32, i32
  }
  func.func @transform_4(%arg0: i32, %arg1: i32) -> (i32, i32, i32) {
    %c0_i32 = arith.constant 0 : i32
    %c0_i32_0 = arith.constant 0 : i32
    return %arg0, %arg1, %c0_i32 : i32, i32, i32
  }
}

module attributes {stable_mosaic.version = 11 : i64} {
  func.func @_polyphase_kernel(%arg0: i32, %arg1: i32, %arg2: memref<1x128x128xf32, #tpu.memory_space<vmem>>, %arg3: memref<1x8x128xf32, #tpu.memory_space<vmem>>, %arg4: memref<128x10xf32, #tpu.memory_space<vmem>>, %arg5: memref<1x4xf32, #tpu.memory_space<vmem>>, %arg6: memref<1x128x4xf32, #tpu.memory_space<vmem>>) attributes {dimension_semantics = [#tpu.dimension_semantics<parallel>, #tpu.dimension_semantics<parallel>], iteration_bounds = array<i64: 2, 1>, scalar_prefetch = 0 : i64, scratch_operands = 0 : i64, tpu.core_type = #tpu.core_type<tc>, window_params = [{transform_indices = @transform_0, window_bounds = array<i64: 1, 128, 128>}, {transform_indices = @transform_1, window_bounds = array<i64: 1, 8, 128>}, {pipeline_mode = #tpu.pipeline_mode<synchronous>, transform_indices = @transform_2, window_bounds = array<i64: 128, 10>}, {pipeline_mode = #tpu.pipeline_mode<synchronous>, transform_indices = @transform_3, window_bounds = array<i64: 1, 4>}, {transform_indices = @transform_4, window_bounds = array<i64: 1, 128, 4>}]} {
    %c0 = arith.constant 0 : index
    %c0_0 = arith.constant 0 : index
    %c0_1 = arith.constant 0 : index
    %0 = vector.load %arg2[%c0, %c0_0, %c0_1] : memref<1x128x128xf32, #tpu.memory_space<vmem>>, vector<1x128x128xf32>
    %1 = vector.shape_cast %0 : vector<1x128x128xf32> to vector<128x128xf32>
    %c0_2 = arith.constant 0 : index
    %c0_3 = arith.constant 0 : index
    %c0_4 = arith.constant 0 : index
    %2 = vector.load %arg3[%c0_2, %c0_3, %c0_4] : memref<1x8x128xf32, #tpu.memory_space<vmem>>, vector<1x8x128xf32>
    %3 = vector.shape_cast %2 : vector<1x8x128xf32> to vector<8x128xf32>
    %4 = tpu.concatenate %1, %3 in 0 : vector<128x128xf32>, vector<8x128xf32> -> vector<136x128xf32>
    %c0_5 = arith.constant 0 : index
    %c0_6 = arith.constant 0 : index
    %5 = vector.load %arg4[%c0_5, %c0_6] : memref<128x10xf32, #tpu.memory_space<vmem>>, vector<128x10xf32>
    %cst = arith.constant dense<0.000000e+00> : vector<136x10xf32>
    %6 = tpu.matmul %4, %5, %cst {dimension_numbers = #tpu.dot_dimension_numbers<[1], [0], [0], [1], [0, 0, 1, 1], [], []>} : vector<136x128xf32>, vector<128x10xf32>, vector<136x10xf32> -> vector<136x10xf32>
    %cst_7 = arith.constant 0.000000e+00 : f32
    %7 = vector.broadcast %cst_7 : f32 to vector<128x1xf32>
    %8 = vector.extract_strided_slice %6 {offsets = [6, 0], sizes = [128, 1], strides = [1, 1]} : vector<136x10xf32> to vector<128x1xf32>
    %9 = arith.addf %7, %8 : vector<128x1xf32>
    %10 = vector.extract_strided_slice %6 {offsets = [3, 4], sizes = [128, 1], strides = [1, 1]} : vector<136x10xf32> to vector<128x1xf32>
    %11 = arith.addf %9, %10 : vector<128x1xf32>
    %12 = vector.extract_strided_slice %6 {offsets = [0, 8], sizes = [128, 1], strides = [1, 1]} : vector<136x10xf32> to vector<128x1xf32>
    %13 = arith.addf %11, %12 : vector<128x1xf32>
    %cst_8 = arith.constant 0.000000e+00 : f32
    %14 = vector.broadcast %cst_8 : f32 to vector<128x1xf32>
    %15 = vector.extract_strided_slice %6 {offsets = [4, 3], sizes = [128, 1], strides = [1, 1]} : vector<136x10xf32> to vector<128x1xf32>
    %16 = arith.addf %14, %15 : vector<128x1xf32>
    %17 = vector.extract_strided_slice %6 {offsets = [1, 7], sizes = [128, 1], strides = [1, 1]} : vector<136x10xf32> to vector<128x1xf32>
    %18 = arith.addf %16, %17 : vector<128x1xf32>
    %cst_9 = arith.constant 0.000000e+00 : f32
    %19 = vector.broadcast %cst_9 : f32 to vector<128x1xf32>
    %20 = vector.extract_strided_slice %6 {offsets = [5, 2], sizes = [128, 1], strides = [1, 1]} : vector<136x10xf32> to vector<128x1xf32>
    %21 = arith.addf %19, %20 : vector<128x1xf32>
    %22 = vector.extract_strided_slice %6 {offsets = [2, 6], sizes = [128, 1], strides = [1, 1]} : vector<136x10xf32> to vector<128x1xf32>
    %23 = arith.addf %21, %22 : vector<128x1xf32>
    %cst_10 = arith.constant 0.000000e+00 : f32
    %24 = vector.broadcast %cst_10 : f32 to vector<128x1xf32>
    %25 = vector.extract_strided_slice %6 {offsets = [6, 1], sizes = [128, 1], strides = [1, 1]} : vector<136x10xf32> to vector<128x1xf32>
    %26 = arith.addf %24, %25 : vector<128x1xf32>
    %27 = vector.extract_strided_slice %6 {offsets = [3, 5], sizes = [128, 1], strides = [1, 1]} : vector<136x10xf32> to vector<128x1xf32>
    %28 = arith.addf %26, %27 : vector<128x1xf32>
    %29 = vector.extract_strided_slice %6 {offsets = [0, 9], sizes = [128, 1], strides = [1, 1]} : vector<136x10xf32> to vector<128x1xf32>
    %30 = arith.addf %28, %29 : vector<128x1xf32>
    %31 = tpu.concatenate %13, %18, %23, %30 in 1 : vector<128x1xf32>, vector<128x1xf32>, vector<128x1xf32>, vector<128x1xf32> -> vector<128x4xf32>
    %c0_11 = arith.constant 0 : index
    %c0_12 = arith.constant 0 : index
    %32 = vector.load %arg5[%c0_11, %c0_12] : memref<1x4xf32, #tpu.memory_space<vmem>>, vector<1x4xf32>
    %33 = vector.broadcast %32 : vector<1x4xf32> to vector<128x4xf32>
    %34 = arith.addf %31, %33 : vector<128x4xf32>
    %c0_13 = arith.constant 0 : index
    %c0_14 = arith.constant 0 : index
    %c0_15 = arith.constant 0 : index
    %35 = vector.load %arg6[%c0_13, %c0_14, %c0_15] : memref<1x128x4xf32, #tpu.memory_space<vmem>>, vector<1x128x4xf32>
    %36 = vector.shape_cast %35 : vector<1x128x4xf32> to vector<128x4xf32>
    %37 = vector.shape_cast %34 : vector<128x4xf32> to vector<1x128x4xf32>
    tpu.vector_store %arg6[%c0_13, %c0_14, %c0_15], %37 {strides = array<i32>} : memref<1x128x4xf32, #tpu.memory_space<vmem>>, vector<1x128x4xf32>,
    return
  }
  func.func @transform_0(%arg0: i32, %arg1: i32) -> (i32, i32, i32) {
    %c0_i32 = arith.constant 0 : i32
    %c0_i32_0 = arith.constant 0 : i32
    return %arg0, %arg1, %c0_i32 : i32, i32, i32
  }
  func.func @transform_1(%arg0: i32, %arg1: i32) -> (i32, i32, i32) {
    %c1_i32 = arith.constant 1 : i32
    %0 = arith.addi %arg1, %c1_i32 : i32
    %c16_i32 = arith.constant 16 : i32
    %1 = arith.muli %0, %c16_i32 : i32
    %c0_i32 = arith.constant 0 : i32
    %c0_i32_0 = arith.constant 0 : i32
    return %arg0, %1, %c0_i32 : i32, i32, i32
  }
  func.func @transform_2(%arg0: i32, %arg1: i32) -> (i32, i32) {
    %c0_i32 = arith.constant 0 : i32
    %c0_i32_0 = arith.constant 0 : i32
    %c0_i32_1 = arith.constant 0 : i32
    return %c0_i32, %c0_i32_0 : i32, i32
  }
  func.func @transform_3(%arg0: i32, %arg1: i32) -> (i32, i32) {
    %c0_i32 = arith.constant 0 : i32
    %c0_i32_0 = arith.constant 0 : i32
    %c0_i32_1 = arith.constant 0 : i32
    return %c0_i32, %c0_i32_0 : i32, i32
  }
  func.func @transform_4(%arg0: i32, %arg1: i32) -> (i32, i32, i32) {
    %c0_i32 = arith.constant 0 : i32
    %c0_i32_0 = arith.constant 0 : i32
    return %arg0, %arg1, %c0_i32 : i32, i32, i32
  }
}

</mosaic_0001>

<llo_original>
// kernel: tile.14
$region0: #{tile.14}
  #allocation2 [shape = 's32[1]{0}', space=sflag, size = 0x4, scoped, tag = 'scoped memory for tile.14']
  %s0 = inlined_call_operand.hbm [shape: f32[128], index: 0, kind: input, shape index: {}]
  %s1 = inlined_call_operand.vmem [shape: f32[4,128], index: 1, kind: output, shape index: {}]
  $region1: #{tile.14} parent=0
    #allocation0 [shape = 'u8[512]{0}', space=vmem, size = 0x400, scoped, tag = 'operand span for operand 0']
    #allocation1 [shape = 's32[1]{0}', space=sflag, size = 0x4, scoped, tag = 'scoped memory for tile.14']
    %2 = vsyncpa [#allocation1], 0
    // Predicated region
    $region2: #{tile.14} parent=1 // pred_check
      _
    $region3: #{tile.14} parent=1 // pred_check_branch
      %4 = sbr.rel (0) target = $region5
    $region4: #{tile.14} parent=1 // pred_region
      %s6 = ssub.s32 16, 16
      %7 = vsyncadd [#allocation1], %s6
      %s9 = sshll.u32 [#allocation0], 4
      %s10 = int_to_ptr.vmem [resolvable:$true] %s9
      %12 = dma.hbm_to_vmem [thread:$0]  %s0, 16, %s10, [#allocation1]
    $region5: #{tile.14} parent=1 // pred_fallthru
      _
    // Predicated region
    $region6: #{tile.14} parent=1 // pred_check
      _
    $region7: #{tile.14} parent=1 // pred_check_branch
      %14 = sbr.rel (0) target = $region9
    $region8: #{tile.14} parent=1 // pred_region
      %15 = dma.done [#allocation1], 16
    $region9: #{tile.14} parent=1 // pred_fallthru
      _
    %v16 = vld [vmem:[#allocation0] ss:$0 sm:$0xff]
    %17 = vst [vmem:[%s1] sm:$0xf] %v16
    %18 = vsyncpa [#allocation1], 1

// kernel: _lambda_.3
$region0: #{_lambda_.3}
  #allocation0 [shape = 'u32[]', space=smem, size = 0x4, offset = 0x4, fixed_abs, tag = 'smem constant byte address 0x4 - core index']
  #allocation1 [shape = 'u32[144,128]{1,0:T(1,128)}', space=vmem, size = 0x12000, scoped, tag = 'internal scratch']
  %s0 = inlined_call_operand.vmem [shape: f32[2,16,16], index: 0, kind: input, shape index: {}, may-alias: {0,1}]
  %s1 = inlined_call_operand.vmem [shape: f32[2,16,16], index: 1, kind: input, shape index: {}, may-alias: {0,1}]
  %s2 = inlined_call_operand.hbm [shape: f32[16,5120], index: 2, kind: input, shape index: {}]
  %s3 = inlined_call_operand.vmem [shape: f32[1,2048], index: 3, kind: input, shape index: {}]
  %s4 = inlined_call_operand.vmem [shape: f32[2,8,2048], index: 4, kind: output, shape index: {}]
  %s5 = sld [smem:[#allocation0]]
  $region53: #{_lambda_.3} parent=0
    _
  %s7 = ssub.s32 1, %s5
  %s8 = scalar_select 0, %s7, %s5
  $region1: #{_lambda_.3} parent=0
    #allocation2 [shape = 'u8[327680]{0}', space=vmem, size = 0x50000, scoped, tag = 'input window, operand 2, single buffered']
    #allocation3 [shape = 's32[2]{0}', space=sflag, size = 0x8, scoped, tag = 'scoped memory for _lambda_.3']
    %9 = vsyncpa [#allocation3], 0
    loop: start=0, step=1, limit=4
    $region2: #{_lambda_.3} parent=1 // loop_pre_header
      _
    $region3: #{_lambda_.3} parent=1 // loop_header
      %s11 = sphi 0, %s15
      %p12 = scmp.ge.s32.totalorder %s11, 4
      %s18 = sphi 0, %s30
      %s19 = sphi 0, %s26
      %s20 = sphi 0, %s18
      %s21 = sphi 0, %s19
      %s22 = sphi 0, %s20
      %s23 = sphi 0, %s21
      %s35 = sphi 0, %s37
      %s38 = sphi 0, %s35
      %s39 = sphi 0, %s38
      %s55 = sphi 0, %s39
      %s65 = sphi 0, %s67
      %s68 = sphi 0, %s65
      %s69 = sphi 0, %s68
      %s85 = sphi 0, %s69
      %s89 = sphi 0, %s89
      %s91 = sphi 0, %s89
      %s92 = sphi 0, %s91
      %s106 = sphi 0, %s92
      %s110 = sphi 0, %s110
      %s112 = sphi 0, %s110
      %s113 = sphi 0, %s112
      %s127 = sphi 0, %s113
      %s135 = sphi 0, %s137
      %s138 = sphi 0, %s135
      %s139 = sphi 0, %s138
      %s155 = sphi 0, %s139
    $region4: #{_lambda_.3} parent=1 // loop_header_branch
      %14 = sbr.rel (%p12) target = $region8
    $region5: #{_lambda_.3} parent=1 // loop_body
      %s16 = ssub.s32 %s11, 1
      %s17 = ssub.s32 %s11, 2
      %s24 = sadd.s32 1, %s19
      %p25 = scmp.ge.s32.totalorder %s24, 1
      %s26 = scalar_select %p25, 0, %s24
      %s27 = sadd.s32 1, %s18
      %s28 = scalar_select %p25, %s27, %s18
      %p29 = scmp.ge.s32.totalorder %s28, 2
      %s30 = scalar_select %p29, 0, %s28
      %s31 = ssub.s32 %s18, %s30
      %s32 = ssub.s32 %s19, %s26
      %s33 = sor.u32 %s31, %s32
      %p34 = scmp.eq.s32.totalorder %s33, 0
      %s36 = sadd.s32 %s35, 1
      %s37 = scalar_select %p34, %s35, %s36
      %p40 = pneg %p34
      %p41 = scmp.eq.s32.totalorder %s11, 1
      %p42 = por %p40, %p41
      %p43 = scmp.ne.s32.totalorder %s35, %s38
      %p44 = scmp.eq.s32.totalorder %s11, 0
      %p45 = por %p43, %p44
      %p46 = scmp.ne.s32.totalorder %s35, %s38
      %p47 = scmp.eq.s32.totalorder %s16, 1
      %p48 = por %p46, %p47
      %p49 = scmp.ne.s32.totalorder %s38, %s39
      %p50 = scmp.eq.s32.totalorder %s16, 0
      %p51 = por %p49, %p50
      %p52 = scmp.ne.s32.totalorder %s38, %s39
      %p53 = scmp.eq.s32.totalorder %s17, 1
      %p54 = por %p52, %p53
      %p56 = scmp.ne.s32.totalorder %s39, %s55
      %p57 = scmp.eq.s32.totalorder %s17, 0
      %p58 = por %p56, %p57
      %s59 = sadd.s32 %s19, 1
      %s60 = sadd.s32 %s26, 1
      %s61 = ssub.s32 %s18, %s30
      %s62 = ssub.s32 %s59, %s60
      %s63 = sor.u32 %s61, %s62
      %p64 = scmp.eq.s32.totalorder %s63, 0
      %s66 = sadd.s32 %s65, 1
      %s67 = scalar_select %p64, %s65, %s66
      %p70 = pneg %p64
      %p71 = scmp.eq.s32.totalorder %s11, 1
      %p72 = por %p70, %p71
      %p73 = scmp.ne.s32.totalorder %s65, %s68
      %p74 = scmp.eq.s32.totalorder %s11, 0
      %p75 = por %p73, %p74
      %p76 = scmp.ne.s32.totalorder %s65, %s68
      %p77 = scmp.eq.s32.totalorder %s16, 1
      %p78 = por %p76, %p77
      %p79 = scmp.ne.s32.totalorder %s68, %s69
      %p80 = scmp.eq.s32.totalorder %s16, 0
      %p81 = por %p79, %p80
      %p82 = scmp.ne.s32.totalorder %s68, %s69
      %p83 = scmp.eq.s32.totalorder %s17, 1
      %p84 = por %p82, %p83
      %p86 = scmp.ne.s32.totalorder %s69, %s85
      %p87 = scmp.eq.s32.totalorder %s17, 0
      %p88 = por %p86, %p87
      %s90 = sadd.s32 %s89, 1
      %p93 = scmp.eq.s32.totalorder %s11, 1
      %p94 = scmp.ne.s32.totalorder %s89, %s91
      %p95 = scmp.eq.s32.totalorder %s11, 0
      %p96 = por %p94, %p95
      %p97 = scmp.ne.s32.totalorder %s89, %s91
      %p98 = scmp.eq.s32.totalorder %s16, 1
      %p99 = por %p97, %p98
      %p100 = scmp.ne.s32.totalorder %s91, %s92
      %p101 = scmp.eq.s32.totalorder %s16, 0
      %p102 = por %p100, %p101
      %p103 = scmp.ne.s32.totalorder %s91, %s92
      %p104 = scmp.eq.s32.totalorder %s17, 1
      %p105 = por %p103, %p104
      %p107 = scmp.ne.s32.totalorder %s92, %s106
      %p108 = scmp.eq.s32.totalorder %s17, 0
      %p109 = por %p107, %p108
      %s111 = sadd.s32 %s110, 1
      %p114 = scmp.eq.s32.totalorder %s11, 1
      %p115 = scmp.ne.s32.totalorder %s110, %s112
      %p116 = scmp.eq.s32.totalorder %s11, 0
      %p117 = por %p115, %p116
      %p118 = scmp.ne.s32.totalorder %s110, %s112
      %p119 = scmp.eq.s32.totalorder %s16, 1
      %p120 = por %p118, %p119
      %p121 = scmp.ne.s32.totalorder %s112, %s113
      %p122 = scmp.eq.s32.totalorder %s16, 0
      %p123 = por %p121, %p122
      %p124 = scmp.ne.s32.totalorder %s112, %s113
      %p125 = scmp.eq.s32.totalorder %s17, 1
      %p126 = por %p124, %p125
      %p128 = scmp.ne.s32.totalorder %s113, %s127
      %p129 = scmp.eq.s32.totalorder %s17, 0
      %p130 = por %p128, %p129
      %s131 = ssub.s32 %s18, %s30
      %s132 = ssub.s32 %s19, %s26
      %s133 = sor.u32 %s131, %s132
      %p134 = scmp.eq.s32.totalorder %s133, 0
      %s136 = sadd.s32 %s135, 1
      %s137 = scalar_select %p134, %s135, %s136
      %p140 = pneg %p134
      %p141 = scmp.eq.s32.totalorder %s11, 1
      %p142 = por %p140, %p141
      %p143 = scmp.ne.s32.totalorder %s135, %s138
      %p144 = scmp.eq.s32.totalorder %s11, 0
      %p145 = por %p143, %p144
      %p146 = scmp.ne.s32.totalorder %s135, %s138
      %p147 = scmp.eq.s32.totalorder %s16, 1
      %p148 = por %p146, %p147
      %p149 = scmp.ne.s32.totalorder %s138, %s139
      %p150 = scmp.eq.s32.totalorder %s16, 0
      %p151 = por %p149, %p150
      %p152 = scmp.ne.s32.totalorder %s138, %s139
      %p153 = scmp.eq.s32.totalorder %s17, 1
      %p154 = por %p152, %p153
      %p156 = scmp.ne.s32.totalorder %s139, %s155
      %p157 = scmp.eq.s32.totalorder %s17, 0
      %p158 = por %p156, %p157
      %p159 = scmp.le.s32.totalorder 1, %s11
      %p160 = scmp.lt.s32.totalorder %s11, 3
      %p161 = pnand %p159, %p160
      %p162 = pneg %p161
      // Predicated region
      $region9: #{_lambda_.3} parent=5 // pred_check
        _
      $region10: #{_lambda_.3} parent=5 // pred_check_branch
        %164 = sbr.rel (%p161) target = $region12
      $region11: #{_lambda_.3} parent=5 // pred_region
        %s165 = ssub.s32 %s11, 1
        // Predicated region
        $region13: #{_lambda_.3} parent=11 // pred_check
          %p166 = pneg %p102
        $region14: #{_lambda_.3} parent=11 // pred_check_branch
          %168 = sbr.rel (%p166) target = $region16
        $region15: #{_lambda_.3} parent=11 // pred_region
          %s170 = ssub.s32 10240, 10240
          %171 = vsyncadd [#allocation3], %s170
          %s172 = sshll.u32 [#allocation2], 4
          %s173 = int_to_ptr.vmem [resolvable:$true] %s172
          %178 = dma.hbm_to_vmem [thread:$0]  %s2, 10240, %s173, [#allocation3], 5120, 5120, 320
        $region16: #{_lambda_.3} parent=11 // pred_fallthru
          _
        // Predicated region
        $region17: #{_lambda_.3} parent=11 // pred_check
          %p179 = pneg %p123
        $region18: #{_lambda_.3} parent=11 // pred_check_branch
          %181 = sbr.rel (%p179) target = $region20
        $region19: #{_lambda_.3} parent=11 // pred_region
          _
        $region20: #{_lambda_.3} parent=11 // pred_fallthru
          _
      $region12: #{_lambda_.3} parent=5 // pred_fallthru
        _
      %p182 = scmp.lt.s32.totalorder %s11, 2
      // Predicated region
      $region21: #{_lambda_.3} parent=5 // pred_check
        %p183 = pneg %p182
      $region22: #{_lambda_.3} parent=5 // pred_check_branch
        %185 = sbr.rel (%p183) target = $region24
      $region23: #{_lambda_.3} parent=5 // pred_region
        // Predicated region
        $region25: #{_lambda_.3} parent=23 // pred_check
          %p186 = pneg %p45
        $region26: #{_lambda_.3} parent=23 // pred_check_branch
          %188 = sbr.rel (%p186) target = $region28
        $region27: #{_lambda_.3} parent=23 // pred_region
          %p189 = scmp.lt.s32.totalorder %s18, 1
          %s190 = scalar_select %p189, %s18, 1
          %p191 = scmp.lt.s32.totalorder %s19, 1
          %s192 = scalar_select %p191, %s19, 1
          %s193 = smul.addr %s190, 2
          %s194 = sadd.s32 %s192, %s193
          %s195 = smul.addr %s194, 8
          %s196 = scalar_lea.vmem %s0, %s195
        $region28: #{_lambda_.3} parent=23 // pred_fallthru
          _
        // Predicated region
        $region29: #{_lambda_.3} parent=23 // pred_check
          %p197 = pneg %p75
        $region30: #{_lambda_.3} parent=23 // pred_check_branch
          %199 = sbr.rel (%p197) target = $region32
        $region31: #{_lambda_.3} parent=23 // pred_region
          %s200 = sadd.s32 %s19, 1
          %p201 = scmp.lt.s32.totalorder %s18, 1
          %s202 = scalar_select %p201, %s18, 1
          %p203 = scmp.lt.s32.totalorder %s200, 1
          %s204 = scalar_select %p203, %s200, 1
          %s205 = smul.addr %s202, 2
          %s206 = sadd.s32 %s204, %s205
          %s207 = smul.addr %s206, 8
          %s208 = scalar_lea.vmem %s1, %s207
          %s209 = sadd.s32 %s19, 1
        $region32: #{_lambda_.3} parent=23 // pred_fallthru
          _
      $region24: #{_lambda_.3} parent=5 // pred_fallthru
        _
      %p210 = scmp.le.s32.totalorder 1, %s11
      %p211 = scmp.lt.s32.totalorder %s11, 3
      %p212 = pnand %p210, %p211
      %p213 = pneg %p212
      // Predicated region
      $region33: #{_lambda_.3} parent=5 // pred_check
        _
      $region34: #{_lambda_.3} parent=5 // pred_check_branch
        %215 = sbr.rel (%p212) target = $region36
      $region35: #{_lambda_.3} parent=5 // pred_region
        %s216 = ssub.s32 %s11, 1
        // Predicated region
        $region37: #{_lambda_.3} parent=35 // pred_check
          %p217 = pneg %p102
        $region38: #{_lambda_.3} parent=35 // pred_check_branch
          %219 = sbr.rel (%p217) target = $region40
        $region39: #{_lambda_.3} parent=35 // pred_region
          %220 = dma.done [#allocation3], 10240
        $region40: #{_lambda_.3} parent=35 // pred_fallthru
          _
        %p221 = scmp.lt.s32.totalorder %s20, 1
        %s222 = scalar_select %p221, %s20, 1
        %p223 = scmp.lt.s32.totalorder %s21, 1
        %s224 = scalar_select %p223, %s21, 1
        %s225 = smul.addr %s222, 2
        %s226 = sadd.s32 %s224, %s225
        %s227 = smul.addr %s226, 8
        %s228 = scalar_lea.vmem %s0, %s227
        %p229 = pneg %p51
        %p230 = pneg %p48
        %s231 = sadd.s32 %s21, 1
        %p232 = scmp.lt.s32.totalorder %s20, 1
        %s233 = scalar_select %p232, %s20, 1
        %p234 = scmp.lt.s32.totalorder %s231, 1
        %s235 = scalar_select %p234, %s231, 1
        %s236 = smul.addr %s233, 2
        %s237 = sadd.s32 %s235, %s236
        %s238 = smul.addr %s237, 8
        %s239 = scalar_lea.vmem %s1, %s238
        %p240 = pneg %p81
        %p241 = pneg %p78
        %p242 = pneg %p102
        %p243 = pneg %p99
        %p244 = pneg %p123
        %p245 = pneg %p120
        %p246 = pneg %p151
        %p247 = pneg %p148
        %p248 = scmp.lt.s32.totalorder %s20, 1
        %s249 = scalar_select %p248, %s20, 1
        %p250 = scmp.lt.s32.totalorder %s21, 0
        %s251 = scalar_select %p250, %s21, 0
        %s252 = smul.addr %s251, 16
        %s253 = smul.addr %s249, 16
        %s254 = sadd.s32 %s252, %s253
        %s255 = smul.addr %s254, 8
        %s256 = scalar_lea.vmem %s4, %s255
        %p257 = scmp.lt.s32.totalorder %s20, 1
        %s258 = scalar_select %p257, %s20, 1
        %p259 = scmp.lt.s32.totalorder %s21, 1
        %s260 = scalar_select %p259, %s21, 1
        %s261 = smul.addr %s258, 2
        %s262 = sadd.s32 %s260, %s261
        %s263 = smul.addr %s262, 8
        %s264 = scalar_lea.vmem %s0, %s263
        %s265 = sadd.s32 %s21, 1
        %p266 = scmp.lt.s32.totalorder %s20, 1
        %s267 = scalar_select %p266, %s20, 1
        %p268 = scmp.lt.s32.totalorder %s265, 1
        %s269 = scalar_select %p268, %s265, 1
        %s270 = smul.addr %s267, 2
        %s271 = sadd.s32 %s269, %s270
        %s272 = smul.addr %s271, 8
        %s273 = scalar_lea.vmem %s1, %s272
        %s274 = sadd.s32 %s21, 1
        %p275 = scmp.lt.s32.totalorder %s20, 1
        %s276 = scalar_select %p275, %s20, 1
        %p277 = scmp.lt.s32.totalorder %s21, 0
        %s278 = scalar_select %p277, %s21, 0
        %s279 = smul.addr %s278, 16
        %s280 = smul.addr %s276, 16
        %s281 = sadd.s32 %s279, %s280
        %s282 = smul.addr %s281, 8
        %s283 = scalar_lea.vmem %s4, %s282
        %v284 = vld [vmem:[%s264] sm:$0xff]
        %v285 = vld [vmem:[%s273] sm:$0xff]
        %v286 = vld [vmem:[#allocation2] sm:$0xff]
        %v287 = vld [vmem:[#allocation2 + $0x8] sm:$0xff]
        %v288 = vld [vmem:[#allocation2 + $0x10] sm:$0xff]
        %v289 = vld [vmem:[#allocation2 + $0x18] sm:$0xff]
        %v290 = vld [vmem:[#allocation2 + $0x20] sm:$0xff]
        %v291 = vld [vmem:[#allocation2 + $0x28] sm:$0xff]
        %v292 = vld [vmem:[#allocation2 + $0x30] sm:$0xff]
        %v293 = vld [vmem:[#allocation2 + $0x38] sm:$0xff]
        %v294 = vld [vmem:[#allocation2 + $0x40] sm:$0xff]
        %v295 = vld [vmem:[#allocation2 + $0x48] sm:$0xff]
        %v296 = vld [vmem:[#allocation2 + $0x50] sm:$0xff]
        %v297 = vld [vmem:[#allocation2 + $0x58] sm:$0xff]
        %v298 = vld [vmem:[#allocation2 + $0x60] sm:$0xff]
        %v299 = vld [vmem:[#allocation2 + $0x68] sm:$0xff]
        %v300 = vld [vmem:[#allocation2 + $0x70] sm:$0xff]
        %v301 = vld [vmem:[#allocation2 + $0x78] sm:$0xff]
        %v302 = vld [vmem:[#allocation2 + $0x80] sm:$0xff]
        %v303 = vld [vmem:[#allocation2 + $0x88] sm:$0xff]
        %v304 = vld [vmem:[#allocation2 + $0x90] sm:$0xff]
        %v305 = vld [vmem:[#allocation2 + $0x98] sm:$0xff]
        %v306 = vld [vmem:[#allocation2 + $0xa0] sm:$0xff]
        %v307 = vld [vmem:[#allocation2 + $0xa8] sm:$0xff]
        %v308 = vld [vmem:[#allocation2 + $0xb0] sm:$0xff]
        %v309 = vld [vmem:[#allocation2 + $0xb8] sm:$0xff]
        %v310 = vld [vmem:[#allocation2 + $0xc0] sm:$0xff]
        %v311 = vld [vmem:[#allocation2 + $0xc8] sm:$0xff]
        %v312 = vld [vmem:[#allocation2 + $0xd0] sm:$0xff]
        %v313 = vld [vmem:[#allocation2 + $0xd8] sm:$0xff]
        %v314 = vld [vmem:[#allocation2 + $0xe0] sm:$0xff]
        %v315 = vld [vmem:[#allocation2 + $0xe8] sm:$0xff]
        %v316 = vld [vmem:[#allocation2 + $0xf0] sm:$0xff]
        %v317 = vld [vmem:[#allocation2 + $0xf8] sm:$0xff]
        %v318 = vld [vmem:[#allocation2 + $0x100] sm:$0xff]
        %v319 = vld [vmem:[#allocation2 + $0x108] sm:$0xff]
        %v320 = vld [vmem:[#allocation2 + $0x110] sm:$0xff]
        %v321 = vld [vmem:[#allocation2 + $0x118] sm:$0xff]
        %v322 = vld [vmem:[#allocation2 + $0x120] sm:$0xff]
        %v323 = vld [vmem:[#allocation2 + $0x128] sm:$0xff]
        %v324 = vld [vmem:[#allocation2 + $0x130] sm:$0xff]
        %v325 = vld [vmem:[#allocation2 + $0x138] sm:$0xff]
        %v326 = vld [vmem:[#allocation2 + $0x140] sm:$0xff]
        %v327 = vld [vmem:[#allocation2 + $0x148] sm:$0xff]
        %v328 = vld [vmem:[#allocation2 + $0x150] sm:$0xff]
        %v329 = vld [vmem:[#allocation2 + $0x158] sm:$0xff]
        %v330 = vld [vmem:[#allocation2 + $0x160] sm:$0xff]
        %v331 = vld [vmem:[#allocation2 + $0x168] sm:$0xff]
        %v332 = vld [vmem:[#allocation2 + $0x170] sm:$0xff]
        %v333 = vld [vmem:[#allocation2 + $0x178] sm:$0xff]
        %v334 = vld [vmem:[#allocation2 + $0x180] sm:$0xff]
        %v335 = vld [vmem:[#allocation2 + $0x188] sm:$0xff]
        %v336 = vld [vmem:[#allocation2 + $0x190] sm:$0xff]
        %v337 = vld [vmem:[#allocation2 + $0x198] sm:$0xff]
        %v338 = vld [vmem:[#allocation2 + $0x1a0] sm:$0xff]
        %v339 = vld [vmem:[#allocation2 + $0x1a8] sm:$0xff]
        %v340 = vld [vmem:[#allocation2 + $0x1b0] sm:$0xff]
        %v341 = vld [vmem:[#allocation2 + $0x1b8] sm:$0xff]
        %v342 = vld [vmem:[#allocation2 + $0x1c0] sm:$0xff]
        %v343 = vld [vmem:[#allocation2 + $0x1c8] sm:$0xff]
        %v344 = vld [vmem:[#allocation2 + $0x1d0] sm:$0xff]
        %v345 = vld [vmem:[#allocation2 + $0x1d8] sm:$0xff]
        %v346 = vld [vmem:[#allocation2 + $0x1e0] sm:$0xff]
        %v347 = vld [vmem:[#allocation2 + $0x1e8] sm:$0xff]
        %v348 = vld [vmem:[#allocation2 + $0x1f0] sm:$0xff]
        %v349 = vld [vmem:[#allocation2 + $0x1f8] sm:$0xff]
        %v350 = vld [vmem:[#allocation2 + $0x200] sm:$0xff]
        %v351 = vld [vmem:[#allocation2 + $0x208] sm:$0xff]
        %v352 = vld [vmem:[#allocation2 + $0x210] sm:$0xff]
        %v353 = vld [vmem:[#allocation2 + $0x218] sm:$0xff]
        %v354 = vld [vmem:[#allocation2 + $0x220] sm:$0xff]
        %v355 = vld [vmem:[#allocation2 + $0x228] sm:$0xff]
        %v356 = vld [vmem:[#allocation2 + $0x230] sm:$0xff]
        %v357 = vld [vmem:[#allocation2 + $0x238] sm:$0xff]
        %v358 = vld [vmem:[#allocation2 + $0x240] sm:$0xff]
        %v359 = vld [vmem:[#allocation2 + $0x248] sm:$0xff]
        %v360 = vld [vmem:[#allocation2 + $0x250] sm:$0xff]
        %v361 = vld [vmem:[#allocation2 + $0x258] sm:$0xff]
        %v362 = vld [vmem:[#allocation2 + $0x260] sm:$0xff]
        %v363 = vld [vmem:[#allocation2 + $0x268] sm:$0xff]
        %v364 = vld [vmem:[#allocation2 + $0x270] sm:$0xff]
        %v365 = vld [vmem:[#allocation2 + $0x278] sm:$0xff]
        %vm366 = vcmask 130048
        %v368 = vsel %vm366, %v284, 0
        %v371 = vsel %vm366, %v285, 0
        %373 = vmatprep.subr.mxu0 0.0
        %374 = vmatpush1.msra.mxu0 0.0
        %375 = vmatprep.subr.mxu0 0.0
        %376 = vmatpush1.msra.mxu0 0.0
        %377 = vmatprep.subr.mxu0 0.0
        %378 = vmatpush1.msra.mxu0 0.0
        %379 = vmatprep.subr.mxu0 0.0
        %380 = vmatpush1.msra.mxu0 0.0
        %381 = vmatprep.subr.mxu0 0.0
        %382 = vmatpush1.msra.mxu0 0.0
        %383 = vmatprep.subr.mxu0 0.0
        %384 = vmatpush1.msra.mxu0 0.0
        %385 = vmatprep.subr.mxu0 0.0
        %386 = vmatpush1.msra.mxu0 0.0
        %387 = vmatprep.subr.mxu0 0.0
        %388 = vmatpush1.msra.mxu0 0.0
        %389 = vmatprep.subr.mxu0 0.0
        %390 = vmatpush1.msra.mxu0 0.0
        %391 = vmatprep.subr.mxu0 0.0
        %392 = vmatpush1.msra.mxu0 0.0
        %393 = vmatprep.subr.mxu0 0.0
        %394 = vmatpush1.msra.mxu0 0.0
        %395 = vmatprep.subr.mxu0 0.0
        %396 = vmatpush1.msra.mxu0 0.0
        %397 = vmatprep.subr.mxu0 0.0
        %398 = vmatpush1.msra.mxu0 0.0
        %399 = vmatprep.subr.mxu0 0.0
        %400 = vmatpush1.msra.mxu0 0.0
        %401 = vmatprep.subr.mxu0 %v327
        %402 = vmatpush1.msra.mxu0 %v326
        %403 = vmatprep.subr.mxu0 %v287
        %404 = vmatpush1.msra.mxu0 %v286
        %405 = vmatprep.subr.mxu0 0.0
        %406 = vmatpush2.msra.mxu0 0.0
        %407 = vmatprep.subr.mxu0 0.0
        %408 = vmatpush2.msra.mxu0 0.0
        %409 = vmatprep.subr.mxu0 0.0
        %410 = vmatpush2.msra.mxu0 0.0
        %411 = vmatprep.subr.mxu0 0.0
        %412 = vmatpush2.msra.mxu0 0.0
        %413 = vmatprep.subr.mxu0 0.0
        %414 = vmatpush2.msra.mxu0 0.0
        %415 = vmatprep.subr.mxu0 0.0
        %416 = vmatpush2.msra.mxu0 0.0
        %417 = vmatprep.subr.mxu0 0.0
        %418 = vmatpush2.msra.mxu0 0.0
        %419 = vmatprep.subr.mxu0 0.0
        %420 = vmatpush2.msra.mxu0 0.0
        %421 = vmatprep.subr.mxu0 0.0
        %422 = vmatpush2.msra.mxu0 0.0
        %423 = vmatprep.subr.mxu0 0.0
        %424 = vmatpush2.msra.mxu0 0.0
        %425 = vmatprep.subr.mxu0 0.0
        %426 = vmatpush2.msra.mxu0 0.0
        %427 = vmatprep.subr.mxu0 0.0
        %428 = vmatpush2.msra.mxu0 0.0
        %429 = vmatprep.subr.mxu0 0.0
        %430 = vmatpush2.msra.mxu0 0.0
        %431 = vmatprep.subr.mxu0 0.0
        %432 = vmatpush2.msra.mxu0 0.0
        %433 = vmatprep.subr.mxu0 0.0
        %434 = vmatpush2.msra.mxu0 0.0
        %435 = vmatprep.subr.mxu0 0.0
        %436 = vmatpush2.msra.mxu0 0.0
        %437 = vmatprep.mubr.f32.mxu0 0.0
        %438 = vmatmul.mubr.f32.gmra.mxu0 %v368
        %v439 = vpop.f32.mrf.mxu0
        %v440 = vadd.f32 0.0, %v439
        %v441 = vpop.f32.mrf.mxu0
        %v442 = vadd.f32 0.0, %v441
        %443 = vmatprep.mubr.f32.mxu0 0.0
        %444 = vmatmul.mubr.f32.gmra.mxu0 %v371
        %v445 = vpop.f32.mrf.mxu0
        %v446 = vadd.f32 0.0, %v445
        %v447 = vpop.f32.mrf.mxu0
        %v448 = vadd.f32 0.0, %v447
        %449 = vdwg.mxu0
        %450 = vmatprep.subr.mxu0 0.0
        %451 = vmatpush1.msra.mxu0 0.0
        %452 = vmatprep.subr.mxu0 0.0
        %453 = vmatpush1.msra.mxu0 0.0
        %454 = vmatprep.subr.mxu0 0.0
        %455 = vmatpush1.msra.mxu0 0.0
        %456 = vmatprep.subr.mxu0 0.0
        %457 = vmatpush1.msra.mxu0 0.0
        %458 = vmatprep.subr.mxu0 0.0
        %459 = vmatpush1.msra.mxu0 0.0
        %460 = vmatprep.subr.mxu0 0.0
        %461 = vmatpush1.msra.mxu0 0.0
        %462 = vmatprep.subr.mxu0 0.0
        %463 = vmatpush1.msra.mxu0 0.0
        %464 = vmatprep.subr.mxu0 0.0
        %465 = vmatpush1.msra.mxu0 0.0
        %466 = vmatprep.subr.mxu0 0.0
        %467 = vmatpush1.msra.mxu0 0.0
        %468 = vmatprep.subr.mxu0 0.0
        %469 = vmatpush1.msra.mxu0 0.0
        %470 = vmatprep.subr.mxu0 0.0
        %471 = vmatpush1.msra.mxu0 0.0
        %472 = vmatprep.subr.mxu0 0.0
        %473 = vmatpush1.msra.mxu0 0.0
        %474 = vmatprep.subr.mxu0 0.0
        %475 = vmatpush1.msra.mxu0 0.0
        %476 = vmatprep.subr.mxu0 0.0
        %477 = vmatpush1.msra.mxu0 0.0
        %478 = vmatprep.subr.mxu0 %v329
        %479 = vmatpush1.msra.mxu0 %v328
        %480 = vmatprep.subr.mxu0 %v289
        %481 = vmatpush1.msra.mxu0 %v288
        %482 = vmatprep.subr.mxu0 0.0
        %483 = vmatpush2.msra.mxu0 0.0
        %484 = vmatprep.subr.mxu0 0.0
        %485 = vmatpush2.msra.mxu0 0.0
        %486 = vmatprep.subr.mxu0 0.0
        %487 = vmatpush2.msra.mxu0 0.0
        %488 = vmatprep.subr.mxu0 0.0
        %489 = vmatpush2.msra.mxu0 0.0
        %490 = vmatprep.subr.mxu0 0.0
        %491 = vmatpush2.msra.mxu0 0.0
        %492 = vmatprep.subr.mxu0 0.0
        %493 = vmatpush2.msra.mxu0 0.0
        %494 = vmatprep.subr.mxu0 0.0
        %495 = vmatpush2.msra.mxu0 0.0
        %496 = vmatprep.subr.mxu0 0.0
        %497 = vmatpush2.msra.mxu0 0.0
        %498 = vmatprep.subr.mxu0 0.0
        %499 = vmatpush2.msra.mxu0 0.0
        %500 = vmatprep.subr.mxu0 0.0
        %501 = vmatpush2.msra.mxu0 0.0
        %502 = vmatprep.subr.mxu0 0.0
        %503 = vmatpush2.msra.mxu0 0.0
        %504 = vmatprep.subr.mxu0 0.0
        %505 = vmatpush2.msra.mxu0 0.0
        %506 = vmatprep.subr.mxu0 0.0
        %507 = vmatpush2.msra.mxu0 0.0
        %508 = vmatprep.subr.mxu0 0.0
        %509 = vmatpush2.msra.mxu0 0.0
        %510 = vmatprep.subr.mxu0 0.0
        %511 = vmatpush2.msra.mxu0 0.0
        %512 = vmatprep.subr.mxu0 0.0
        %513 = vmatpush2.msra.mxu0 0.0
        %514 = vmatprep.mubr.f32.mxu0 0.0
        %515 = vmatmul.mubr.f32.gmra.mxu0 %v368
        %v516 = vpop.f32.mrf.mxu0
        %v517 = vadd.f32 0.0, %v516
        %v518 = vpop.f32.mrf.mxu0
        %v519 = vadd.f32 0.0, %v518
        %520 = vmatprep.mubr.f32.mxu0 0.0
        %521 = vmatmul.mubr.f32.gmra.mxu0 %v371
        %v522 = vpop.f32.mrf.mxu0
        %v523 = vadd.f32 0.0, %v522
        %v524 = vpop.f32.mrf.mxu0
        %v525 = vadd.f32 0.0, %v524
        %526 = vdwg.mxu0
        %527 = vmatprep.subr.mxu0 0.0
        %528 = vmatpush1.msra.mxu0 0.0
        %529 = vmatprep.subr.mxu0 0.0
        %530 = vmatpush1.msra.mxu0 0.0
        %531 = vmatprep.subr.mxu0 0.0
        %532 = vmatpush1.msra.mxu0 0.0
        %533 = vmatprep.subr.mxu0 0.0
        %534 = vmatpush1.msra.mxu0 0.0
        %535 = vmatprep.subr.mxu0 0.0
        %536 = vmatpush1.msra.mxu0 0.0
        %537 = vmatprep.subr.mxu0 0.0
        %538 = vmatpush1.msra.mxu0 0.0
        %539 = vmatprep.subr.mxu0 0.0
        %540 = vmatpush1.msra.mxu0 0.0
        %541 = vmatprep.subr.mxu0 0.0
        %542 = vmatpush1.msra.mxu0 0.0
        %543 = vmatprep.subr.mxu0 0.0
        %544 = vmatpush1.msra.mxu0 0.0
        %545 = vmatprep.subr.mxu0 0.0
        %546 = vmatpush1.msra.mxu0 0.0
        %547 = vmatprep.subr.mxu0 0.0
        %548 = vmatpush1.msra.mxu0 0.0
        %549 = vmatprep.subr.mxu0 0.0
        %550 = vmatpush1.msra.mxu0 0.0
        %551 = vmatprep.subr.mxu0 0.0
        %552 = vmatpush1.msra.mxu0 0.0
        %553 = vmatprep.subr.mxu0 0.0
        %554 = vmatpush1.msra.mxu0 0.0
        %555 = vmatprep.subr.mxu0 %v331
        %556 = vmatpush1.msra.mxu0 %v330
        %557 = vmatprep.subr.mxu0 %v291
        %558 = vmatpush1.msra.mxu0 %v290
        %559 = vmatprep.subr.mxu0 0.0
        %560 = vmatpush2.msra.mxu0 0.0
        %561 = vmatprep.subr.mxu0 0.0
        %562 = vmatpush2.msra.mxu0 0.0
        %563 = vmatprep.subr.mxu0 0.0
        %564 = vmatpush2.msra.mxu0 0.0
        %565 = vmatprep.subr.mxu0 0.0
        %566 = vmatpush2.msra.mxu0 0.0
        %567 = vmatprep.subr.mxu0 0.0
        %568 = vmatpush2.msra.mxu0 0.0
        %569 = vmatprep.subr.mxu0 0.0
        %570 = vmatpush2.msra.mxu0 0.0
        %571 = vmatprep.subr.mxu0 0.0
        %572 = vmatpush2.msra.mxu0 0.0
        %573 = vmatprep.subr.mxu0 0.0
        %574 = vmatpush2.msra.mxu0 0.0
        %575 = vmatprep.subr.mxu0 0.0
        %576 = vmatpush2.msra.mxu0 0.0
        %577 = vmatprep.subr.mxu0 0.0
        %578 = vmatpush2.msra.mxu0 0.0
        %579 = vmatprep.subr.mxu0 0.0
        %580 = vmatpush2.msra.mxu0 0.0
        %581 = vmatprep.subr.mxu0 0.0
        %582 = vmatpush2.msra.mxu0 0.0
        %583 = vmatprep.subr.mxu0 0.0
        %584 = vmatpush2.msra.mxu0 0.0
        %585 = vmatprep.subr.mxu0 0.0
        %586 = vmatpush2.msra.mxu0 0.0
        %587 = vmatprep.subr.mxu0 0.0
        %588 = vmatpush2.msra.mxu0 0.0
        %589 = vmatprep.subr.mxu0 0.0
        %590 = vmatpush2.msra.mxu0 0.0
        %591 = vmatprep.mubr.f32.mxu0 0.0
        %592 = vmatmul.mubr.f32.gmra.mxu0 %v368
        %v593 = vpop.f32.mrf.mxu0
        %v594 = vadd.f32 0.0, %v593
        %v595 = vpop.f32.mrf.mxu0
        %v596 = vadd.f32 0.0, %v595
        %597 = vmatprep.mubr.f32.mxu0 0.0
        %598 = vmatmul.mubr.f32.gmra.mxu0 %v371
        %v599 = vpop.f32.mrf.mxu0
        %v600 = vadd.f32 0.0, %v599
        %v601 = vpop.f32.mrf.mxu0
        %v602 = vadd.f32 0.0, %v601
        %603 = vdwg.mxu0
        %604 = vmatprep.subr.mxu0 0.0
        %605 = vmatpush1.msra.mxu0 0.0
        %606 = vmatprep.subr.mxu0 0.0
        %607 = vmatpush1.msra.mxu0 0.0
        %608 = vmatprep.subr.mxu0 0.0
        %609 = vmatpush1.msra.mxu0 0.0
        %610 = vmatprep.subr.mxu0 0.0
        %611 = vmatpush1.msra.mxu0 0.0
        %612 = vmatprep.subr.mxu0 0.0
        %613 = vmatpush1.msra.mxu0 0.0
        %614 = vmatprep.subr.mxu0 0.0
        %615 = vmatpush1.msra.mxu0 0.0
        %616 = vmatprep.subr.mxu0 0.0
        %617 = vmatpush1.msra.mxu0 0.0
        %618 = vmatprep.subr.mxu0 0.0
        %619 = vmatpush1.msra.mxu0 0.0
        %620 = vmatprep.subr.mxu0 0.0
        %621 = vmatpush1.msra.mxu0 0.0
        %622 = vmatprep.subr.mxu0 0.0
        %623 = vmatpush1.msra.mxu0 0.0
        %624 = vmatprep.subr.mxu0 0.0
        %625 = vmatpush1.msra.mxu0 0.0
        %626 = vmatprep.subr.mxu0 0.0
        %627 = vmatpush1.msra.mxu0 0.0
        %628 = vmatprep.subr.mxu0 0.0
        %629 = vmatpush1.msra.mxu0 0.0
        %630 = vmatprep.subr.mxu0 0.0
        %631 = vmatpush1.msra.mxu0 0.0
        %632 = vmatprep.subr.mxu0 %v333
        %633 = vmatpush1.msra.mxu0 %v332
        %634 = vmatprep.subr.mxu0 %v293
        %635 = vmatpush1.msra.mxu0 %v292
        %636 = vmatprep.subr.mxu0 0.0
        %637 = vmatpush2.msra.mxu0 0.0
        %638 = vmatprep.subr.mxu0 0.0
        %639 = vmatpush2.msra.mxu0 0.0
        %640 = vmatprep.subr.mxu0 0.0
        %641 = vmatpush2.msra.mxu0 0.0
        %642 = vmatprep.subr.mxu0 0.0
        %643 = vmatpush2.msra.mxu0 0.0
        %644 = vmatprep.subr.mxu0 0.0
        %645 = vmatpush2.msra.mxu0 0.0
        %646 = vmatprep.subr.mxu0 0.0
        %647 = vmatpush2.msra.mxu0 0.0
        %648 = vmatprep.subr.mxu0 0.0
        %649 = vmatpush2.msra.mxu0 0.0
        %650 = vmatprep.subr.mxu0 0.0
        %651 = vmatpush2.msra.mxu0 0.0
        %652 = vmatprep.subr.mxu0 0.0
        %653 = vmatpush2.msra.mxu0 0.0
        %654 = vmatprep.subr.mxu0 0.0
        %655 = vmatpush2.msra.mxu0 0.0
        %656 = vmatprep.subr.mxu0 0.0
        %657 = vmatpush2.msra.mxu0 0.0
        %658 = vmatprep.subr.mxu0 0.0
        %659 = vmatpush2.msra.mxu0 0.0
        %660 = vmatprep.subr.mxu0 0.0
        %661 = vmatpush2.msra.mxu0 0.0
        %662 = vmatprep.subr.mxu0 0.0
        %663 = vmatpush2.msra.mxu0 0.0
        %664 = vmatprep.subr.mxu0 0.0
        %665 = vmatpush2.msra.mxu0 0.0
        %666 = vmatprep.subr.mxu0 0.0
        %667 = vmatpush2.msra.mxu0 0.0
        %668 = vmatprep.mubr.f32.mxu0 0.0
        %669 = vmatmul.mubr.f32.gmra.mxu0 %v368
        %v670 = vpop.f32.mrf.mxu0
        %v671 = vadd.f32 0.0, %v670
        %v672 = vpop.f32.mrf.mxu0
        %v673 = vadd.f32 0.0, %v672
        %674 = vmatprep.mubr.f32.mxu0 0.0
        %675 = vmatmul.mubr.f32.gmra.mxu0 %v371
        %v676 = vpop.f32.mrf.mxu0
        %v677 = vadd.f32 0.0, %v676
        %v678 = vpop.f32.mrf.mxu0
        %v679 = vadd.f32 0.0, %v678
        %680 = vdwg.mxu0
        %681 = vmatprep.subr.mxu0 0.0
        %682 = vmatpush1.msra.mxu0 0.0
        %683 = vmatprep.subr.mxu0 0.0
        %684 = vmatpush1.msra.mxu0 0.0
        %685 = vmatprep.subr.mxu0 0.0
        %686 = vmatpush1.msra.mxu0 0.0
        %687 = vmatprep.subr.mxu0 0.0
        %688 = vmatpush1.msra.mxu0 0.0
        %689 = vmatprep.subr.mxu0 0.0
        %690 = vmatpush1.msra.mxu0 0.0
        %691 = vmatprep.subr.mxu0 0.0
        %692 = vmatpush1.msra.mxu0 0.0
        %693 = vmatprep.subr.mxu0 0.0
        %694 = vmatpush1.msra.mxu0 0.0
        %695 = vmatprep.subr.mxu0 0.0
        %696 = vmatpush1.msra.mxu0 0.0
        %697 = vmatprep.subr.mxu0 0.0
        %698 = vmatpush1.msra.mxu0 0.0
        %699 = vmatprep.subr.mxu0 0.0
        %700 = vmatpush1.msra.mxu0 0.0
        %701 = vmatprep.subr.mxu0 0.0
        %702 = vmatpush1.msra.mxu0 0.0
        %703 = vmatprep.subr.mxu0 0.0
        %704 = vmatpush1.msra.mxu0 0.0
        %705 = vmatprep.subr.mxu0 0.0
        %706 = vmatpush1.msra.mxu0 0.0
        %707 = vmatprep.subr.mxu0 0.0
        %708 = vmatpush1.msra.mxu0 0.0
        %709 = vmatprep.subr.mxu0 %v335
        %710 = vmatpush1.msra.mxu0 %v334
        %711 = vmatprep.subr.mxu0 %v295
        %712 = vmatpush1.msra.mxu0 %v294
        %713 = vmatprep.subr.mxu0 0.0
        %714 = vmatpush2.msra.mxu0 0.0
        %715 = vmatprep.subr.mxu0 0.0
        %716 = vmatpush2.msra.mxu0 0.0
        %717 = vmatprep.subr.mxu0 0.0
        %718 = vmatpush2.msra.mxu0 0.0
        %719 = vmatprep.subr.mxu0 0.0
        %720 = vmatpush2.msra.mxu0 0.0
        %721 = vmatprep.subr.mxu0 0.0
        %722 = vmatpush2.msra.mxu0 0.0
        %723 = vmatprep.subr.mxu0 0.0
        %724 = vmatpush2.msra.mxu0 0.0
        %725 = vmatprep.subr.mxu0 0.0
        %726 = vmatpush2.msra.mxu0 0.0
        %727 = vmatprep.subr.mxu0 0.0
        %728 = vmatpush2.msra.mxu0 0.0
        %729 = vmatprep.subr.mxu0 0.0
        %730 = vmatpush2.msra.mxu0 0.0
        %731 = vmatprep.subr.mxu0 0.0
        %732 = vmatpush2.msra.mxu0 0.0
        %733 = vmatprep.subr.mxu0 0.0
        %734 = vmatpush2.msra.mxu0 0.0
        %735 = vmatprep.subr.mxu0 0.0
        %736 = vmatpush2.msra.mxu0 0.0
        %737 = vmatprep.subr.mxu0 0.0
        %738 = vmatpush2.msra.mxu0 0.0
        %739 = vmatprep.subr.mxu0 0.0
        %740 = vmatpush2.msra.mxu0 0.0
        %741 = vmatprep.subr.mxu0 0.0
        %742 = vmatpush2.msra.mxu0 0.0
        %743 = vmatprep.subr.mxu0 0.0
        %744 = vmatpush2.msra.mxu0 0.0
        %745 = vmatprep.mubr.f32.mxu0 0.0
        %746 = vmatmul.mubr.f32.gmra.mxu0 %v368
        %v747 = vpop.f32.mrf.mxu0
        %v748 = vadd.f32 0.0, %v747
        %v749 = vpop.f32.mrf.mxu0
        %v750 = vadd.f32 0.0, %v749
        %751 = vmatprep.mubr.f32.mxu0 0.0
        %752 = vmatmul.mubr.f32.gmra.mxu0 %v371
        %v753 = vpop.f32.mrf.mxu0
        %v754 = vadd.f32 0.0, %v753
        %v755 = vpop.f32.mrf.mxu0
        %v756 = vadd.f32 0.0, %v755
        %757 = vdwg.mxu0
        %758 = vmatprep.subr.mxu0 0.0
        %759 = vmatpush1.msra.mxu0 0.0
        %760 = vmatprep.subr.mxu0 0.0
        %761 = vmatpush1.msra.mxu0 0.0
        %762 = vmatprep.subr.mxu0 0.0
        %763 = vmatpush1.msra.mxu0 0.0
        %764 = vmatprep.subr.mxu0 0.0
        %765 = vmatpush1.msra.mxu0 0.0
        %766 = vmatprep.subr.mxu0 0.0
        %767 = vmatpush1.msra.mxu0 0.0
        %768 = vmatprep.subr.mxu0 0.0
        %769 = vmatpush1.msra.mxu0 0.0
        %770 = vmatprep.subr.mxu0 0.0
        %771 = vmatpush1.msra.mxu0 0.0
        %772 = vmatprep.subr.mxu0 0.0
        %773 = vmatpush1.msra.mxu0 0.0
        %774 = vmatprep.subr.mxu0 0.0
        %775 = vmatpush1.msra.mxu0 0.0
        %776 = vmatprep.subr.mxu0 0.0
        %777 = vmatpush1.msra.mxu0 0.0
        %778 = vmatprep.subr.mxu0 0.0
        %779 = vmatpush1.msra.mxu0 0.0
        %780 = vmatprep.subr.mxu0 0.0
        %781 = vmatpush1.msra.mxu0 0.0
        %782 = vmatprep.subr.mxu0 0.0
        %783 = vmatpush1.msra.mxu0 0.0
        %784 = vmatprep.subr.mxu0 0.0
        %785 = vmatpush1.msra.mxu0 0.0
        %786 = vmatprep.subr.mxu0 %v337
        %787 = vmatpush1.msra.mxu0 %v336
        %788 = vmatprep.subr.mxu0 %v297
        %789 = vmatpush1.msra.mxu0 %v296
        %790 = vmatprep.subr.mxu0 0.0
        %791 = vmatpush2.msra.mxu0 0.0
        %792 = vmatprep.subr.mxu0 0.0
        %793 = vmatpush2.msra.mxu0 0.0
        %794 = vmatprep.subr.mxu0 0.0
        %795 = vmatpush2.msra.mxu0 0.0
        %796 = vmatprep.subr.mxu0 0.0
        %797 = vmatpush2.msra.mxu0 0.0
        %798 = vmatprep.subr.mxu0 0.0
        %799 = vmatpush2.msra.mxu0 0.0
        %800 = vmatprep.subr.mxu0 0.0
        %801 = vmatpush2.msra.mxu0 0.0
        %802 = vmatprep.subr.mxu0 0.0
        %803 = vmatpush2.msra.mxu0 0.0
        %804 = vmatprep.subr.mxu0 0.0
        %805 = vmatpush2.msra.mxu0 0.0
        %806 = vmatprep.subr.mxu0 0.0
        %807 = vmatpush2.msra.mxu0 0.0
        %808 = vmatprep.subr.mxu0 0.0
        %809 = vmatpush2.msra.mxu0 0.0
        %810 = vmatprep.subr.mxu0 0.0
        %811 = vmatpush2.msra.mxu0 0.0
        %812 = vmatprep.subr.mxu0 0.0
        %813 = vmatpush2.msra.mxu0 0.0
        %814 = vmatprep.subr.mxu0 0.0
        %815 = vmatpush2.msra.mxu0 0.0
        %816 = vmatprep.subr.mxu0 0.0
        %817 = vmatpush2.msra.mxu0 0.0
        %818 = vmatprep.subr.mxu0 0.0
        %819 = vmatpush2.msra.mxu0 0.0
        %820 = vmatprep.subr.mxu0 0.0
        %821 = vmatpush2.msra.mxu0 0.0
        %822 = vmatprep.mubr.f32.mxu0 0.0
        %823 = vmatmul.mubr.f32.gmra.mxu0 %v368
        %v824 = vpop.f32.mrf.mxu0
        %v825 = vadd.f32 0.0, %v824
        %v826 = vpop.f32.mrf.mxu0
        %v827 = vadd.f32 0.0, %v826
        %828 = vmatprep.mubr.f32.mxu0 0.0
        %829 = vmatmul.mubr.f32.gmra.mxu0 %v371
        %v830 = vpop.f32.mrf.mxu0
        %v831 = vadd.f32 0.0, %v830
        %v832 = vpop.f32.mrf.mxu0
        %v833 = vadd.f32 0.0, %v832
        %834 = vdwg.mxu0
        %835 = vmatprep.subr.mxu0 0.0
        %836 = vmatpush1.msra.mxu0 0.0
        %837 = vmatprep.subr.mxu0 0.0
        %838 = vmatpush1.msra.mxu0 0.0
        %839 = vmatprep.subr.mxu0 0.0
        %840 = vmatpush1.msra.mxu0 0.0
        %841 = vmatprep.subr.mxu0 0.0
        %842 = vmatpush1.msra.mxu0 0.0
        %843 = vmatprep.subr.mxu0 0.0
        %844 = vmatpush1.msra.mxu0 0.0
        %845 = vmatprep.subr.mxu0 0.0
        %846 = vmatpush1.msra.mxu0 0.0
        %847 = vmatprep.subr.mxu0 0.0
        %848 = vmatpush1.msra.mxu0 0.0
        %849 = vmatprep.subr.mxu0 0.0
        %850 = vmatpush1.msra.mxu0 0.0
        %851 = vmatprep.subr.mxu0 0.0
        %852 = vmatpush1.msra.mxu0 0.0
        %853 = vmatprep.subr.mxu0 0.0
        %854 = vmatpush1.msra.mxu0 0.0
        %855 = vmatprep.subr.mxu0 0.0
        %856 = vmatpush1.msra.mxu0 0.0
        %857 = vmatprep.subr.mxu0 0.0
        %858 = vmatpush1.msra.mxu0 0.0
        %859 = vmatprep.subr.mxu0 0.0
        %860 = vmatpush1.msra.mxu0 0.0
        %861 = vmatprep.subr.mxu0 0.0
        %862 = vmatpush1.msra.mxu0 0.0
        %863 = vmatprep.subr.mxu0 %v339
        %864 = vmatpush1.msra.mxu0 %v338
        %865 = vmatprep.subr.mxu0 %v299
        %866 = vmatpush1.msra.mxu0 %v298
        %867 = vmatprep.subr.mxu0 0.0
        %868 = vmatpush2.msra.mxu0 0.0
        %869 = vmatprep.subr.mxu0 0.0
        %870 = vmatpush2.msra.mxu0 0.0
        %871 = vmatprep.subr.mxu0 0.0
        %872 = vmatpush2.msra.mxu0 0.0
        %873 = vmatprep.subr.mxu0 0.0
        %874 = vmatpush2.msra.mxu0 0.0
        %875 = vmatprep.subr.mxu0 0.0
        %876 = vmatpush2.msra.mxu0 0.0
        %877 = vmatprep.subr.mxu0 0.0
        %878 = vmatpush2.msra.mxu0 0.0
        %879 = vmatprep.subr.mxu0 0.0
        %880 = vmatpush2.msra.mxu0 0.0
        %881 = vmatprep.subr.mxu0 0.0
        %882 = vmatpush2.msra.mxu0 0.0
        %883 = vmatprep.subr.mxu0 0.0
        %884 = vmatpush2.msra.mxu0 0.0
        %885 = vmatprep.subr.mxu0 0.0
        %886 = vmatpush2.msra.mxu0 0.0
        %887 = vmatprep.subr.mxu0 0.0
        %888 = vmatpush2.msra.mxu0 0.0
        %889 = vmatprep.subr.mxu0 0.0
        %890 = vmatpush2.msra.mxu0 0.0
        %891 = vmatprep.subr.mxu0 0.0
        %892 = vmatpush2.msra.mxu0 0.0
        %893 = vmatprep.subr.mxu0 0.0
        %894 = vmatpush2.msra.mxu0 0.0
        %895 = vmatprep.subr.mxu0 0.0
        %896 = vmatpush2.msra.mxu0 0.0
        %897 = vmatprep.subr.mxu0 0.0
        %898 = vmatpush2.msra.mxu0 0.0
        %899 = vmatprep.mubr.f32.mxu0 0.0
        %900 = vmatmul.mubr.f32.gmra.mxu0 %v368
        %v901 = vpop.f32.mrf.mxu0
        %v902 = vadd.f32 0.0, %v901
        %v903 = vpop.f32.mrf.mxu0
        %v904 = vadd.f32 0.0, %v903
        %905 = vmatprep.mubr.f32.mxu0 0.0
        %906 = vmatmul.mubr.f32.gmra.mxu0 %v371
        %v907 = vpop.f32.mrf.mxu0
        %v908 = vadd.f32 0.0, %v907
        %v909 = vpop.f32.mrf.mxu0
        %v910 = vadd.f32 0.0, %v909
        %911 = vdwg.mxu0
        %912 = vmatprep.subr.mxu0 0.0
        %913 = vmatpush1.msra.mxu0 0.0
        %914 = vmatprep.subr.mxu0 0.0
        %915 = vmatpush1.msra.mxu0 0.0
        %916 = vmatprep.subr.mxu0 0.0
        %917 = vmatpush1.msra.mxu0 0.0
        %918 = vmatprep.subr.mxu0 0.0
        %919 = vmatpush1.msra.mxu0 0.0
        %920 = vmatprep.subr.mxu0 0.0
        %921 = vmatpush1.msra.mxu0 0.0
        %922 = vmatprep.subr.mxu0 0.0
        %923 = vmatpush1.msra.mxu0 0.0
        %924 = vmatprep.subr.mxu0 0.0
        %925 = vmatpush1.msra.mxu0 0.0
        %926 = vmatprep.subr.mxu0 0.0
        %927 = vmatpush1.msra.mxu0 0.0
        %928 = vmatprep.subr.mxu0 0.0
        %929 = vmatpush1.msra.mxu0 0.0
        %930 = vmatprep.subr.mxu0 0.0
        %931 = vmatpush1.msra.mxu0 0.0
        %932 = vmatprep.subr.mxu0 0.0
        %933 = vmatpush1.msra.mxu0 0.0
        %934 = vmatprep.subr.mxu0 0.0
        %935 = vmatpush1.msra.mxu0 0.0
        %936 = vmatprep.subr.mxu0 0.0
        %937 = vmatpush1.msra.mxu0 0.0
        %938 = vmatprep.subr.mxu0 0.0
        %939 = vmatpush1.msra.mxu0 0.0
        %940 = vmatprep.subr.mxu0 %v341
        %941 = vmatpush1.msra.mxu0 %v340
        %942 = vmatprep.subr.mxu0 %v301
        %943 = vmatpush1.msra.mxu0 %v300
        %944 = vmatprep.subr.mxu0 0.0
        %945 = vmatpush2.msra.mxu0 0.0
        %946 = vmatprep.subr.mxu0 0.0
        %947 = vmatpush2.msra.mxu0 0.0
        %948 = vmatprep.subr.mxu0 0.0
        %949 = vmatpush2.msra.mxu0 0.0
        %950 = vmatprep.subr.mxu0 0.0
        %951 = vmatpush2.msra.mxu0 0.0
        %952 = vmatprep.subr.mxu0 0.0
        %953 = vmatpush2.msra.mxu0 0.0
        %954 = vmatprep.subr.mxu0 0.0
        %955 = vmatpush2.msra.mxu0 0.0
        %956 = vmatprep.subr.mxu0 0.0
        %957 = vmatpush2.msra.mxu0 0.0
        %958 = vmatprep.subr.mxu0 0.0
        %959 = vmatpush2.msra.mxu0 0.0
        %960 = vmatprep.subr.mxu0 0.0
        %961 = vmatpush2.msra.mxu0 0.0
        %962 = vmatprep.subr.mxu0 0.0
        %963 = vmatpush2.msra.mxu0 0.0
        %964 = vmatprep.subr.mxu0 0.0
        %965 = vmatpush2.msra.mxu0 0.0
        %966 = vmatprep.subr.mxu0 0.0
        %967 = vmatpush2.msra.mxu0 0.0
        %968 = vmatprep.subr.mxu0 0.0
        %969 = vmatpush2.msra.mxu0 0.0
        %970 = vmatprep.subr.mxu0 0.0
        %971 = vmatpush2.msra.mxu0 0.0
        %972 = vmatprep.subr.mxu0 0.0
        %973 = vmatpush2.msra.mxu0 0.0
        %974 = vmatprep.subr.mxu0 0.0
        %975 = vmatpush2.msra.mxu0 0.0
        %976 = vmatprep.mubr.f32.mxu0 0.0
        %977 = vmatmul.mubr.f32.gmra.mxu0 %v368
        %v978 = vpop.f32.mrf.mxu0
        %v979 = vadd.f32 0.0, %v978
        %v980 = vpop.f32.mrf.mxu0
        %v981 = vadd.f32 0.0, %v980
        %982 = vmatprep.mubr.f32.mxu0 0.0
        %983 = vmatmul.mubr.f32.gmra.mxu0 %v371
        %v984 = vpop.f32.mrf.mxu0
        %v985 = vadd.f32 0.0, %v984
        %v986 = vpop.f32.mrf.mxu0
        %v987 = vadd.f32 0.0, %v986
        %988 = vdwg.mxu0
        %989 = vmatprep.subr.mxu0 0.0
        %990 = vmatpush1.msra.mxu0 0.0
        %991 = vmatprep.subr.mxu0 0.0
        %992 = vmatpush1.msra.mxu0 0.0
        %993 = vmatprep.subr.mxu0 0.0
        %994 = vmatpush1.msra.mxu0 0.0
        %995 = vmatprep.subr.mxu0 0.0
        %996 = vmatpush1.msra.mxu0 0.0
        %997 = vmatprep.subr.mxu0 0.0
        %998 = vmatpush1.msra.mxu0 0.0
        %999 = vmatprep.subr.mxu0 0.0
        %1000 = vmatpush1.msra.mxu0 0.0
        %1001 = vmatprep.subr.mxu0 0.0
        %1002 = vmatpush1.msra.mxu0 0.0
        %1003 = vmatprep.subr.mxu0 0.0
        %1004 = vmatpush1.msra.mxu0 0.0
        %1005 = vmatprep.subr.mxu0 0.0
        %1006 = vmatpush1.msra.mxu0 0.0
        %1007 = vmatprep.subr.mxu0 0.0
        %1008 = vmatpush1.msra.mxu0 0.0
        %1009 = vmatprep.subr.mxu0 0.0
        %1010 = vmatpush1.msra.mxu0 0.0
        %1011 = vmatprep.subr.mxu0 0.0
        %1012 = vmatpush1.msra.mxu0 0.0
        %1013 = vmatprep.subr.mxu0 0.0
        %1014 = vmatpush1.msra.mxu0 0.0
        %1015 = vmatprep.subr.mxu0 0.0
        %1016 = vmatpush1.msra.mxu0 0.0
        %1017 = vmatprep.subr.mxu0 %v343
        %1018 = vmatpush1.msra.mxu0 %v342
        %1019 = vmatprep.subr.mxu0 %v303
        %1020 = vmatpush1.msra.mxu0 %v302
        %1021 = vmatprep.subr.mxu0 0.0
        %1022 = vmatpush2.msra.mxu0 0.0
        %1023 = vmatprep.subr.mxu0 0.0
        %1024 = vmatpush2.msra.mxu0 0.0
        %1025 = vmatprep.subr.mxu0 0.0
        %1026 = vmatpush2.msra.mxu0 0.0
        %1027 = vmatprep.subr.mxu0 0.0
        %1028 = vmatpush2.msra.mxu0 0.0
        %1029 = vmatprep.subr.mxu0 0.0
        %1030 = vmatpush2.msra.mxu0 0.0
        %1031 = vmatprep.subr.mxu0 0.0
        %1032 = vmatpush2.msra.mxu0 0.0
        %1033 = vmatprep.subr.mxu0 0.0
        %1034 = vmatpush2.msra.mxu0 0.0
        %1035 = vmatprep.subr.mxu0 0.0
        %1036 = vmatpush2.msra.mxu0 0.0
        %1037 = vmatprep.subr.mxu0 0.0
        %1038 = vmatpush2.msra.mxu0 0.0
        %1039 = vmatprep.subr.mxu0 0.0
        %1040 = vmatpush2.msra.mxu0 0.0
        %1041 = vmatprep.subr.mxu0 0.0
        %1042 = vmatpush2.msra.mxu0 0.0
        %1043 = vmatprep.subr.mxu0 0.0
        %1044 = vmatpush2.msra.mxu0 0.0
        %1045 = vmatprep.subr.mxu0 0.0
        %1046 = vmatpush2.msra.mxu0 0.0
        %1047 = vmatprep.subr.mxu0 0.0
        %1048 = vmatpush2.msra.mxu0 0.0
        %1049 = vmatprep.subr.mxu0 0.0
        %1050 = vmatpush2.msra.mxu0 0.0
        %1051 = vmatprep.subr.mxu0 0.0
        %1052 = vmatpush2.msra.mxu0 0.0
        %1053 = vmatprep.mubr.f32.mxu0 0.0
        %1054 = vmatmul.mubr.f32.gmra.mxu0 %v368
        %v1055 = vpop.f32.mrf.mxu0
        %v1056 = vadd.f32 0.0, %v1055
        %v1057 = vpop.f32.mrf.mxu0
        %v1058 = vadd.f32 0.0, %v1057
        %1059 = vmatprep.mubr.f32.mxu0 0.0
        %1060 = vmatmul.mubr.f32.gmra.mxu0 %v371
        %v1061 = vpop.f32.mrf.mxu0
        %v1062 = vadd.f32 0.0, %v1061
        %v1063 = vpop.f32.mrf.mxu0
        %v1064 = vadd.f32 0.0, %v1063
        %1065 = vdwg.mxu0
        %1066 = vmatprep.subr.mxu0 0.0
        %1067 = vmatpush1.msra.mxu0 0.0
        %1068 = vmatprep.subr.mxu0 0.0
        %1069 = vmatpush1.msra.mxu0 0.0
        %1070 = vmatprep.subr.mxu0 0.0
        %1071 = vmatpush1.msra.mxu0 0.0
        %1072 = vmatprep.subr.mxu0 0.0
        %1073 = vmatpush1.msra.mxu0 0.0
        %1074 = vmatprep.subr.mxu0 0.0
        %1075 = vmatpush1.msra.mxu0 0.0
        %1076 = vmatprep.subr.mxu0 0.0
        %1077 = vmatpush1.msra.mxu0 0.0
        %1078 = vmatprep.subr.mxu0 0.0
        %1079 = vmatpush1.msra.mxu0 0.0
        %1080 = vmatprep.subr.mxu0 0.0
        %1081 = vmatpush1.msra.mxu0 0.0
        %1082 = vmatprep.subr.mxu0 0.0
        %1083 = vmatpush1.msra.mxu0 0.0
        %1084 = vmatprep.subr.mxu0 0.0
        %1085 = vmatpush1.msra.mxu0 0.0
        %1086 = vmatprep.subr.mxu0 0.0
        %1087 = vmatpush1.msra.mxu0 0.0
        %1088 = vmatprep.subr.mxu0 0.0
        %1089 = vmatpush1.msra.mxu0 0.0
        %1090 = vmatprep.subr.mxu0 0.0
        %1091 = vmatpush1.msra.mxu0 0.0
        %1092 = vmatprep.subr.mxu0 0.0
        %1093 = vmatpush1.msra.mxu0 0.0
        %1094 = vmatprep.subr.mxu0 %v345
        %1095 = vmatpush1.msra.mxu0 %v344
        %1096 = vmatprep.subr.mxu0 %v305
        %1097 = vmatpush1.msra.mxu0 %v304
        %1098 = vmatprep.subr.mxu0 0.0
        %1099 = vmatpush2.msra.mxu0 0.0
        %1100 = vmatprep.subr.mxu0 0.0
        %1101 = vmatpush2.msra.mxu0 0.0
        %1102 = vmatprep.subr.mxu0 0.0
        %1103 = vmatpush2.msra.mxu0 0.0
        %1104 = vmatprep.subr.mxu0 0.0
        %1105 = vmatpush2.msra.mxu0 0.0
        %1106 = vmatprep.subr.mxu0 0.0
        %1107 = vmatpush2.msra.mxu0 0.0
        %1108 = vmatprep.subr.mxu0 0.0
        %1109 = vmatpush2.msra.mxu0 0.0
        %1110 = vmatprep.subr.mxu0 0.0
        %1111 = vmatpush2.msra.mxu0 0.0
        %1112 = vmatprep.subr.mxu0 0.0
        %1113 = vmatpush2.msra.mxu0 0.0
        %1114 = vmatprep.subr.mxu0 0.0
        %1115 = vmatpush2.msra.mxu0 0.0
        %1116 = vmatprep.subr.mxu0 0.0
        %1117 = vmatpush2.msra.mxu0 0.0
        %1118 = vmatprep.subr.mxu0 0.0
        %1119 = vmatpush2.msra.mxu0 0.0
        %1120 = vmatprep.subr.mxu0 0.0
        %1121 = vmatpush2.msra.mxu0 0.0
        %1122 = vmatprep.subr.mxu0 0.0
        %1123 = vmatpush2.msra.mxu0 0.0
        %1124 = vmatprep.subr.mxu0 0.0
        %1125 = vmatpush2.msra.mxu0 0.0
        %1126 = vmatprep.subr.mxu0 0.0
        %1127 = vmatpush2.msra.mxu0 0.0
        %1128 = vmatprep.subr.mxu0 0.0
        %1129 = vmatpush2.msra.mxu0 0.0
        %1130 = vmatprep.mubr.f32.mxu0 0.0
        %1131 = vmatmul.mubr.f32.gmra.mxu0 %v368
        %v1132 = vpop.f32.mrf.mxu0
        %v1133 = vadd.f32 0.0, %v1132
        %v1134 = vpop.f32.mrf.mxu0
        %v1135 = vadd.f32 0.0, %v1134
        %1136 = vmatprep.mubr.f32.mxu0 0.0
        %1137 = vmatmul.mubr.f32.gmra.mxu0 %v371
        %v1138 = vpop.f32.mrf.mxu0
        %v1139 = vadd.f32 0.0, %v1138
        %v1140 = vpop.f32.mrf.mxu0
        %v1141 = vadd.f32 0.0, %v1140
        %1142 = vdwg.mxu0
        %1143 = vmatprep.subr.mxu0 0.0
        %1144 = vmatpush1.msra.mxu0 0.0
        %1145 = vmatprep.subr.mxu0 0.0
        %1146 = vmatpush1.msra.mxu0 0.0
        %1147 = vmatprep.subr.mxu0 0.0
        %1148 = vmatpush1.msra.mxu0 0.0
        %1149 = vmatprep.subr.mxu0 0.0
        %1150 = vmatpush1.msra.mxu0 0.0
        %1151 = vmatprep.subr.mxu0 0.0
        %1152 = vmatpush1.msra.mxu0 0.0
        %1153 = vmatprep.subr.mxu0 0.0
        %1154 = vmatpush1.msra.mxu0 0.0
        %1155 = vmatprep.subr.mxu0 0.0
        %1156 = vmatpush1.msra.mxu0 0.0
        %1157 = vmatprep.subr.mxu0 0.0
        %1158 = vmatpush1.msra.mxu0 0.0
        %1159 = vmatprep.subr.mxu0 0.0
        %1160 = vmatpush1.msra.mxu0 0.0
        %1161 = vmatprep.subr.mxu0 0.0
        %1162 = vmatpush1.msra.mxu0 0.0
        %1163 = vmatprep.subr.mxu0 0.0
        %1164 = vmatpush1.msra.mxu0 0.0
        %1165 = vmatprep.subr.mxu0 0.0
        %1166 = vmatpush1.msra.mxu0 0.0
        %1167 = vmatprep.subr.mxu0 0.0
        %1168 = vmatpush1.msra.mxu0 0.0
        %1169 = vmatprep.subr.mxu0 0.0
        %1170 = vmatpush1.msra.mxu0 0.0
        %1171 = vmatprep.subr.mxu0 %v347
        %1172 = vmatpush1.msra.mxu0 %v346
        %1173 = vmatprep.subr.mxu0 %v307
        %1174 = vmatpush1.msra.mxu0 %v306
        %1175 = vmatprep.subr.mxu0 0.0
        %1176 = vmatpush2.msra.mxu0 0.0
        %1177 = vmatprep.subr.mxu0 0.0
        %1178 = vmatpush2.msra.mxu0 0.0
        %1179 = vmatprep.subr.mxu0 0.0
        %1180 = vmatpush2.msra.mxu0 0.0
        %1181 = vmatprep.subr.mxu0 0.0
        %1182 = vmatpush2.msra.mxu0 0.0
        %1183 = vmatprep.subr.mxu0 0.0
        %1184 = vmatpush2.msra.mxu0 0.0
        %1185 = vmatprep.subr.mxu0 0.0
        %1186 = vmatpush2.msra.mxu0 0.0
        %1187 = vmatprep.subr.mxu0 0.0
        %1188 = vmatpush2.msra.mxu0 0.0
        %1189 = vmatprep.subr.mxu0 0.0
        %1190 = vmatpush2.msra.mxu0 0.0
        %1191 = vmatprep.subr.mxu0 0.0
        %1192 = vmatpush2.msra.mxu0 0.0
        %1193 = vmatprep.subr.mxu0 0.0
        %1194 = vmatpush2.msra.mxu0 0.0
        %1195 = vmatprep.subr.mxu0 0.0
        %1196 = vmatpush2.msra.mxu0 0.0
        %1197 = vmatprep.subr.mxu0 0.0
        %1198 = vmatpush2.msra.mxu0 0.0
        %1199 = vmatprep.subr.mxu0 0.0
        %1200 = vmatpush2.msra.mxu0 0.0
        %1201 = vmatprep.subr.mxu0 0.0
        %1202 = vmatpush2.msra.mxu0 0.0
        %1203 = vmatprep.subr.mxu0 0.0
        %1204 = vmatpush2.msra.mxu0 0.0
        %1205 = vmatprep.subr.mxu0 0.0
        %1206 = vmatpush2.msra.mxu0 0.0
        %1207 = vmatprep.mubr.f32.mxu0 0.0
        %1208 = vmatmul.mubr.f32.gmra.mxu0 %v368
        %v1209 = vpop.f32.mrf.mxu0
        %v1210 = vadd.f32 0.0, %v1209
        %v1211 = vpop.f32.mrf.mxu0
        %v1212 = vadd.f32 0.0, %v1211
        %1213 = vmatprep.mubr.f32.mxu0 0.0
        %1214 = vmatmul.mubr.f32.gmra.mxu0 %v371
        %v1215 = vpop.f32.mrf.mxu0
        %v1216 = vadd.f32 0.0, %v1215
        %v1217 = vpop.f32.mrf.mxu0
        %v1218 = vadd.f32 0.0, %v1217
        %1219 = vdwg.mxu0
        %1220 = vmatprep.subr.mxu0 0.0
        %1221 = vmatpush1.msra.mxu0 0.0
        %1222 = vmatprep.subr.mxu0 0.0
        %1223 = vmatpush1.msra.mxu0 0.0
        %1224 = vmatprep.subr.mxu0 0.0
        %1225 = vmatpush1.msra.mxu0 0.0
        %1226 = vmatprep.subr.mxu0 0.0
        %1227 = vmatpush1.msra.mxu0 0.0
        %1228 = vmatprep.subr.mxu0 0.0
        %1229 = vmatpush1.msra.mxu0 0.0
        %1230 = vmatprep.subr.mxu0 0.0
        %1231 = vmatpush1.msra.mxu0 0.0
        %1232 = vmatprep.subr.mxu0 0.0
        %1233 = vmatpush1.msra.mxu0 0.0
        %1234 = vmatprep.subr.mxu0 0.0
        %1235 = vmatpush1.msra.mxu0 0.0
        %1236 = vmatprep.subr.mxu0 0.0
        %1237 = vmatpush1.msra.mxu0 0.0
        %1238 = vmatprep.subr.mxu0 0.0
        %1239 = vmatpush1.msra.mxu0 0.0
        %1240 = vmatprep.subr.mxu0 0.0
        %1241 = vmatpush1.msra.mxu0 0.0
        %1242 = vmatprep.subr.mxu0 0.0
        %1243 = vmatpush1.msra.mxu0 0.0
        %1244 = vmatprep.subr.mxu0 0.0
        %1245 = vmatpush1.msra.mxu0 0.0
        %1246 = vmatprep.subr.mxu0 0.0
        %1247 = vmatpush1.msra.mxu0 0.0
        %1248 = vmatprep.subr.mxu0 %v349
        %1249 = vmatpush1.msra.mxu0 %v348
        %1250 = vmatprep.subr.mxu0 %v309
        %1251 = vmatpush1.msra.mxu0 %v308
        %1252 = vmatprep.subr.mxu0 0.0
        %1253 = vmatpush2.msra.mxu0 0.0
        %1254 = vmatprep.subr.mxu0 0.0
        %1255 = vmatpush2.msra.mxu0 0.0
        %1256 = vmatprep.subr.mxu0 0.0
        %1257 = vmatpush2.msra.mxu0 0.0
        %1258 = vmatprep.subr.mxu0 0.0
        %1259 = vmatpush2.msra.mxu0 0.0
        %1260 = vmatprep.subr.mxu0 0.0
        %1261 = vmatpush2.msra.mxu0 0.0
        %1262 = vmatprep.subr.mxu0 0.0
        %1263 = vmatpush2.msra.mxu0 0.0
        %1264 = vmatprep.subr.mxu0 0.0
        %1265 = vmatpush2.msra.mxu0 0.0
        %1266 = vmatprep.subr.mxu0 0.0
        %1267 = vmatpush2.msra.mxu0 0.0
        %1268 = vmatprep.subr.mxu0 0.0
        %1269 = vmatpush2.msra.mxu0 0.0
        %1270 = vmatprep.subr.mxu0 0.0
        %1271 = vmatpush2.msra.mxu0 0.0
        %1272 = vmatprep.subr.mxu0 0.0
        %1273 = vmatpush2.msra.mxu0 0.0
        %1274 = vmatprep.subr.mxu0 0.0
        %1275 = vmatpush2.msra.mxu0 0.0
        %1276 = vmatprep.subr.mxu0 0.0
        %1277 = vmatpush2.msra.mxu0 0.0
        %1278 = vmatprep.subr.mxu0 0.0
        %1279 = vmatpush2.msra.mxu0 0.0
        %1280 = vmatprep.subr.mxu0 0.0
        %1281 = vmatpush2.msra.mxu0 0.0
        %1282 = vmatprep.subr.mxu0 0.0
        %1283 = vmatpush2.msra.mxu0 0.0
        %1284 = vmatprep.mubr.f32.mxu0 0.0
        %1285 = vmatmul.mubr.f32.gmra.mxu0 %v368
        %v1286 = vpop.f32.mrf.mxu0
        %v1287 = vadd.f32 0.0, %v1286
        %v1288 = vpop.f32.mrf.mxu0
        %v1289 = vadd.f32 0.0, %v1288
        %1290 = vmatprep.mubr.f32.mxu0 0.0
        %1291 = vmatmul.mubr.f32.gmra.mxu0 %v371
        %v1292 = vpop.f32.mrf.mxu0
        %v1293 = vadd.f32 0.0, %v1292
        %v1294 = vpop.f32.mrf.mxu0
        %v1295 = vadd.f32 0.0, %v1294
        %1296 = vdwg.mxu0
        %1297 = vmatprep.subr.mxu0 0.0
        %1298 = vmatpush1.msra.mxu0 0.0
        %1299 = vmatprep.subr.mxu0 0.0
        %1300 = vmatpush1.msra.mxu0 0.0
        %1301 = vmatprep.subr.mxu0 0.0
        %1302 = vmatpush1.msra.mxu0 0.0
        %1303 = vmatprep.subr.mxu0 0.0
        %1304 = vmatpush1.msra.mxu0 0.0
        %1305 = vmatprep.subr.mxu0 0.0
        %1306 = vmatpush1.msra.mxu0 0.0
        %1307 = vmatprep.subr.mxu0 0.0
        %1308 = vmatpush1.msra.mxu0 0.0
        %1309 = vmatprep.subr.mxu0 0.0
        %1310 = vmatpush1.msra.mxu0 0.0
        %1311 = vmatprep.subr.mxu0 0.0
        %1312 = vmatpush1.msra.mxu0 0.0
        %1313 = vmatprep.subr.mxu0 0.0
        %1314 = vmatpush1.msra.mxu0 0.0
        %1315 = vmatprep.subr.mxu0 0.0
        %1316 = vmatpush1.msra.mxu0 0.0
        %1317 = vmatprep.subr.mxu0 0.0
        %1318 = vmatpush1.msra.mxu0 0.0
        %1319 = vmatprep.subr.mxu0 0.0
        %1320 = vmatpush1.msra.mxu0 0.0
        %1321 = vmatprep.subr.mxu0 0.0
        %1322 = vmatpush1.msra.mxu0 0.0
        %1323 = vmatprep.subr.mxu0 0.0
        %1324 = vmatpush1.msra.mxu0 0.0
        %1325 = vmatprep.subr.mxu0 %v351
        %1326 = vmatpush1.msra.mxu0 %v350
        %1327 = vmatprep.subr.mxu0 %v311
        %1328 = vmatpush1.msra.mxu0 %v310
        %1329 = vmatprep.subr.mxu0 0.0
        %1330 = vmatpush2.msra.mxu0 0.0
        %1331 = vmatprep.subr.mxu0 0.0
        %1332 = vmatpush2.msra.mxu0 0.0
        %1333 = vmatprep.subr.mxu0 0.0
        %1334 = vmatpush2.msra.mxu0 0.0
        %1335 = vmatprep.subr.mxu0 0.0
        %1336 = vmatpush2.msra.mxu0 0.0
        %1337 = vmatprep.subr.mxu0 0.0
        %1338 = vmatpush2.msra.mxu0 0.0
        %1339 = vmatprep.subr.mxu0 0.0
        %1340 = vmatpush2.msra.mxu0 0.0
        %1341 = vmatprep.subr.mxu0 0.0
        %1342 = vmatpush2.msra.mxu0 0.0
        %1343 = vmatprep.subr.mxu0 0.0
        %1344 = vmatpush2.msra.mxu0 0.0
        %1345 = vmatprep.subr.mxu0 0.0
        %1346 = vmatpush2.msra.mxu0 0.0
        %1347 = vmatprep.subr.mxu0 0.0
        %1348 = vmatpush2.msra.mxu0 0.0
        %1349 = vmatprep.subr.mxu0 0.0
        %1350 = vmatpush2.msra.mxu0 0.0
        %1351 = vmatprep.subr.mxu0 0.0
        %1352 = vmatpush2.msra.mxu0 0.0
        %1353 = vmatprep.subr.mxu0 0.0
        %1354 = vmatpush2.msra.mxu0 0.0
        %1355 = vmatprep.subr.mxu0 0.0
        %1356 = vmatpush2.msra.mxu0 0.0
        %1357 = vmatprep.subr.mxu0 0.0
        %1358 = vmatpush2.msra.mxu0 0.0
        %1359 = vmatprep.subr.mxu0 0.0
        %1360 = vmatpush2.msra.mxu0 0.0
        %1361 = vmatprep.mubr.f32.mxu0 0.0
        %1362 = vmatmul.mubr.f32.gmra.mxu0 %v368
        %v1363 = vpop.f32.mrf.mxu0
        %v1364 = vadd.f32 0.0, %v1363
        %v1365 = vpop.f32.mrf.mxu0
        %v1366 = vadd.f32 0.0, %v1365
        %1367 = vmatprep.mubr.f32.mxu0 0.0
        %1368 = vmatmul.mubr.f32.gmra.mxu0 %v371
        %v1369 = vpop.f32.mrf.mxu0
        %v1370 = vadd.f32 0.0, %v1369
        %v1371 = vpop.f32.mrf.mxu0
        %v1372 = vadd.f32 0.0, %v1371
        %1373 = vdwg.mxu0
        %1374 = vmatprep.subr.mxu0 0.0
        %1375 = vmatpush1.msra.mxu0 0.0
        %1376 = vmatprep.subr.mxu0 0.0
        %1377 = vmatpush1.msra.mxu0 0.0
        %1378 = vmatprep.subr.mxu0 0.0
        %1379 = vmatpush1.msra.mxu0 0.0
        %1380 = vmatprep.subr.mxu0 0.0
        %1381 = vmatpush1.msra.mxu0 0.0
        %1382 = vmatprep.subr.mxu0 0.0
        %1383 = vmatpush1.msra.mxu0 0.0
        %1384 = vmatprep.subr.mxu0 0.0
        %1385 = vmatpush1.msra.mxu0 0.0
        %1386 = vmatprep.subr.mxu0 0.0
        %1387 = vmatpush1.msra.mxu0 0.0
        %1388 = vmatprep.subr.mxu0 0.0
        %1389 = vmatpush1.msra.mxu0 0.0
        %1390 = vmatprep.subr.mxu0 0.0
        %1391 = vmatpush1.msra.mxu0 0.0
        %1392 = vmatprep.subr.mxu0 0.0
        %1393 = vmatpush1.msra.mxu0 0.0
        %1394 = vmatprep.subr.mxu0 0.0
        %1395 = vmatpush1.msra.mxu0 0.0
        %1396 = vmatprep.subr.mxu0 0.0
        %1397 = vmatpush1.msra.mxu0 0.0
        %1398 = vmatprep.subr.mxu0 0.0
        %1399 = vmatpush1.msra.mxu0 0.0
        %1400 = vmatprep.subr.mxu0 0.0
        %1401 = vmatpush1.msra.mxu0 0.0
        %1402 = vmatprep.subr.mxu0 %v353
        %1403 = vmatpush1.msra.mxu0 %v352
        %1404 = vmatprep.subr.mxu0 %v313
        %1405 = vmatpush1.msra.mxu0 %v312
        %1406 = vmatprep.subr.mxu0 0.0
        %1407 = vmatpush2.msra.mxu0 0.0
        %1408 = vmatprep.subr.mxu0 0.0
        %1409 = vmatpush2.msra.mxu0 0.0
        %1410 = vmatprep.subr.mxu0 0.0
        %1411 = vmatpush2.msra.mxu0 0.0
        %1412 = vmatprep.subr.mxu0 0.0
        %1413 = vmatpush2.msra.mxu0 0.0
        %1414 = vmatprep.subr.mxu0 0.0
        %1415 = vmatpush2.msra.mxu0 0.0
        %1416 = vmatprep.subr.mxu0 0.0
        %1417 = vmatpush2.msra.mxu0 0.0
        %1418 = vmatprep.subr.mxu0 0.0
        %1419 = vmatpush2.msra.mxu0 0.0
        %1420 = vmatprep.subr.mxu0 0.0
        %1421 = vmatpush2.msra.mxu0 0.0
        %1422 = vmatprep.subr.mxu0 0.0
        %1423 = vmatpush2.msra.mxu0 0.0
        %1424 = vmatprep.subr.mxu0 0.0
        %1425 = vmatpush2.msra.mxu0 0.0
        %1426 = vmatprep.subr.mxu0 0.0
        %1427 = vmatpush2.msra.mxu0 0.0
        %1428 = vmatprep.subr.mxu0 0.0
        %1429 = vmatpush2.msra.mxu0 0.0
        %1430 = vmatprep.subr.mxu0 0.0
        %1431 = vmatpush2.msra.mxu0 0.0
        %1432 = vmatprep.subr.mxu0 0.0
        %1433 = vmatpush2.msra.mxu0 0.0
        %1434 = vmatprep.subr.mxu0 0.0
        %1435 = vmatpush2.msra.mxu0 0.0
        %1436 = vmatprep.subr.mxu0 0.0
        %1437 = vmatpush2.msra.mxu0 0.0
        %1438 = vmatprep.mubr.f32.mxu0 0.0
        %1439 = vmatmul.mubr.f32.gmra.mxu0 %v368
        %v1440 = vpop.f32.mrf.mxu0
        %v1441 = vadd.f32 0.0, %v1440
        %v1442 = vpop.f32.mrf.mxu0
        %v1443 = vadd.f32 0.0, %v1442
        %1444 = vmatprep.mubr.f32.mxu0 0.0
        %1445 = vmatmul.mubr.f32.gmra.mxu0 %v371
        %v1446 = vpop.f32.mrf.mxu0
        %v1447 = vadd.f32 0.0, %v1446
        %v1448 = vpop.f32.mrf.mxu0
        %v1449 = vadd.f32 0.0, %v1448
        %1450 = vdwg.mxu0
        %1451 = vmatprep.subr.mxu0 0.0
        %1452 = vmatpush1.msra.mxu0 0.0
        %1453 = vmatprep.subr.mxu0 0.0
        %1454 = vmatpush1.msra.mxu0 0.0
        %1455 = vmatprep.subr.mxu0 0.0
        %1456 = vmatpush1.msra.mxu0 0.0
        %1457 = vmatprep.subr.mxu0 0.0
        %1458 = vmatpush1.msra.mxu0 0.0
        %1459 = vmatprep.subr.mxu0 0.0
        %1460 = vmatpush1.msra.mxu0 0.0
        %1461 = vmatprep.subr.mxu0 0.0
        %1462 = vmatpush1.msra.mxu0 0.0
        %1463 = vmatprep.subr.mxu0 0.0
        %1464 = vmatpush1.msra.mxu0 0.0
        %1465 = vmatprep.subr.mxu0 0.0
        %1466 = vmatpush1.msra.mxu0 0.0
        %1467 = vmatprep.subr.mxu0 0.0
        %1468 = vmatpush1.msra.mxu0 0.0
        %1469 = vmatprep.subr.mxu0 0.0
        %1470 = vmatpush1.msra.mxu0 0.0
        %1471 = vmatprep.subr.mxu0 0.0
        %1472 = vmatpush1.msra.mxu0 0.0
        %1473 = vmatprep.subr.mxu0 0.0
        %1474 = vmatpush1.msra.mxu0 0.0
        %1475 = vmatprep.subr.mxu0 0.0
        %1476 = vmatpush1.msra.mxu0 0.0
        %1477 = vmatprep.subr.mxu0 0.0
        %1478 = vmatpush1.msra.mxu0 0.0
        %1479 = vmatprep.subr.mxu0 %v355
        %1480 = vmatpush1.msra.mxu0 %v354
        %1481 = vmatprep.subr.mxu0 %v315
        %1482 = vmatpush1.msra.mxu0 %v314
        %1483 = vmatprep.subr.mxu0 0.0
        %1484 = vmatpush2.msra.mxu0 0.0
        %1485 = vmatprep.subr.mxu0 0.0
        %1486 = vmatpush2.msra.mxu0 0.0
        %1487 = vmatprep.subr.mxu0 0.0
        %1488 = vmatpush2.msra.mxu0 0.0
        %1489 = vmatprep.subr.mxu0 0.0
        %1490 = vmatpush2.msra.mxu0 0.0
        %1491 = vmatprep.subr.mxu0 0.0
        %1492 = vmatpush2.msra.mxu0 0.0
        %1493 = vmatprep.subr.mxu0 0.0
        %1494 = vmatpush2.msra.mxu0 0.0
        %1495 = vmatprep.subr.mxu0 0.0
        %1496 = vmatpush2.msra.mxu0 0.0
        %1497 = vmatprep.subr.mxu0 0.0
        %1498 = vmatpush2.msra.mxu0 0.0
        %1499 = vmatprep.subr.mxu0 0.0
        %1500 = vmatpush2.msra.mxu0 0.0
        %1501 = vmatprep.subr.mxu0 0.0
        %1502 = vmatpush2.msra.mxu0 0.0
        %1503 = vmatprep.subr.mxu0 0.0
        %1504 = vmatpush2.msra.mxu0 0.0
        %1505 = vmatprep.subr.mxu0 0.0
        %1506 = vmatpush2.msra.mxu0 0.0
        %1507 = vmatprep.subr.mxu0 0.0
        %1508 = vmatpush2.msra.mxu0 0.0
        %1509 = vmatprep.subr.mxu0 0.0
        %1510 = vmatpush2.msra.mxu0 0.0
        %1511 = vmatprep.subr.mxu0 0.0
        %1512 = vmatpush2.msra.mxu0 0.0
        %1513 = vmatprep.subr.mxu0 0.0
        %1514 = vmatpush2.msra.mxu0 0.0
        %1515 = vmatprep.mubr.f32.mxu0 0.0
        %1516 = vmatmul.mubr.f32.gmra.mxu0 %v368
        %v1517 = vpop.f32.mrf.mxu0
        %v1518 = vadd.f32 0.0, %v1517
        %v1519 = vpop.f32.mrf.mxu0
        %v1520 = vadd.f32 0.0, %v1519
        %1521 = vmatprep.mubr.f32.mxu0 0.0
        %1522 = vmatmul.mubr.f32.gmra.mxu0 %v371
        %v1523 = vpop.f32.mrf.mxu0
        %v1524 = vadd.f32 0.0, %v1523
        %v1525 = vpop.f32.mrf.mxu0
        %v1526 = vadd.f32 0.0, %v1525
        %1527 = vdwg.mxu0
        %1528 = vmatprep.subr.mxu0 0.0
        %1529 = vmatpush1.msra.mxu0 0.0
        %1530 = vmatprep.subr.mxu0 0.0
        %1531 = vmatpush1.msra.mxu0 0.0
        %1532 = vmatprep.subr.mxu0 0.0
        %1533 = vmatpush1.msra.mxu0 0.0
        %1534 = vmatprep.subr.mxu0 0.0
        %1535 = vmatpush1.msra.mxu0 0.0
        %1536 = vmatprep.subr.mxu0 0.0
        %1537 = vmatpush1.msra.mxu0 0.0
        %1538 = vmatprep.subr.mxu0 0.0
        %1539 = vmatpush1.msra.mxu0 0.0
        %1540 = vmatprep.subr.mxu0 0.0
        %1541 = vmatpush1.msra.mxu0 0.0
        %1542 = vmatprep.subr.mxu0 0.0
        %1543 = vmatpush1.msra.mxu0 0.0
        %1544 = vmatprep.subr.mxu0 0.0
        %1545 = vmatpush1.msra.mxu0 0.0
        %1546 = vmatprep.subr.mxu0 0.0
        %1547 = vmatpush1.msra.mxu0 0.0
        %1548 = vmatprep.subr.mxu0 0.0
        %1549 = vmatpush1.msra.mxu0 0.0
        %1550 = vmatprep.subr.mxu0 0.0
        %1551 = vmatpush1.msra.mxu0 0.0
        %1552 = vmatprep.subr.mxu0 0.0
        %1553 = vmatpush1.msra.mxu0 0.0
        %1554 = vmatprep.subr.mxu0 0.0
        %1555 = vmatpush1.msra.mxu0 0.0
        %1556 = vmatprep.subr.mxu0 %v357
        %1557 = vmatpush1.msra.mxu0 %v356
        %1558 = vmatprep.subr.mxu0 %v317
        %1559 = vmatpush1.msra.mxu0 %v316
        %1560 = vmatprep.subr.mxu0 0.0
        %1561 = vmatpush2.msra.mxu0 0.0
        %1562 = vmatprep.subr.mxu0 0.0
        %1563 = vmatpush2.msra.mxu0 0.0
        %1564 = vmatprep.subr.mxu0 0.0
        %1565 = vmatpush2.msra.mxu0 0.0
        %1566 = vmatprep.subr.mxu0 0.0
        %1567 = vmatpush2.msra.mxu0 0.0
        %1568 = vmatprep.subr.mxu0 0.0
        %1569 = vmatpush2.msra.mxu0 0.0
        %1570 = vmatprep.subr.mxu0 0.0
        %1571 = vmatpush2.msra.mxu0 0.0
        %1572 = vmatprep.subr.mxu0 0.0
        %1573 = vmatpush2.msra.mxu0 0.0
        %1574 = vmatprep.subr.mxu0 0.0
        %1575 = vmatpush2.msra.mxu0 0.0
        %1576 = vmatprep.subr.mxu0 0.0
        %1577 = vmatpush2.msra.mxu0 0.0
        %1578 = vmatprep.subr.mxu0 0.0
        %1579 = vmatpush2.msra.mxu0 0.0
        %1580 = vmatprep.subr.mxu0 0.0
        %1581 = vmatpush2.msra.mxu0 0.0
        %1582 = vmatprep.subr.mxu0 0.0
        %1583 = vmatpush2.msra.mxu0 0.0
        %1584 = vmatprep.subr.mxu0 0.0
        %1585 = vmatpush2.msra.mxu0 0.0
        %1586 = vmatprep.subr.mxu0 0.0
        %1587 = vmatpush2.msra.mxu0 0.0
        %1588 = vmatprep.subr.mxu0 0.0
        %1589 = vmatpush2.msra.mxu0 0.0
        %1590 = vmatprep.subr.mxu0 0.0
        %1591 = vmatpush2.msra.mxu0 0.0
        %1592 = vmatprep.mubr.f32.mxu0 0.0
        %1593 = vmatmul.mubr.f32.gmra.mxu0 %v368
        %v1594 = vpop.f32.mrf.mxu0
        %v1595 = vadd.f32 0.0, %v1594
        %v1596 = vpop.f32.mrf.mxu0
        %v1597 = vadd.f32 0.0, %v1596
        %1598 = vmatprep.mubr.f32.mxu0 0.0
        %1599 = vmatmul.mubr.f32.gmra.mxu0 %v371
        %v1600 = vpop.f32.mrf.mxu0
        %v1601 = vadd.f32 0.0, %v1600
        %v1602 = vpop.f32.mrf.mxu0
        %v1603 = vadd.f32 0.0, %v1602
        %1604 = vdwg.mxu0
        %1605 = vmatprep.subr.mxu0 0.0
        %1606 = vmatpush1.msra.mxu0 0.0
        %1607 = vmatprep.subr.mxu0 0.0
        %1608 = vmatpush1.msra.mxu0 0.0
        %1609 = vmatprep.subr.mxu0 0.0
        %1610 = vmatpush1.msra.mxu0 0.0
        %1611 = vmatprep.subr.mxu0 0.0
        %1612 = vmatpush1.msra.mxu0 0.0
        %1613 = vmatprep.subr.mxu0 0.0
        %1614 = vmatpush1.msra.mxu0 0.0
        %1615 = vmatprep.subr.mxu0 0.0
        %1616 = vmatpush1.msra.mxu0 0.0
        %1617 = vmatprep.subr.mxu0 0.0
        %1618 = vmatpush1.msra.mxu0 0.0
        %1619 = vmatprep.subr.mxu0 0.0
        %1620 = vmatpush1.msra.mxu0 0.0
        %1621 = vmatprep.subr.mxu0 0.0
        %1622 = vmatpush1.msra.mxu0 0.0
        %1623 = vmatprep.subr.mxu0 0.0
        %1624 = vmatpush1.msra.mxu0 0.0
        %1625 = vmatprep.subr.mxu0 0.0
        %1626 = vmatpush1.msra.mxu0 0.0
        %1627 = vmatprep.subr.mxu0 0.0
        %1628 = vmatpush1.msra.mxu0 0.0
        %1629 = vmatprep.subr.mxu0 0.0
        %1630 = vmatpush1.msra.mxu0 0.0
        %1631 = vmatprep.subr.mxu0 0.0
        %1632 = vmatpush1.msra.mxu0 0.0
        %1633 = vmatprep.subr.mxu0 %v359
        %1634 = vmatpush1.msra.mxu0 %v358
        %1635 = vmatprep.subr.mxu0 %v319
        %1636 = vmatpush1.msra.mxu0 %v318
        %1637 = vmatprep.subr.mxu0 0.0
        %1638 = vmatpush2.msra.mxu0 0.0
        %1639 = vmatprep.subr.mxu0 0.0
        %1640 = vmatpush2.msra.mxu0 0.0
        %1641 = vmatprep.subr.mxu0 0.0
        %1642 = vmatpush2.msra.mxu0 0.0
        %1643 = vmatprep.subr.mxu0 0.0
        %1644 = vmatpush2.msra.mxu0 0.0
        %1645 = vmatprep.subr.mxu0 0.0
        %1646 = vmatpush2.msra.mxu0 0.0
        %1647 = vmatprep.subr.mxu0 0.0
        %1648 = vmatpush2.msra.mxu0 0.0
        %1649 = vmatprep.subr.mxu0 0.0
        %1650 = vmatpush2.msra.mxu0 0.0
        %1651 = vmatprep.subr.mxu0 0.0
        %1652 = vmatpush2.msra.mxu0 0.0
        %1653 = vmatprep.subr.mxu0 0.0
        %1654 = vmatpush2.msra.mxu0 0.0
        %1655 = vmatprep.subr.mxu0 0.0
        %1656 = vmatpush2.msra.mxu0 0.0
        %1657 = vmatprep.subr.mxu0 0.0
        %1658 = vmatpush2.msra.mxu0 0.0
        %1659 = vmatprep.subr.mxu0 0.0
        %1660 = vmatpush2.msra.mxu0 0.0
        %1661 = vmatprep.subr.mxu0 0.0
        %1662 = vmatpush2.msra.mxu0 0.0
        %1663 = vmatprep.subr.mxu0 0.0
        %1664 = vmatpush2.msra.mxu0 0.0
        %1665 = vmatprep.subr.mxu0 0.0
        %1666 = vmatpush2.msra.mxu0 0.0
        %1667 = vmatprep.subr.mxu0 0.0
        %1668 = vmatpush2.msra.mxu0 0.0
        %1669 = vmatprep.mubr.f32.mxu0 0.0
        %1670 = vmatmul.mubr.f32.gmra.mxu0 %v368
        %v1671 = vpop.f32.mrf.mxu0
        %v1672 = vadd.f32 0.0, %v1671
        %v1673 = vpop.f32.mrf.mxu0
        %v1674 = vadd.f32 0.0, %v1673
        %1675 = vmatprep.mubr.f32.mxu0 0.0
        %1676 = vmatmul.mubr.f32.gmra.mxu0 %v371
        %v1677 = vpop.f32.mrf.mxu0
        %v1678 = vpop.f32.mrf.mxu0
        %1679 = vdwg.mxu0
        %1680 = vmatprep.subr.mxu0 0.0
        %1681 = vmatpush1.msra.mxu0 0.0
        %1682 = vmatprep.subr.mxu0 0.0
        %1683 = vmatpush1.msra.mxu0 0.0
        %1684 = vmatprep.subr.mxu0 0.0
        %1685 = vmatpush1.msra.mxu0 0.0
        %1686 = vmatprep.subr.mxu0 0.0
        %1687 = vmatpush1.msra.mxu0 0.0
        %1688 = vmatprep.subr.mxu0 0.0
        %1689 = vmatpush1.msra.mxu0 0.0
        %1690 = vmatprep.subr.mxu0 0.0
        %1691 = vmatpush1.msra.mxu0 0.0
        %1692 = vmatprep.subr.mxu0 0.0
        %1693 = vmatpush1.msra.mxu0 0.0
        %1694 = vmatprep.subr.mxu0 0.0
        %1695 = vmatpush1.msra.mxu0 0.0
        %1696 = vmatprep.subr.mxu0 0.0
        %1697 = vmatpush1.msra.mxu0 0.0
        %1698 = vmatprep.subr.mxu0 0.0
        %1699 = vmatpush1.msra.mxu0 0.0
        %1700 = vmatprep.subr.mxu0 0.0
        %1701 = vmatpush1.msra.mxu0 0.0
        %1702 = vmatprep.subr.mxu0 0.0
        %1703 = vmatpush1.msra.mxu0 0.0
        %1704 = vmatprep.subr.mxu0 0.0
        %1705 = vmatpush1.msra.mxu0 0.0
        %1706 = vmatprep.subr.mxu0 0.0
        %1707 = vmatpush1.msra.mxu0 0.0
        %1708 = vmatprep.subr.mxu0 %v361
        %1709 = vmatpush1.msra.mxu0 %v360
        %1710 = vmatprep.subr.mxu0 %v321
        %1711 = vmatpush1.msra.mxu0 %v320
        %1712 = vmatprep.subr.mxu0 0.0
        %1713 = vmatpush2.msra.mxu0 0.0
        %1714 = vmatprep.subr.mxu0 0.0
        %1715 = vmatpush2.msra.mxu0 0.0
        %1716 = vmatprep.subr.mxu0 0.0
        %1717 = vmatpush2.msra.mxu0 0.0
        %1718 = vmatprep.subr.mxu0 0.0
        %1719 = vmatpush2.msra.mxu0 0.0
        %1720 = vmatprep.subr.mxu0 0.0
        %1721 = vmatpush2.msra.mxu0 0.0
        %1722 = vmatprep.subr.mxu0 0.0
        %1723 = vmatpush2.msra.mxu0 0.0
        %1724 = vmatprep.subr.mxu0 0.0
        %1725 = vmatpush2.msra.mxu0 0.0
        %1726 = vmatprep.subr.mxu0 0.0
        %1727 = vmatpush2.msra.mxu0 0.0
        %1728 = vmatprep.subr.mxu0 0.0
        %1729 = vmatpush2.msra.mxu0 0.0
        %1730 = vmatprep.subr.mxu0 0.0
        %1731 = vmatpush2.msra.mxu0 0.0
        %1732 = vmatprep.subr.mxu0 0.0
        %1733 = vmatpush2.msra.mxu0 0.0
        %1734 = vmatprep.subr.mxu0 0.0
        %1735 = vmatpush2.msra.mxu0 0.0
        %1736 = vmatprep.subr.mxu0 0.0
        %1737 = vmatpush2.msra.mxu0 0.0
        %1738 = vmatprep.subr.mxu0 0.0
        %1739 = vmatpush2.msra.mxu0 0.0
        %1740 = vmatprep.subr.mxu0 0.0
        %1741 = vmatpush2.msra.mxu0 0.0
        %1742 = vmatprep.subr.mxu0 0.0
        %1743 = vmatpush2.msra.mxu0 0.0
        %1744 = vmatprep.mubr.f32.mxu0 0.0
        %1745 = vmatmul.mubr.f32.gmra.mxu0 %v368
        %v1746 = vpop.f32.mrf.mxu0
        %v1747 = vadd.f32 0.0, %v1746
        %v1748 = vpop.f32.mrf.mxu0
        %v1749 = vadd.f32 0.0, %v1748
        %1750 = vmatprep.mubr.f32.mxu0 0.0
        %1751 = vmatmul.mubr.f32.gmra.mxu0 %v371
        %v1752 = vpop.f32.mrf.mxu0
        %v1753 = vpop.f32.mrf.mxu0
        %1754 = vdwg.mxu0
        %1755 = vmatprep.subr.mxu0 0.0
        %1756 = vmatpush1.msra.mxu0 0.0
        %1757 = vmatprep.subr.mxu0 0.0
        %1758 = vmatpush1.msra.mxu0 0.0
        %1759 = vmatprep.subr.mxu0 0.0
        %1760 = vmatpush1.msra.mxu0 0.0
        %1761 = vmatprep.subr.mxu0 0.0
        %1762 = vmatpush1.msra.mxu0 0.0
        %1763 = vmatprep.subr.mxu0 0.0
        %1764 = vmatpush1.msra.mxu0 0.0
        %1765 = vmatprep.subr.mxu0 0.0
        %1766 = vmatpush1.msra.mxu0 0.0
        %1767 = vmatprep.subr.mxu0 0.0
        %1768 = vmatpush1.msra.mxu0 0.0
        %1769 = vmatprep.subr.mxu0 0.0
        %1770 = vmatpush1.msra.mxu0 0.0
        %1771 = vmatprep.subr.mxu0 0.0
        %1772 = vmatpush1.msra.mxu0 0.0
        %1773 = vmatprep.subr.mxu0 0.0
        %1774 = vmatpush1.msra.mxu0 0.0
        %1775 = vmatprep.subr.mxu0 0.0
        %1776 = vmatpush1.msra.mxu0 0.0
        %1777 = vmatprep.subr.mxu0 0.0
        %1778 = vmatpush1.msra.mxu0 0.0
        %1779 = vmatprep.subr.mxu0 0.0
        %1780 = vmatpush1.msra.mxu0 0.0
        %1781 = vmatprep.subr.mxu0 0.0
        %1782 = vmatpush1.msra.mxu0 0.0
        %1783 = vmatprep.subr.mxu0 %v363
        %1784 = vmatpush1.msra.mxu0 %v362
        %1785 = vmatprep.subr.mxu0 %v323
        %1786 = vmatpush1.msra.mxu0 %v322
        %1787 = vmatprep.subr.mxu0 0.0
        %1788 = vmatpush2.msra.mxu0 0.0
        %1789 = vmatprep.subr.mxu0 0.0
        %1790 = vmatpush2.msra.mxu0 0.0
        %1791 = vmatprep.subr.mxu0 0.0
        %1792 = vmatpush2.msra.mxu0 0.0
        %1793 = vmatprep.subr.mxu0 0.0
        %1794 = vmatpush2.msra.mxu0 0.0
        %1795 = vmatprep.subr.mxu0 0.0
        %1796 = vmatpush2.msra.mxu0 0.0
        %1797 = vmatprep.subr.mxu0 0.0
        %1798 = vmatpush2.msra.mxu0 0.0
        %1799 = vmatprep.subr.mxu0 0.0
        %1800 = vmatpush2.msra.mxu0 0.0
        %1801 = vmatprep.subr.mxu0 0.0
        %1802 = vmatpush2.msra.mxu0 0.0
        %1803 = vmatprep.subr.mxu0 0.0
        %1804 = vmatpush2.msra.mxu0 0.0
        %1805 = vmatprep.subr.mxu0 0.0
        %1806 = vmatpush2.msra.mxu0 0.0
        %1807 = vmatprep.subr.mxu0 0.0
        %1808 = vmatpush2.msra.mxu0 0.0
        %1809 = vmatprep.subr.mxu0 0.0
        %1810 = vmatpush2.msra.mxu0 0.0
        %1811 = vmatprep.subr.mxu0 0.0
        %1812 = vmatpush2.msra.mxu0 0.0
        %1813 = vmatprep.subr.mxu0 0.0
        %1814 = vmatpush2.msra.mxu0 0.0
        %1815 = vmatprep.subr.mxu0 0.0
        %1816 = vmatpush2.msra.mxu0 0.0
        %1817 = vmatprep.subr.mxu0 0.0
        %1818 = vmatpush2.msra.mxu0 0.0
        %1819 = vmatprep.mubr.f32.mxu0 0.0
        %1820 = vmatmul.mubr.f32.gmra.mxu0 %v368
        %v1821 = vpop.f32.mrf.mxu0
        %v1822 = vadd.f32 0.0, %v1821
        %v1823 = vpop.f32.mrf.mxu0
        %v1824 = vadd.f32 0.0, %v1823
        %1825 = vmatprep.mubr.f32.mxu0 0.0
        %1826 = vmatmul.mubr.f32.gmra.mxu0 %v371
        %v1827 = vpop.f32.mrf.mxu0
        %v1828 = vpop.f32.mrf.mxu0
        %1829 = vdwg.mxu0
        %1830 = vmatprep.subr.mxu0 0.0
        %1831 = vmatpush1.msra.mxu0 0.0
        %1832 = vmatprep.subr.mxu0 0.0
        %1833 = vmatpush1.msra.mxu0 0.0
        %1834 = vmatprep.subr.mxu0 0.0
        %1835 = vmatpush1.msra.mxu0 0.0
        %1836 = vmatprep.subr.mxu0 0.0
        %1837 = vmatpush1.msra.mxu0 0.0
        %1838 = vmatprep.subr.mxu0 0.0
        %1839 = vmatpush1.msra.mxu0 0.0
        %1840 = vmatprep.subr.mxu0 0.0
        %1841 = vmatpush1.msra.mxu0 0.0
        %1842 = vmatprep.subr.mxu0 0.0
        %1843 = vmatpush1.msra.mxu0 0.0
        %1844 = vmatprep.subr.mxu0 0.0
        %1845 = vmatpush1.msra.mxu0 0.0
        %1846 = vmatprep.subr.mxu0 0.0
        %1847 = vmatpush1.msra.mxu0 0.0
        %1848 = vmatprep.subr.mxu0 0.0
        %1849 = vmatpush1.msra.mxu0 0.0
        %1850 = vmatprep.subr.mxu0 0.0
        %1851 = vmatpush1.msra.mxu0 0.0
        %1852 = vmatprep.subr.mxu0 0.0
        %1853 = vmatpush1.msra.mxu0 0.0
        %1854 = vmatprep.subr.mxu0 0.0
        %1855 = vmatpush1.msra.mxu0 0.0
        %1856 = vmatprep.subr.mxu0 0.0
        %1857 = vmatpush1.msra.mxu0 0.0
        %1858 = vmatprep.subr.mxu0 %v365
        %1859 = vmatpush1.msra.mxu0 %v364
        %1860 = vmatprep.subr.mxu0 %v325
        %1861 = vmatpush1.msra.mxu0 %v324
        %1862 = vmatprep.subr.mxu0 0.0
        %1863 = vmatpush2.msra.mxu0 0.0
        %1864 = vmatprep.subr.mxu0 0.0
        %1865 = vmatpush2.msra.mxu0 0.0
        %1866 = vmatprep.subr.mxu0 0.0
        %1867 = vmatpush2.msra.mxu0 0.0
        %1868 = vmatprep.subr.mxu0 0.0
        %1869 = vmatpush2.msra.mxu0 0.0
        %1870 = vmatprep.subr.mxu0 0.0
        %1871 = vmatpush2.msra.mxu0 0.0
        %1872 = vmatprep.subr.mxu0 0.0
        %1873 = vmatpush2.msra.mxu0 0.0
        %1874 = vmatprep.subr.mxu0 0.0
        %1875 = vmatpush2.msra.mxu0 0.0
        %1876 = vmatprep.subr.mxu0 0.0
        %1877 = vmatpush2.msra.mxu0 0.0
        %1878 = vmatprep.subr.mxu0 0.0
        %1879 = vmatpush2.msra.mxu0 0.0
        %1880 = vmatprep.subr.mxu0 0.0
        %1881 = vmatpush2.msra.mxu0 0.0
        %1882 = vmatprep.subr.mxu0 0.0
        %1883 = vmatpush2.msra.mxu0 0.0
        %1884 = vmatprep.subr.mxu0 0.0
        %1885 = vmatpush2.msra.mxu0 0.0
        %1886 = vmatprep.subr.mxu0 0.0
        %1887 = vmatpush2.msra.mxu0 0.0
        %1888 = vmatprep.subr.mxu0 0.0
        %1889 = vmatpush2.msra.mxu0 0.0
        %1890 = vmatprep.subr.mxu0 0.0
        %1891 = vmatpush2.msra.mxu0 0.0
        %1892 = vmatprep.subr.mxu0 0.0
        %1893 = vmatpush2.msra.mxu0 0.0
        %1894 = vmatprep.mubr.f32.mxu0 0.0
        %1895 = vmatmul.mubr.f32.gmra.mxu0 %v368
        %v1896 = vpop.f32.mrf.mxu0
        %v1897 = vadd.f32 0.0, %v1896
        %v1898 = vpop.f32.mrf.mxu0
        %v1899 = vadd.f32 0.0, %v1898
        %1900 = vmatprep.mubr.f32.mxu0 0.0
        %1901 = vmatmul.mubr.f32.gmra.mxu0 %v371
        %v1902 = vpop.f32.mrf.mxu0
        %v1903 = vpop.f32.mrf.mxu0
        %1904 = vdwg.mxu0
        %v1905 = vadd.f32 %v440, 0.0
        %v1906 = vadd.f32 %v442, 0.0
        %v1907 = vadd.f32 %v517, 0.0
        %v1908 = vadd.f32 %v519, 0.0
        %v1909 = vadd.f32 %v446, 0.0
        %v1910 = vadd.f32 %v448, 0.0
        %v1911 = vadd.f32 %v523, 0.0
        %v1912 = vadd.f32 %v525, 0.0
        %vm1921 = vcmask 1042432
        %v1922 = vrot.slane %v1056, 5
        %v1923 = vrot.slane %v1058, 5
        %v1924 = vrot.slane %v1133, 5
        %v1925 = vrot.slane %v1135, 5
        %v1926 = vrot.slane %v1062, 5
        %v1927 = vsel %vm1921, %v1922, %v1926
        %v1928 = vrot.slane %v1064, 5
        %v1929 = vsel %vm1921, %v1923, %v1928
        %v1930 = vrot.slane %v1139, 5
        %v1931 = vsel %vm1921, %v1924, %v1930
        %v1932 = vrot.slane %v1141, 5
        %v1933 = vsel %vm1921, %v1925, %v1932
        %v1942 = vadd.f32 %v1905, %v1922
        %v1943 = vadd.f32 %v1906, %v1923
        %v1944 = vadd.f32 %v1907, %v1924
        %v1945 = vadd.f32 %v1908, %v1925
        %v1946 = vadd.f32 %v1909, %v1927
        %v1947 = vadd.f32 %v1910, %v1929
        %v1948 = vadd.f32 %v1911, %v1931
        %v1949 = vadd.f32 %v1912, %v1933
        %v1954 = vrot.slane %v1672, 2
        %v1955 = vrot.slane %v1674, 2
        %v1956 = vrot.slane %v1747, 2
        %v1957 = vrot.slane %v1749, 2
        %v1962 = vadd.f32 %v1942, %v1954
        %v1963 = vadd.f32 %v1943, %v1955
        %v1964 = vadd.f32 %v1944, %v1956
        %v1965 = vadd.f32 %v1945, %v1957
        %v1966 = vadd.f32 %v1946, %v1954
        %v1967 = vadd.f32 %v1947, %v1955
        %v1968 = vadd.f32 %v1948, %v1956
        %v1969 = vadd.f32 %v1949, %v1957
        %v1970 = vadd.f32 %v902, 0.0
        %v1971 = vadd.f32 %v904, 0.0
        %v1972 = vadd.f32 %v979, 0.0
        %v1973 = vadd.f32 %v981, 0.0
        %v1974 = vadd.f32 %v908, 0.0
        %v1975 = vadd.f32 %v910, 0.0
        %v1976 = vadd.f32 %v985, 0.0
        %v1977 = vadd.f32 %v987, 0.0
        %v1986 = vrot.slane %v1518, 5
        %v1987 = vrot.slane %v1520, 5
        %v1988 = vrot.slane %v1595, 5
        %v1989 = vrot.slane %v1597, 5
        %v1990 = vrot.slane %v1524, 5
        %v1991 = vsel %vm1921, %v1986, %v1990
        %v1992 = vrot.slane %v1526, 5
        %v1993 = vsel %vm1921, %v1987, %v1992
        %v1994 = vrot.slane %v1601, 5
        %v1995 = vsel %vm1921, %v1988, %v1994
        %v1996 = vrot.slane %v1603, 5
        %v1997 = vsel %vm1921, %v1989, %v1996
        %v2006 = vadd.f32 %v1970, %v1986
        %v2007 = vadd.f32 %v1971, %v1987
        %v2008 = vadd.f32 %v1972, %v1988
        %v2009 = vadd.f32 %v1973, %v1989
        %v2010 = vadd.f32 %v1974, %v1991
        %v2011 = vadd.f32 %v1975, %v1993
        %v2012 = vadd.f32 %v1976, %v1995
        %v2013 = vadd.f32 %v1977, %v1997
        %v2014 = vadd.f32 %v748, 0.0
        %v2015 = vadd.f32 %v750, 0.0
        %v2016 = vadd.f32 %v825, 0.0
        %v2017 = vadd.f32 %v827, 0.0
        %v2018 = vadd.f32 %v754, 0.0
        %v2019 = vadd.f32 %v756, 0.0
        %v2020 = vadd.f32 %v831, 0.0
        %v2021 = vadd.f32 %v833, 0.0
        %v2030 = vrot.slane %v1364, 5
        %v2031 = vrot.slane %v1366, 5
        %v2032 = vrot.slane %v1441, 5
        %v2033 = vrot.slane %v1443, 5
        %v2034 = vrot.slane %v1370, 5
        %v2035 = vsel %vm1921, %v2030, %v2034
        %v2036 = vrot.slane %v1372, 5
        %v2037 = vsel %vm1921, %v2031, %v2036
        %v2038 = vrot.slane %v1447, 5
        %v2039 = vsel %vm1921, %v2032, %v2038
        %v2040 = vrot.slane %v1449, 5
        %v2041 = vsel %vm1921, %v2033, %v2040
        %v2050 = vadd.f32 %v2014, %v2030
        %v2051 = vadd.f32 %v2015, %v2031
        %v2052 = vadd.f32 %v2016, %v2032
        %v2053 = vadd.f32 %v2017, %v2033
        %v2054 = vadd.f32 %v2018, %v2035
        %v2055 = vadd.f32 %v2019, %v2037
        %v2056 = vadd.f32 %v2020, %v2039
        %v2057 = vadd.f32 %v2021, %v2041
        %v2058 = vadd.f32 %v594, 0.0
        %v2059 = vadd.f32 %v596, 0.0
        %v2060 = vadd.f32 %v671, 0.0
        %v2061 = vadd.f32 %v673, 0.0
        %v2062 = vadd.f32 %v600, 0.0
        %v2063 = vadd.f32 %v602, 0.0
        %v2064 = vadd.f32 %v677, 0.0
        %v2065 = vadd.f32 %v679, 0.0
        %v2074 = vrot.slane %v1210, 5
        %v2075 = vrot.slane %v1212, 5
        %v2076 = vrot.slane %v1287, 5
        %v2077 = vrot.slane %v1289, 5
        %v2078 = vrot.slane %v1216, 5
        %v2079 = vsel %vm1921, %v2074, %v2078
        %v2080 = vrot.slane %v1218, 5
        %v2081 = vsel %vm1921, %v2075, %v2080
        %v2082 = vrot.slane %v1293, 5
        %v2083 = vsel %vm1921, %v2076, %v2082
        %v2084 = vrot.slane %v1295, 5
        %v2085 = vsel %vm1921, %v2077, %v2084
        %v2094 = vadd.f32 %v2058, %v2074
        %v2095 = vadd.f32 %v2059, %v2075
        %v2096 = vadd.f32 %v2060, %v2076
        %v2097 = vadd.f32 %v2061, %v2077
        %v2098 = vadd.f32 %v2062, %v2079
        %v2099 = vadd.f32 %v2063, %v2081
        %v2100 = vadd.f32 %v2064, %v2083
        %v2101 = vadd.f32 %v2065, %v2085
        %v2106 = vrot.slane %v1822, 2
        %v2107 = vrot.slane %v1824, 2
        %v2108 = vrot.slane %v1897, 2
        %v2109 = vrot.slane %v1899, 2
        %v2114 = vadd.f32 %v2094, %v2106
        %v2115 = vadd.f32 %v2095, %v2107
        %v2116 = vadd.f32 %v2096, %v2108
        %v2117 = vadd.f32 %v2097, %v2109
        %v2118 = vadd.f32 %v2098, %v2106
        %v2119 = vadd.f32 %v2099, %v2107
        %v2120 = vadd.f32 %v2100, %v2108
        %v2121 = vadd.f32 %v2101, %v2109
        %vm2130 = vcmask 1041408
        %v2131 = vrot.slane %v2006, 6
        %v2132 = vrot.slane %v2007, 6
        %v2133 = vrot.slane %v2008, 6
        %v2134 = vrot.slane %v2009, 6
        %v2135 = vrot.slane %v2010, 6
        %v2136 = vsel %vm2130, %v2131, %v2135
        %v2137 = vrot.slane %v2011, 6
        %v2138 = vsel %vm2130, %v2132, %v2137
        %v2139 = vrot.slane %v2012, 6
        %v2140 = vsel %vm2130, %v2133, %v2139
        %v2141 = vrot.slane %v2013, 6
        %v2142 = vsel %vm2130, %v2134, %v2141
        %vm2159 = vcmask 1040384
        %v2160 = vrot.slane %v2050, 7
        %v2161 = vrot.slane %v2051, 7
        %v2162 = vrot.slane %v2052, 7
        %v2163 = vrot.slane %v2053, 7
        %v2164 = vrot.slane %v2054, 7
        %v2165 = vsel %vm2159, %v2160, %v2164
        %v2166 = vrot.slane %v2055, 7
        %v2167 = vsel %vm2159, %v2161, %v2166
        %v2168 = vrot.slane %v2056, 7
        %v2169 = vsel %vm2159, %v2162, %v2168
        %v2170 = vrot.slane %v2057, 7
        %v2171 = vsel %vm2159, %v2163, %v2170
        %v2180 = vld [vmem:[%s3] sm:$0xff]
        %v2181 = vld [vmem:[%s3 + $0x8] sm:$0xff]
        %v2184 = vlaneseq
        %v2185 = vshrl.u32 %v2184, 7
        %v2186 = vsub.s32 0, %v2185
        %v2187 = vrot.slane %v2180, %v2186
        %v2188 = vlaneseq
        %v2189 = vshrl.u32 %v2188, 7
        %v2190 = vsub.s32 1, %v2189
        %v2191 = vrot.slane %v2180, %v2190
        %v2192 = vlaneseq
        %v2193 = vshrl.u32 %v2192, 7
        %v2194 = vsub.s32 2, %v2193
        %v2195 = vrot.slane %v2180, %v2194
        %v2196 = vlaneseq
        %v2197 = vshrl.u32 %v2196, 7
        %v2198 = vsub.s32 3, %v2197
        %v2199 = vrot.slane %v2180, %v2198
        %v2200 = vlaneseq
        %v2201 = vshrl.u32 %v2200, 7
        %v2202 = vsub.s32 4, %v2201
        %v2203 = vrot.slane %v2180, %v2202
        %v2204 = vlaneseq
        %v2205 = vshrl.u32 %v2204, 7
        %v2206 = vsub.s32 5, %v2205
        %v2207 = vrot.slane %v2180, %v2206
        %v2208 = vlaneseq
        %v2209 = vshrl.u32 %v2208, 7
        %v2210 = vsub.s32 6, %v2209
        %v2211 = vrot.slane %v2180, %v2210
        %v2212 = vlaneseq
        %v2213 = vshrl.u32 %v2212, 7
        %v2214 = vsub.s32 7, %v2213
        %v2215 = vrot.slane %v2180, %v2214
        %v2216 = vlaneseq
        %v2217 = vshrl.u32 %v2216, 7
        %v2218 = vsub.s32 0, %v2217
        %v2219 = vrot.slane %v2181, %v2218
        %v2220 = vlaneseq
        %v2221 = vshrl.u32 %v2220, 7
        %v2222 = vsub.s32 1, %v2221
        %v2223 = vrot.slane %v2181, %v2222
        %v2224 = vlaneseq
        %v2225 = vshrl.u32 %v2224, 7
        %v2226 = vsub.s32 2, %v2225
        %v2227 = vrot.slane %v2181, %v2226
        %v2228 = vlaneseq
        %v2229 = vshrl.u32 %v2228, 7
        %v2230 = vsub.s32 3, %v2229
        %v2231 = vrot.slane %v2181, %v2230
        %v2232 = vlaneseq
        %v2233 = vshrl.u32 %v2232, 7
        %v2234 = vsub.s32 4, %v2233
        %v2235 = vrot.slane %v2181, %v2234
        %v2236 = vlaneseq
        %v2237 = vshrl.u32 %v2236, 7
        %v2238 = vsub.s32 5, %v2237
        %v2239 = vrot.slane %v2181, %v2238
        %v2240 = vlaneseq
        %v2241 = vshrl.u32 %v2240, 7
        %v2242 = vsub.s32 6, %v2241
        %v2243 = vrot.slane %v2181, %v2242
        %v2244 = vlaneseq
        %v2245 = vshrl.u32 %v2244, 7
        %v2246 = vsub.s32 7, %v2245
        %v2247 = vrot.slane %v2181, %v2246
        %v2264 = vadd.f32 %v1962, %v2187
        %v2265 = vadd.f32 %v1963, %v2191
        %v2266 = vadd.f32 %v1964, %v2195
        %v2267 = vadd.f32 %v1965, %v2199
        %v2268 = vadd.f32 %v2131, %v2203
        %v2269 = vadd.f32 %v2132, %v2207
        %v2270 = vadd.f32 %v2133, %v2211
        %v2271 = vadd.f32 %v2134, %v2215
        %v2272 = vadd.f32 %v2160, %v2219
        %v2273 = vadd.f32 %v2161, %v2223
        %v2274 = vadd.f32 %v2162, %v2227
        %v2275 = vadd.f32 %v2163, %v2231
        %v2276 = vadd.f32 %v2114, %v2235
        %v2277 = vadd.f32 %v2115, %v2239
        %v2278 = vadd.f32 %v2116, %v2243
        %v2279 = vadd.f32 %v2117, %v2247
        %v2280 = vadd.f32 %v1966, %v2187
        %v2281 = vadd.f32 %v1967, %v2191
        %v2282 = vadd.f32 %v1968, %v2195
        %v2283 = vadd.f32 %v1969, %v2199
        %v2284 = vadd.f32 %v2136, %v2203
        %v2285 = vadd.f32 %v2138, %v2207
        %v2286 = vadd.f32 %v2140, %v2211
        %v2287 = vadd.f32 %v2142, %v2215
        %v2288 = vadd.f32 %v2165, %v2219
        %v2289 = vadd.f32 %v2167, %v2223
        %v2290 = vadd.f32 %v2169, %v2227
        %v2291 = vadd.f32 %v2171, %v2231
        %v2292 = vadd.f32 %v2118, %v2235
        %v2293 = vadd.f32 %v2119, %v2239
        %v2294 = vadd.f32 %v2120, %v2243
        %v2295 = vadd.f32 %v2121, %v2247
        %v2296 = vmax.f32 %v2264, 0.0
        %v2297 = vmax.f32 %v2265, 0.0
        %v2298 = vmax.f32 %v2266, 0.0
        %v2299 = vmax.f32 %v2267, 0.0
        %v2300 = vmax.f32 %v2268, 0.0
        %v2301 = vmax.f32 %v2269, 0.0
        %v2302 = vmax.f32 %v2270, 0.0
        %v2303 = vmax.f32 %v2271, 0.0
        %v2304 = vmax.f32 %v2272, 0.0
        %v2305 = vmax.f32 %v2273, 0.0
        %v2306 = vmax.f32 %v2274, 0.0
        %v2307 = vmax.f32 %v2275, 0.0
        %v2308 = vmax.f32 %v2276, 0.0
        %v2309 = vmax.f32 %v2277, 0.0
        %v2310 = vmax.f32 %v2278, 0.0
        %v2311 = vmax.f32 %v2279, 0.0
        %v2312 = vmax.f32 %v2280, 0.0
        %v2313 = vmax.f32 %v2281, 0.0
        %v2314 = vmax.f32 %v2282, 0.0
        %v2315 = vmax.f32 %v2283, 0.0
        %v2316 = vmax.f32 %v2284, 0.0
        %v2317 = vmax.f32 %v2285, 0.0
        %v2318 = vmax.f32 %v2286, 0.0
        %v2319 = vmax.f32 %v2287, 0.0
        %v2320 = vmax.f32 %v2288, 0.0
        %v2321 = vmax.f32 %v2289, 0.0
        %v2322 = vmax.f32 %v2290, 0.0
        %v2323 = vmax.f32 %v2291, 0.0
        %v2324 = vmax.f32 %v2292, 0.0
        %v2325 = vmax.f32 %v2293, 0.0
        %v2326 = vmax.f32 %v2294, 0.0
        %v2327 = vmax.f32 %v2295, 0.0
        %v2360 = vrot.slane %v2296, 6
        %v2361 = vrot.slane %v2312, 6
        %v2362 = vsel %vm2130, %v2360, %v2361
        %v2363 = vrot.slane %v2297, 6
        %v2364 = vrot.slane %v2313, 6
        %v2365 = vsel %vm2130, %v2363, %v2364
        %v2366 = vrot.slane %v2298, 6
        %v2367 = vrot.slane %v2314, 6
        %v2368 = vsel %vm2130, %v2366, %v2367
        %v2369 = vrot.slane %v2299, 6
        %v2370 = vrot.slane %v2315, 6
        %v2371 = vsel %vm2130, %v2369, %v2370
        %v2372 = vrot.slane %v2300, 6
        %v2373 = vrot.slane %v2316, 6
        %v2374 = vsel %vm2130, %v2372, %v2373
        %v2375 = vrot.slane %v2301, 6
        %v2376 = vrot.slane %v2317, 6
        %v2377 = vsel %vm2130, %v2375, %v2376
        %v2378 = vrot.slane %v2302, 6
        %v2379 = vrot.slane %v2318, 6
        %v2380 = vsel %vm2130, %v2378, %v2379
        %v2381 = vrot.slane %v2303, 6
        %v2382 = vrot.slane %v2319, 6
        %v2383 = vsel %vm2130, %v2381, %v2382
        %v2384 = vrot.slane %v2304, 6
        %v2385 = vrot.slane %v2320, 6
        %v2386 = vsel %vm2130, %v2384, %v2385
        %v2387 = vrot.slane %v2305, 6
        %v2388 = vrot.slane %v2321, 6
        %v2389 = vsel %vm2130, %v2387, %v2388
        %v2390 = vrot.slane %v2306, 6
        %v2391 = vrot.slane %v2322, 6
        %v2392 = vsel %vm2130, %v2390, %v2391
        %v2393 = vrot.slane %v2307, 6
        %v2394 = vrot.slane %v2323, 6
        %v2395 = vsel %vm2130, %v2393, %v2394
        %v2396 = vrot.slane %v2308, 6
        %v2397 = vrot.slane %v2324, 6
        %v2398 = vsel %vm2130, %v2396, %v2397
        %v2399 = vrot.slane %v2309, 6
        %v2400 = vrot.slane %v2325, 6
        %v2401 = vsel %vm2130, %v2399, %v2400
        %v2402 = vrot.slane %v2310, 6
        %v2403 = vrot.slane %v2326, 6
        %v2404 = vsel %vm2130, %v2402, %v2403
        %v2405 = vrot.slane %v2311, 6
        %v2406 = vrot.slane %v2327, 6
        %v2407 = vsel %vm2130, %v2405, %v2406
        %2424 = vst [vmem:[%s283] sm:$0xff] %v2362
        %2425 = vst [vmem:[%s283 + $0x8] sm:$0xff] %v2365
        %2426 = vst [vmem:[%s283 + $0x10] sm:$0xff] %v2368
        %2427 = vst [vmem:[%s283 + $0x18] sm:$0xff] %v2371
        %2428 = vst [vmem:[%s283 + $0x20] sm:$0xff] %v2374
        %2429 = vst [vmem:[%s283 + $0x28] sm:$0xff] %v2377
        %2430 = vst [vmem:[%s283 + $0x30] sm:$0xff] %v2380
        %2431 = vst [vmem:[%s283 + $0x38] sm:$0xff] %v2383
        %2432 = vst [vmem:[%s283 + $0x40] sm:$0xff] %v2386
        %2433 = vst [vmem:[%s283 + $0x48] sm:$0xff] %v2389
        %2434 = vst [vmem:[%s283 + $0x50] sm:$0xff] %v2392
        %2435 = vst [vmem:[%s283 + $0x58] sm:$0xff] %v2395
        %2436 = vst [vmem:[%s283 + $0x60] sm:$0xff] %v2398
        %2437 = vst [vmem:[%s283 + $0x68] sm:$0xff] %v2401
        %2438 = vst [vmem:[%s283 + $0x70] sm:$0xff] %v2404
        %2439 = vst [vmem:[%s283 + $0x78] sm:$0xff] %v2407
        %p2440 = scmp.lt.s32.totalorder %s20, 1
        %s2441 = scalar_select %p2440, %s20, 1
        %p2442 = scmp.lt.s32.totalorder %s21, 0
        %s2443 = scalar_select %p2442, %s21, 0
        %s2444 = smul.addr %s2443, 16
        %s2445 = smul.addr %s2441, 16
        %s2446 = sadd.s32 %s2444, %s2445
        %s2447 = smul.addr %s2446, 8
        %s2448 = scalar_lea.vmem %s4, %s2447
        // Predicated region
        $region41: #{_lambda_.3} parent=35 // pred_check
          %p2449 = pneg %p148
        $region42: #{_lambda_.3} parent=35 // pred_check_branch
          %2451 = sbr.rel (%p2449) target = $region44
        $region43: #{_lambda_.3} parent=35 // pred_region
          _
        $region44: #{_lambda_.3} parent=35 // pred_fallthru
          _
      $region36: #{_lambda_.3} parent=5 // pred_fallthru
        _
      %p2452 = scmp.le.s32.totalorder 2, %s11
      // Predicated region
      $region45: #{_lambda_.3} parent=5 // pred_check
        %p2453 = pneg %p2452
      $region46: #{_lambda_.3} parent=5 // pred_check_branch
        %2455 = sbr.rel (%p2453) target = $region48
      $region47: #{_lambda_.3} parent=5 // pred_region
        %s2456 = ssub.s32 %s11, 2
        // Predicated region
        $region49: #{_lambda_.3} parent=47 // pred_check
          %p2457 = pneg %p154
        $region50: #{_lambda_.3} parent=47 // pred_check_branch
          %2459 = sbr.rel (%p2457) target = $region52
        $region51: #{_lambda_.3} parent=47 // pred_region
          %p2460 = scmp.lt.s32.totalorder %s22, 1
          %s2461 = scalar_select %p2460, %s22, 1
          %p2462 = scmp.lt.s32.totalorder %s23, 0
          %s2463 = scalar_select %p2462, %s23, 0
          %s2464 = smul.addr %s2463, 16
          %s2465 = smul.addr %s2461, 16
          %s2466 = sadd.s32 %s2464, %s2465
          %s2467 = smul.addr %s2466, 8
          %s2468 = scalar_lea.vmem %s4, %s2467
        $region52: #{_lambda_.3} parent=47 // pred_fallthru
          _
      $region48: #{_lambda_.3} parent=5 // pred_fallthru
        _
    $region6: #{_lambda_.3} parent=1 // loop_footer
      %s15 = sadd.s32 1, %s11
    $region7: #{_lambda_.3} parent=1 // loop_footer_branch
      %10 = sbr.rel target = $region3
    $region8: #{_lambda_.3} parent=1 // loop_exit
      _
    %2469 = vsyncpa [#allocation3], 1
    %s2470 = scalar_lea.sflag [#allocation3], 1
    %2471 = vsyncpa %s2470, 1

// kernel: _lambda_.5
$region0: #{_lambda_.5}
  #allocation0 [shape = 'u32[]', space=smem, size = 0x4, offset = 0x4, fixed_abs, tag = 'smem constant byte address 0x4 - core index']
  #allocation1 [shape = 'u32[144,128]{1,0:T(1,128)}', space=vmem, size = 0x12000, scoped, tag = 'internal scratch']
  %s0 = inlined_call_operand.vmem [shape: f32[2,136,128], index: 0, kind: input, shape index: {}, may-alias: {0,1}]
  %s1 = inlined_call_operand.vmem [shape: f32[2,136,128], index: 1, kind: input, shape index: {}, may-alias: {0,1}]
  %s2 = inlined_call_operand.vmem [shape: f32[128,10], index: 2, kind: input, shape index: {}]
  %s3 = inlined_call_operand.vmem [shape: f32[1,4], index: 3, kind: input, shape index: {}]
  %s4 = inlined_call_operand.vmem [shape: f32[2,128,4], index: 4, kind: output, shape index: {}]
  %s5 = sld [smem:[#allocation0]]
  $region49: #{_lambda_.5} parent=0
    _
  %s7 = ssub.s32 1, %s5
  %s8 = scalar_select 0, %s7, %s5
  loop: start=0, step=1, limit=4
  $region2: #{_lambda_.5} parent=0 // loop_pre_header
    _
  $region3: #{_lambda_.5} parent=0 // loop_header
    %s10 = sphi 0, %s14
    %p11 = scmp.ge.s32.totalorder %s10, 4
    %s17 = sphi 0, %s29
    %s18 = sphi 0, %s25
    %s19 = sphi 0, %s17
    %s20 = sphi 0, %s18
    %s21 = sphi 0, %s19
    %s22 = sphi 0, %s20
    %s34 = sphi 0, %s36
    %s37 = sphi 0, %s34
    %s38 = sphi 0, %s37
    %s54 = sphi 0, %s38
    %s66 = sphi 0, %s68
    %s69 = sphi 0, %s66
    %s70 = sphi 0, %s69
    %s86 = sphi 0, %s70
    %s90 = sphi 0, %s90
    %s92 = sphi 0, %s90
    %s93 = sphi 0, %s92
    %s107 = sphi 0, %s93
    %s111 = sphi 0, %s111
    %s113 = sphi 0, %s111
    %s114 = sphi 0, %s113
    %s128 = sphi 0, %s114
    %s136 = sphi 0, %s138
    %s139 = sphi 0, %s136
    %s140 = sphi 0, %s139
    %s156 = sphi 0, %s140
  $region4: #{_lambda_.5} parent=0 // loop_header_branch
    %13 = sbr.rel (%p11) target = $region8
  $region5: #{_lambda_.5} parent=0 // loop_body
    %s15 = ssub.s32 %s10, 1
    %s16 = ssub.s32 %s10, 2
    %s23 = sadd.s32 1, %s18
    %p24 = scmp.ge.s32.totalorder %s23, 1
    %s25 = scalar_select %p24, 0, %s23
    %s26 = sadd.s32 1, %s17
    %s27 = scalar_select %p24, %s26, %s17
    %p28 = scmp.ge.s32.totalorder %s27, 2
    %s29 = scalar_select %p28, 0, %s27
    %s30 = ssub.s32 %s17, %s29
    %s31 = ssub.s32 %s18, %s25
    %s32 = sor.u32 %s30, %s31
    %p33 = scmp.eq.s32.totalorder %s32, 0
    %s35 = sadd.s32 %s34, 1
    %s36 = scalar_select %p33, %s34, %s35
    %p39 = pneg %p33
    %p40 = scmp.eq.s32.totalorder %s10, 1
    %p41 = por %p39, %p40
    %p42 = scmp.ne.s32.totalorder %s34, %s37
    %p43 = scmp.eq.s32.totalorder %s10, 0
    %p44 = por %p42, %p43
    %p45 = scmp.ne.s32.totalorder %s34, %s37
    %p46 = scmp.eq.s32.totalorder %s15, 1
    %p47 = por %p45, %p46
    %p48 = scmp.ne.s32.totalorder %s37, %s38
    %p49 = scmp.eq.s32.totalorder %s15, 0
    %p50 = por %p48, %p49
    %p51 = scmp.ne.s32.totalorder %s37, %s38
    %p52 = scmp.eq.s32.totalorder %s16, 1
    %p53 = por %p51, %p52
    %p55 = scmp.ne.s32.totalorder %s38, %s54
    %p56 = scmp.eq.s32.totalorder %s16, 0
    %p57 = por %p55, %p56
    %s58 = sadd.s32 %s18, 1
    %s59 = smul.u32 %s58, 16
    %s60 = sadd.s32 %s25, 1
    %s61 = smul.u32 %s60, 16
    %s62 = ssub.s32 %s17, %s29
    %s63 = ssub.s32 %s59, %s61
    %s64 = sor.u32 %s62, %s63
    %p65 = scmp.eq.s32.totalorder %s64, 0
    %s67 = sadd.s32 %s66, 1
    %s68 = scalar_select %p65, %s66, %s67
    %p71 = pneg %p65
    %p72 = scmp.eq.s32.totalorder %s10, 1
    %p73 = por %p71, %p72
    %p74 = scmp.ne.s32.totalorder %s66, %s69
    %p75 = scmp.eq.s32.totalorder %s10, 0
    %p76 = por %p74, %p75
    %p77 = scmp.ne.s32.totalorder %s66, %s69
    %p78 = scmp.eq.s32.totalorder %s15, 1
    %p79 = por %p77, %p78
    %p80 = scmp.ne.s32.totalorder %s69, %s70
    %p81 = scmp.eq.s32.totalorder %s15, 0
    %p82 = por %p80, %p81
    %p83 = scmp.ne.s32.totalorder %s69, %s70
    %p84 = scmp.eq.s32.totalorder %s16, 1
    %p85 = por %p83, %p84
    %p87 = scmp.ne.s32.totalorder %s70, %s86
    %p88 = scmp.eq.s32.totalorder %s16, 0
    %p89 = por %p87, %p88
    %s91 = sadd.s32 %s90, 1
    %p94 = scmp.eq.s32.totalorder %s10, 1
    %p95 = scmp.ne.s32.totalorder %s90, %s92
    %p96 = scmp.eq.s32.totalorder %s10, 0
    %p97 = por %p95, %p96
    %p98 = scmp.ne.s32.totalorder %s90, %s92
    %p99 = scmp.eq.s32.totalorder %s15, 1
    %p100 = por %p98, %p99
    %p101 = scmp.ne.s32.totalorder %s92, %s93
    %p102 = scmp.eq.s32.totalorder %s15, 0
    %p103 = por %p101, %p102
    %p104 = scmp.ne.s32.totalorder %s92, %s93
    %p105 = scmp.eq.s32.totalorder %s16, 1
    %p106 = por %p104, %p105
    %p108 = scmp.ne.s32.totalorder %s93, %s107
    %p109 = scmp.eq.s32.totalorder %s16, 0
    %p110 = por %p108, %p109
    %s112 = sadd.s32 %s111, 1
    %p115 = scmp.eq.s32.totalorder %s10, 1
    %p116 = scmp.ne.s32.totalorder %s111, %s113
    %p117 = scmp.eq.s32.totalorder %s10, 0
    %p118 = por %p116, %p117
    %p119 = scmp.ne.s32.totalorder %s111, %s113
    %p120 = scmp.eq.s32.totalorder %s15, 1
    %p121 = por %p119, %p120
    %p122 = scmp.ne.s32.totalorder %s113, %s114
    %p123 = scmp.eq.s32.totalorder %s15, 0
    %p124 = por %p122, %p123
    %p125 = scmp.ne.s32.totalorder %s113, %s114
    %p126 = scmp.eq.s32.totalorder %s16, 1
    %p127 = por %p125, %p126
    %p129 = scmp.ne.s32.totalorder %s114, %s128
    %p130 = scmp.eq.s32.totalorder %s16, 0
    %p131 = por %p129, %p130
    %s132 = ssub.s32 %s17, %s29
    %s133 = ssub.s32 %s18, %s25
    %s134 = sor.u32 %s132, %s133
    %p135 = scmp.eq.s32.totalorder %s134, 0
    %s137 = sadd.s32 %s136, 1
    %s138 = scalar_select %p135, %s136, %s137
    %p141 = pneg %p135
    %p142 = scmp.eq.s32.totalorder %s10, 1
    %p143 = por %p141, %p142
    %p144 = scmp.ne.s32.totalorder %s136, %s139
    %p145 = scmp.eq.s32.totalorder %s10, 0
    %p146 = por %p144, %p145
    %p147 = scmp.ne.s32.totalorder %s136, %s139
    %p148 = scmp.eq.s32.totalorder %s15, 1
    %p149 = por %p147, %p148
    %p150 = scmp.ne.s32.totalorder %s139, %s140
    %p151 = scmp.eq.s32.totalorder %s15, 0
    %p152 = por %p150, %p151
    %p153 = scmp.ne.s32.totalorder %s139, %s140
    %p154 = scmp.eq.s32.totalorder %s16, 1
    %p155 = por %p153, %p154
    %p157 = scmp.ne.s32.totalorder %s140, %s156
    %p158 = scmp.eq.s32.totalorder %s16, 0
    %p159 = por %p157, %p158
    %p160 = scmp.le.s32.totalorder 1, %s10
    %p161 = scmp.lt.s32.totalorder %s10, 3
    %p162 = pnand %p160, %p161
    %p163 = pneg %p162
    // Predicated region
    $region9: #{_lambda_.5} parent=5 // pred_check
      _
    $region10: #{_lambda_.5} parent=5 // pred_check_branch
      %165 = sbr.rel (%p162) target = $region12
    $region11: #{_lambda_.5} parent=5 // pred_region
      %s166 = ssub.s32 %s10, 1
      // Predicated region
      $region13: #{_lambda_.5} parent=11 // pred_check
        %p167 = pneg %p103
      $region14: #{_lambda_.5} parent=11 // pred_check_branch
        %169 = sbr.rel (%p167) target = $region16
      $region15: #{_lambda_.5} parent=11 // pred_region
        _
      $region16: #{_lambda_.5} parent=11 // pred_fallthru
        _
      // Predicated region
      $region17: #{_lambda_.5} parent=11 // pred_check
        %p170 = pneg %p124
      $region18: #{_lambda_.5} parent=11 // pred_check_branch
        %172 = sbr.rel (%p170) target = $region20
      $region19: #{_lambda_.5} parent=11 // pred_region
        _
      $region20: #{_lambda_.5} parent=11 // pred_fallthru
        _
    $region12: #{_lambda_.5} parent=5 // pred_fallthru
      _
    %p173 = scmp.lt.s32.totalorder %s10, 2
    // Predicated region
    $region21: #{_lambda_.5} parent=5 // pred_check
      %p174 = pneg %p173
    $region22: #{_lambda_.5} parent=5 // pred_check_branch
      %176 = sbr.rel (%p174) target = $region24
    $region23: #{_lambda_.5} parent=5 // pred_region
      // Predicated region
      $region25: #{_lambda_.5} parent=23 // pred_check
        %p177 = pneg %p44
      $region26: #{_lambda_.5} parent=23 // pred_check_branch
        %179 = sbr.rel (%p177) target = $region28
      $region27: #{_lambda_.5} parent=23 // pred_region
        %s180 = smul.u32 16, %s18
        %s181 = ssub.s32 17, %s180
        %p182 = scmp.lt.s32.totalorder %s181, 16
        %s183 = scalar_select %p182, %s181, 16
        %s184 = smul.u32 128, %s183
        %p185 = scmp.lt.s32.totalorder %s17, 1
        %s186 = scalar_select %p185, %s17, 1
        %p187 = scmp.lt.s32.totalorder %s180, 16
        %s188 = scalar_select %p187, %s180, 16
        %s189 = smul.addr %s186, 17
        %s190 = sadd.s32 %s188, %s189
        %s191 = smul.addr %s190, 8
        %s192 = scalar_lea.vmem %s0, %s191
        %s193 = smul.u32 16, %s18
        %s194 = ssub.s32 17, %s193
        %p195 = scmp.lt.s32.totalorder %s194, 16
        %s196 = scalar_select %p195, %s194, 16
        %s197 = smul.u32 128, %s196
      $region28: #{_lambda_.5} parent=23 // pred_fallthru
        _
      // Predicated region
      $region29: #{_lambda_.5} parent=23 // pred_check
        %p198 = pneg %p76
      $region30: #{_lambda_.5} parent=23 // pred_check_branch
        %200 = sbr.rel (%p198) target = $region32
      $region31: #{_lambda_.5} parent=23 // pred_region
        %s201 = sadd.s32 %s18, 1
        %s202 = smul.u32 %s201, 16
        %p203 = scmp.lt.s32.totalorder %s17, 1
        %s204 = scalar_select %p203, %s17, 1
        %p205 = scmp.lt.s32.totalorder %s202, 16
        %s206 = scalar_select %p205, %s202, 16
        %s207 = smul.addr %s204, 17
        %s208 = sadd.s32 %s206, %s207
        %s209 = smul.addr %s208, 8
        %s210 = scalar_lea.vmem %s1, %s209
        %s211 = sadd.s32 %s18, 1
        %s212 = smul.u32 %s211, 16
      $region32: #{_lambda_.5} parent=23 // pred_fallthru
        _
    $region24: #{_lambda_.5} parent=5 // pred_fallthru
      _
    %p213 = scmp.le.s32.totalorder 1, %s10
    %p214 = scmp.lt.s32.totalorder %s10, 3
    %p215 = pnand %p213, %p214
    %p216 = pneg %p215
    // Predicated region
    $region33: #{_lambda_.5} parent=5 // pred_check
      _
    $region34: #{_lambda_.5} parent=5 // pred_check_branch
      %218 = sbr.rel (%p215) target = $region36
    $region35: #{_lambda_.5} parent=5 // pred_region
      %s219 = ssub.s32 %s10, 1
      %s220 = smul.u32 16, %s20
      %s221 = ssub.s32 17, %s220
      %p222 = scmp.lt.s32.totalorder %s221, 16
      %s223 = scalar_select %p222, %s221, 16
      %s224 = smul.u32 128, %s223
      %p225 = scmp.lt.s32.totalorder %s19, 1
      %s226 = scalar_select %p225, %s19, 1
      %p227 = scmp.lt.s32.totalorder %s220, 16
      %s228 = scalar_select %p227, %s220, 16
      %s229 = smul.addr %s226, 17
      %s230 = sadd.s32 %s228, %s229
      %s231 = smul.addr %s230, 8
      %s232 = scalar_lea.vmem %s0, %s231
      %p233 = pneg %p50
      %p234 = pneg %p47
      %s235 = sadd.s32 %s20, 1
      %s236 = smul.u32 %s235, 16
      %p237 = scmp.lt.s32.totalorder %s19, 1
      %s238 = scalar_select %p237, %s19, 1
      %p239 = scmp.lt.s32.totalorder %s236, 16
      %s240 = scalar_select %p239, %s236, 16
      %s241 = smul.addr %s238, 17
      %s242 = sadd.s32 %s240, %s241
      %s243 = smul.addr %s242, 8
      %s244 = scalar_lea.vmem %s1, %s243
      %p245 = pneg %p82
      %p246 = pneg %p79
      %p247 = pneg %p103
      %p248 = pneg %p100
      %p249 = pneg %p124
      %p250 = pneg %p121
      %p251 = pneg %p152
      %p252 = pneg %p149
      %s253 = smul.u32 16, %s20
      %p254 = scmp.lt.s32.totalorder %s19, 1
      %s255 = scalar_select %p254, %s19, 1
      %p256 = scmp.lt.s32.totalorder %s253, 15
      %s257 = scalar_select %p256, %s253, 15
      %s258 = smul.addr %s255, 16
      %s259 = sadd.s32 %s257, %s258
      %s260 = smul.addr %s259, 8
      %s261 = scalar_lea.vmem %s4, %s260
      %s262 = smul.u32 16, %s20
      %s263 = ssub.s32 17, %s262
      %p264 = scmp.lt.s32.totalorder %s263, 16
      %s265 = scalar_select %p264, %s263, 16
      %s266 = smul.u32 128, %s265
      %p267 = scmp.lt.s32.totalorder %s19, 1
      %s268 = scalar_select %p267, %s19, 1
      %p269 = scmp.lt.s32.totalorder %s262, 16
      %s270 = scalar_select %p269, %s262, 16
      %s271 = smul.addr %s268, 17
      %s272 = sadd.s32 %s270, %s271
      %s273 = smul.addr %s272, 8
      %s274 = scalar_lea.vmem %s0, %s273
      %s275 = smul.u32 16, %s20
      %s276 = ssub.s32 17, %s275
      %p277 = scmp.lt.s32.totalorder %s276, 16
      %s278 = scalar_select %p277, %s276, 16
      %s279 = smul.u32 128, %s278
      %s280 = sadd.s32 %s20, 1
      %s281 = smul.u32 %s280, 16
      %p282 = scmp.lt.s32.totalorder %s19, 1
      %s283 = scalar_select %p282, %s19, 1
      %p284 = scmp.lt.s32.totalorder %s281, 16
      %s285 = scalar_select %p284, %s281, 16
      %s286 = smul.addr %s283, 17
      %s287 = sadd.s32 %s285, %s286
      %s288 = smul.addr %s287, 8
      %s289 = scalar_lea.vmem %s1, %s288
      %s290 = sadd.s32 %s20, 1
      %s291 = smul.u32 %s290, 16
      %s292 = smul.u32 16, %s20
      %p293 = scmp.lt.s32.totalorder %s19, 1
      %s294 = scalar_select %p293, %s19, 1
      %p295 = scmp.lt.s32.totalorder %s292, 15
      %s296 = scalar_select %p295, %s292, 15
      %s297 = smul.addr %s294, 16
      %s298 = sadd.s32 %s296, %s297
      %s299 = smul.addr %s298, 8
      %s300 = scalar_lea.vmem %s4, %s299
      %s301 = smul.u32 16, %s20
      %v302 = vld [vmem:[%s274] sm:$0xff]
      %v303 = vld [vmem:[%s274 + $0x8] sm:$0xff]
      %v304 = vld [vmem:[%s274 + $0x10] sm:$0xff]
      %v305 = vld [vmem:[%s274 + $0x18] sm:$0xff]
      %v306 = vld [vmem:[%s274 + $0x20] sm:$0xff]
      %v307 = vld [vmem:[%s274 + $0x28] sm:$0xff]
      %v308 = vld [vmem:[%s274 + $0x30] sm:$0xff]
      %v309 = vld [vmem:[%s274 + $0x38] sm:$0xff]
      %v310 = vld [vmem:[%s274 + $0x40] sm:$0xff]
      %v311 = vld [vmem:[%s274 + $0x48] sm:$0xff]
      %v312 = vld [vmem:[%s274 + $0x50] sm:$0xff]
      %v313 = vld [vmem:[%s274 + $0x58] sm:$0xff]
      %v314 = vld [vmem:[%s274 + $0x60] sm:$0xff]
      %v315 = vld [vmem:[%s274 + $0x68] sm:$0xff]
      %v316 = vld [vmem:[%s274 + $0x70] sm:$0xff]
      %v317 = vld [vmem:[%s274 + $0x78] sm:$0xff]
      %v318 = vld [vmem:[%s289] sm:$0xff]
      %v319 = vld [vmem:[%s2] sm:$0xff]
      %v320 = vld [vmem:[%s2 + $0x8] sm:$0xff]
      %v321 = vld [vmem:[%s2 + $0x10] sm:$0xff]
      %v322 = vld [vmem:[%s2 + $0x18] sm:$0xff]
      %v323 = vld [vmem:[%s2 + $0x20] sm:$0xff]
      %v324 = vld [vmem:[%s2 + $0x28] sm:$0xff]
      %v325 = vld [vmem:[%s2 + $0x30] sm:$0xff]
      %v326 = vld [vmem:[%s2 + $0x38] sm:$0xff]
      %v327 = vld [vmem:[%s2 + $0x40] sm:$0xff]
      %v328 = vld [vmem:[%s2 + $0x48] sm:$0xff]
      %v329 = vld [vmem:[%s2 + $0x50] sm:$0xff]
      %v330 = vld [vmem:[%s2 + $0x58] sm:$0xff]
      %v331 = vld [vmem:[%s2 + $0x60] sm:$0xff]
      %v332 = vld [vmem:[%s2 + $0x68] sm:$0xff]
      %v333 = vld [vmem:[%s2 + $0x70] sm:$0xff]
      %v334 = vld [vmem:[%s2 + $0x78] sm:$0xff]
      %335 = vmatprep.subr.mxu0 0.0
      %336 = vmatpush1.msra.mxu0 %v334
      %337 = vmatprep.subr.mxu0 0.0
      %338 = vmatpush1.msra.mxu0 %v333
      %339 = vmatprep.subr.mxu0 0.0
      %340 = vmatpush1.msra.mxu0 %v332
      %341 = vmatprep.subr.mxu0 0.0
      %342 = vmatpush1.msra.mxu0 %v331
      %343 = vmatprep.subr.mxu0 0.0
      %344 = vmatpush1.msra.mxu0 %v330
      %345 = vmatprep.subr.mxu0 0.0
      %346 = vmatpush1.msra.mxu0 %v329
      %347 = vmatprep.subr.mxu0 0.0
      %348 = vmatpush1.msra.mxu0 %v328
      %349 = vmatprep.subr.mxu0 0.0
      %350 = vmatpush1.msra.mxu0 %v327
      %351 = vmatprep.subr.mxu0 0.0
      %352 = vmatpush1.msra.mxu0 %v326
      %353 = vmatprep.subr.mxu0 0.0
      %354 = vmatpush1.msra.mxu0 %v325
      %355 = vmatprep.subr.mxu0 0.0
      %356 = vmatpush1.msra.mxu0 %v324
      %357 = vmatprep.subr.mxu0 0.0
      %358 = vmatpush1.msra.mxu0 %v323
      %359 = vmatprep.subr.mxu0 0.0
      %360 = vmatpush1.msra.mxu0 %v322
      %361 = vmatprep.subr.mxu0 0.0
      %362 = vmatpush1.msra.mxu0 %v321
      %363 = vmatprep.subr.mxu0 0.0
      %364 = vmatpush1.msra.mxu0 %v320
      %365 = vmatprep.subr.mxu0 0.0
      %366 = vmatpush1.msra.mxu0 %v319
      %367 = vmatprep.subr.mxu0 0.0
      %368 = vmatpush2.msra.mxu0 0.0
      %369 = vmatprep.subr.mxu0 0.0
      %370 = vmatpush2.msra.mxu0 0.0
      %371 = vmatprep.subr.mxu0 0.0
      %372 = vmatpush2.msra.mxu0 0.0
      %373 = vmatprep.subr.mxu0 0.0
      %374 = vmatpush2.msra.mxu0 0.0
      %375 = vmatprep.subr.mxu0 0.0
      %376 = vmatpush2.msra.mxu0 0.0
      %377 = vmatprep.subr.mxu0 0.0
      %378 = vmatpush2.msra.mxu0 0.0
      %379 = vmatprep.subr.mxu0 0.0
      %380 = vmatpush2.msra.mxu0 0.0
      %381 = vmatprep.subr.mxu0 0.0
      %382 = vmatpush2.msra.mxu0 0.0
      %383 = vmatprep.subr.mxu0 0.0
      %384 = vmatpush2.msra.mxu0 0.0
      %385 = vmatprep.subr.mxu0 0.0
      %386 = vmatpush2.msra.mxu0 0.0
      %387 = vmatprep.subr.mxu0 0.0
      %388 = vmatpush2.msra.mxu0 0.0
      %389 = vmatprep.subr.mxu0 0.0
      %390 = vmatpush2.msra.mxu0 0.0
      %391 = vmatprep.subr.mxu0 0.0
      %392 = vmatpush2.msra.mxu0 0.0
      %393 = vmatprep.subr.mxu0 0.0
      %394 = vmatpush2.msra.mxu0 0.0
      %395 = vmatprep.subr.mxu0 0.0
      %396 = vmatpush2.msra.mxu0 0.0
      %397 = vmatprep.subr.mxu0 0.0
      %398 = vmatpush2.msra.mxu0 0.0
      %399 = vmatprep.mubr.f32.mxu0 0.0
      %400 = vmatmul.mubr.f32.gmra.mxu0 %v302
      %v401 = vpop.f32.mrf.mxu0
      %v402 = vadd.f32 0.0, %v401
      %v403 = vpop.f32.mrf.mxu0
      %404 = vmatprep.mubr.f32.mxu0 0.0
      %405 = vmatmul.mubr.f32.gmra.mxu0 %v303
      %v406 = vpop.f32.mrf.mxu0
      %v407 = vadd.f32 0.0, %v406
      %v408 = vpop.f32.mrf.mxu0
      %409 = vmatprep.mubr.f32.mxu0 0.0
      %410 = vmatmul.mubr.f32.gmra.mxu0 %v304
      %v411 = vpop.f32.mrf.mxu0
      %v412 = vadd.f32 0.0, %v411
      %v413 = vpop.f32.mrf.mxu0
      %414 = vmatprep.mubr.f32.mxu0 0.0
      %415 = vmatmul.mubr.f32.gmra.mxu0 %v305
      %v416 = vpop.f32.mrf.mxu0
      %v417 = vadd.f32 0.0, %v416
      %v418 = vpop.f32.mrf.mxu0
      %419 = vmatprep.mubr.f32.mxu0 0.0
      %420 = vmatmul.mubr.f32.gmra.mxu0 %v306
      %v421 = vpop.f32.mrf.mxu0
      %v422 = vadd.f32 0.0, %v421
      %v423 = vpop.f32.mrf.mxu0
      %424 = vmatprep.mubr.f32.mxu0 0.0
      %425 = vmatmul.mubr.f32.gmra.mxu0 %v307
      %v426 = vpop.f32.mrf.mxu0
      %v427 = vadd.f32 0.0, %v426
      %v428 = vpop.f32.mrf.mxu0
      %429 = vmatprep.mubr.f32.mxu0 0.0
      %430 = vmatmul.mubr.f32.gmra.mxu0 %v308
      %v431 = vpop.f32.mrf.mxu0
      %v432 = vadd.f32 0.0, %v431
      %v433 = vpop.f32.mrf.mxu0
      %434 = vmatprep.mubr.f32.mxu0 0.0
      %435 = vmatmul.mubr.f32.gmra.mxu0 %v309
      %v436 = vpop.f32.mrf.mxu0
      %v437 = vadd.f32 0.0, %v436
      %v438 = vpop.f32.mrf.mxu0
      %439 = vmatprep.mubr.f32.mxu0 0.0
      %440 = vmatmul.mubr.f32.gmra.mxu0 %v310
      %v441 = vpop.f32.mrf.mxu0
      %v442 = vadd.f32 0.0, %v441
      %v443 = vpop.f32.mrf.mxu0
      %444 = vmatprep.mubr.f32.mxu0 0.0
      %445 = vmatmul.mubr.f32.gmra.mxu0 %v311
      %v446 = vpop.f32.mrf.mxu0
      %v447 = vadd.f32 0.0, %v446
      %v448 = vpop.f32.mrf.mxu0
      %449 = vmatprep.mubr.f32.mxu0 0.0
      %450 = vmatmul.mubr.f32.gmra.mxu0 %v312
      %v451 = vpop.f32.mrf.mxu0
      %v452 = vadd.f32 0.0, %v451
      %v453 = vpop.f32.mrf.mxu0
      %454 = vmatprep.mubr.f32.mxu0 0.0
      %455 = vmatmul.mubr.f32.gmra.mxu0 %v313
      %v456 = vpop.f32.mrf.mxu0
      %v457 = vadd.f32 0.0, %v456
      %v458 = vpop.f32.mrf.mxu0
      %459 = vmatprep.mubr.f32.mxu0 0.0
      %460 = vmatmul.mubr.f32.gmra.mxu0 %v314
      %v461 = vpop.f32.mrf.mxu0
      %v462 = vadd.f32 0.0, %v461
      %v463 = vpop.f32.mrf.mxu0
      %464 = vmatprep.mubr.f32.mxu0 0.0
      %465 = vmatmul.mubr.f32.gmra.mxu0 %v315
      %v466 = vpop.f32.mrf.mxu0
      %v467 = vadd.f32 0.0, %v466
      %v468 = vpop.f32.mrf.mxu0
      %469 = vmatprep.mubr.f32.mxu0 0.0
      %470 = vmatmul.mubr.f32.gmra.mxu0 %v316
      %v471 = vpop.f32.mrf.mxu0
      %v472 = vadd.f32 0.0, %v471
      %v473 = vpop.f32.mrf.mxu0
      %474 = vmatprep.mubr.f32.mxu0 0.0
      %475 = vmatmul.mubr.f32.gmra.mxu0 %v317
      %v476 = vpop.f32.mrf.mxu0
      %v477 = vadd.f32 0.0, %v476
      %v478 = vpop.f32.mrf.mxu0
      %479 = vmatprep.mubr.f32.mxu0 0.0
      %480 = vmatmul.mubr.f32.gmra.mxu0 %v318
      %v481 = vpop.f32.mrf.mxu0
      %v482 = vadd.f32 0.0, %v481
      %v483 = vpop.f32.mrf.mxu0
      %484 = vdwg.mxu0
      %v485 = vadd.f32 %v402, 0.0
      %v486 = vadd.f32 %v407, 0.0
      %v487 = vadd.f32 %v412, 0.0
      %v488 = vadd.f32 %v417, 0.0
      %v489 = vadd.f32 %v422, 0.0
      %v490 = vadd.f32 %v427, 0.0
      %v491 = vadd.f32 %v432, 0.0
      %v492 = vadd.f32 %v437, 0.0
      %v493 = vadd.f32 %v442, 0.0
      %v494 = vadd.f32 %v447, 0.0
      %v495 = vadd.f32 %v452, 0.0
      %v496 = vadd.f32 %v457, 0.0
      %v497 = vadd.f32 %v462, 0.0
      %v498 = vadd.f32 %v467, 0.0
      %v499 = vadd.f32 %v472, 0.0
      %v500 = vadd.f32 %v477, 0.0
      %v501 = vadd.f32 %v482, 0.0
      %vm519 = vcmask 1042432
      %v520 = vrot.slane %v402, 5
      %v521 = vrot.slane %v407, 5
      %v522 = vsel %vm519, %v520, %v521
      %v523 = vrot.slane %v412, 5
      %v524 = vsel %vm519, %v521, %v523
      %v525 = vrot.slane %v417, 5
      %v526 = vsel %vm519, %v523, %v525
      %v527 = vrot.slane %v422, 5
      %v528 = vsel %vm519, %v525, %v527
      %v529 = vrot.slane %v427, 5
      %v530 = vsel %vm519, %v527, %v529
      %v531 = vrot.slane %v432, 5
      %v532 = vsel %vm519, %v529, %v531
      %v533 = vrot.slane %v437, 5
      %v534 = vsel %vm519, %v531, %v533
      %v535 = vrot.slane %v442, 5
      %v536 = vsel %vm519, %v533, %v535
      %v537 = vrot.slane %v447, 5
      %v538 = vsel %vm519, %v535, %v537
      %v539 = vrot.slane %v452, 5
      %v540 = vsel %vm519, %v537, %v539
      %v541 = vrot.slane %v457, 5
      %v542 = vsel %vm519, %v539, %v541
      %v543 = vrot.slane %v462, 5
      %v544 = vsel %vm519, %v541, %v543
      %v545 = vrot.slane %v467, 5
      %v546 = vsel %vm519, %v543, %v545
      %v547 = vrot.slane %v472, 5
      %v548 = vsel %vm519, %v545, %v547
      %v549 = vrot.slane %v477, 5
      %v550 = vsel %vm519, %v547, %v549
      %v551 = vrot.slane %v482, 5
      %v552 = vsel %vm519, %v549, %v551
      %553 = vrot.lane.b32.xlu0 %v520, 124
      %v554 = vpop.permute.xlu0 %553
      %555 = vrot.lane.b32.xlu0 %v522, 124
      %v556 = vpop.permute.xlu0 %555
      %557 = vrot.lane.b32.xlu0 %v524, 124
      %v558 = vpop.permute.xlu0 %557
      %559 = vrot.lane.b32.xlu0 %v526, 124
      %v560 = vpop.permute.xlu0 %559
      %561 = vrot.lane.b32.xlu0 %v528, 124
      %v562 = vpop.permute.xlu0 %561
      %563 = vrot.lane.b32.xlu0 %v530, 124
      %v564 = vpop.permute.xlu0 %563
      %565 = vrot.lane.b32.xlu0 %v532, 124
      %v566 = vpop.permute.xlu0 %565
      %567 = vrot.lane.b32.xlu0 %v534, 124
      %v568 = vpop.permute.xlu0 %567
      %569 = vrot.lane.b32.xlu0 %v536, 124
      %v570 = vpop.permute.xlu0 %569
      %571 = vrot.lane.b32.xlu0 %v538, 124
      %v572 = vpop.permute.xlu0 %571
      %573 = vrot.lane.b32.xlu0 %v540, 124
      %v574 = vpop.permute.xlu0 %573
      %575 = vrot.lane.b32.xlu0 %v542, 124
      %v576 = vpop.permute.xlu0 %575
      %577 = vrot.lane.b32.xlu0 %v544, 124
      %v578 = vpop.permute.xlu0 %577
      %579 = vrot.lane.b32.xlu0 %v546, 124
      %v580 = vpop.permute.xlu0 %579
      %581 = vrot.lane.b32.xlu0 %v548, 124
      %v582 = vpop.permute.xlu0 %581
      %583 = vrot.lane.b32.xlu0 %v550, 124
      %v584 = vpop.permute.xlu0 %583
      %585 = vrot.lane.b32.xlu0 %v552, 124
      %v586 = vpop.permute.xlu0 %585
      %v604 = vadd.f32 %v485, %v554
      %v605 = vadd.f32 %v486, %v556
      %v606 = vadd.f32 %v487, %v558
      %v607 = vadd.f32 %v488, %v560
      %v608 = vadd.f32 %v489, %v562
      %v609 = vadd.f32 %v490, %v564
      %v610 = vadd.f32 %v491, %v566
      %v611 = vadd.f32 %v492, %v568
      %v612 = vadd.f32 %v493, %v570
      %v613 = vadd.f32 %v494, %v572
      %v614 = vadd.f32 %v495, %v574
      %v615 = vadd.f32 %v496, %v576
      %v616 = vadd.f32 %v497, %v578
      %v617 = vadd.f32 %v498, %v580
      %v618 = vadd.f32 %v499, %v582
      %v619 = vadd.f32 %v500, %v584
      %v620 = vadd.f32 %v501, %v586
      %vm621 = vcmask 1045504
      %v622 = vrot.slane %v402, 2
      %v623 = vrot.slane %v407, 2
      %v624 = vsel %vm621, %v622, %v623
      %v625 = vrot.slane %v412, 2
      %v626 = vsel %vm621, %v623, %v625
      %v627 = vrot.slane %v417, 2
      %v628 = vsel %vm621, %v625, %v627
      %v629 = vrot.slane %v422, 2
      %v630 = vsel %vm621, %v627, %v629
      %v631 = vrot.slane %v427, 2
      %v632 = vsel %vm621, %v629, %v631
      %v633 = vrot.slane %v432, 2
      %v634 = vsel %vm621, %v631, %v633
      %v635 = vrot.slane %v437, 2
      %v636 = vsel %vm621, %v633, %v635
      %v637 = vrot.slane %v442, 2
      %v638 = vsel %vm621, %v635, %v637
      %v639 = vrot.slane %v447, 2
      %v640 = vsel %vm621, %v637, %v639
      %v641 = vrot.slane %v452, 2
      %v642 = vsel %vm621, %v639, %v641
      %v643 = vrot.slane %v457, 2
      %v644 = vsel %vm621, %v641, %v643
      %v645 = vrot.slane %v462, 2
      %v646 = vsel %vm621, %v643, %v645
      %v647 = vrot.slane %v467, 2
      %v648 = vsel %vm621, %v645, %v647
      %v649 = vrot.slane %v472, 2
      %v650 = vsel %vm621, %v647, %v649
      %v651 = vrot.slane %v477, 2
      %v652 = vsel %vm621, %v649, %v651
      %653 = vrot.lane.b32.xlu0 %v622, 120
      %v654 = vpop.permute.xlu0 %653
      %655 = vrot.lane.b32.xlu0 %v624, 120
      %v656 = vpop.permute.xlu0 %655
      %657 = vrot.lane.b32.xlu0 %v626, 120
      %v658 = vpop.permute.xlu0 %657
      %659 = vrot.lane.b32.xlu0 %v628, 120
      %v660 = vpop.permute.xlu0 %659
      %661 = vrot.lane.b32.xlu0 %v630, 120
      %v662 = vpop.permute.xlu0 %661
      %663 = vrot.lane.b32.xlu0 %v632, 120
      %v664 = vpop.permute.xlu0 %663
      %665 = vrot.lane.b32.xlu0 %v634, 120
      %v666 = vpop.permute.xlu0 %665
      %667 = vrot.lane.b32.xlu0 %v636, 120
      %v668 = vpop.permute.xlu0 %667
      %669 = vrot.lane.b32.xlu0 %v638, 120
      %v670 = vpop.permute.xlu0 %669
      %671 = vrot.lane.b32.xlu0 %v640, 120
      %v672 = vpop.permute.xlu0 %671
      %673 = vrot.lane.b32.xlu0 %v642, 120
      %v674 = vpop.permute.xlu0 %673
      %675 = vrot.lane.b32.xlu0 %v644, 120
      %v676 = vpop.permute.xlu0 %675
      %677 = vrot.lane.b32.xlu0 %v646, 120
      %v678 = vpop.permute.xlu0 %677
      %679 = vrot.lane.b32.xlu0 %v648, 120
      %v680 = vpop.permute.xlu0 %679
      %681 = vrot.lane.b32.xlu0 %v650, 120
      %v682 = vpop.permute.xlu0 %681
      %683 = vrot.lane.b32.xlu0 %v652, 120
      %v684 = vpop.permute.xlu0 %683
      %685 = vrot.lane.b32.xlu0 %v651, 120
      %v686 = vpop.permute.xlu0 %685
      %v704 = vadd.f32 %v604, %v654
      %v705 = vadd.f32 %v605, %v656
      %v706 = vadd.f32 %v606, %v658
      %v707 = vadd.f32 %v607, %v660
      %v708 = vadd.f32 %v608, %v662
      %v709 = vadd.f32 %v609, %v664
      %v710 = vadd.f32 %v610, %v666
      %v711 = vadd.f32 %v611, %v668
      %v712 = vadd.f32 %v612, %v670
      %v713 = vadd.f32 %v613, %v672
      %v714 = vadd.f32 %v614, %v674
      %v715 = vadd.f32 %v615, %v676
      %v716 = vadd.f32 %v616, %v678
      %v717 = vadd.f32 %v617, %v680
      %v718 = vadd.f32 %v618, %v682
      %v719 = vadd.f32 %v619, %v684
      %v720 = vadd.f32 %v620, %v686
      %vm738 = vcmask 1041408
      %v739 = vrot.slane %v604, 6
      %v740 = vrot.slane %v605, 6
      %v741 = vsel %vm738, %v739, %v740
      %v742 = vrot.slane %v606, 6
      %v743 = vsel %vm738, %v740, %v742
      %v744 = vrot.slane %v607, 6
      %v745 = vsel %vm738, %v742, %v744
      %v746 = vrot.slane %v608, 6
      %v747 = vsel %vm738, %v744, %v746
      %v748 = vrot.slane %v609, 6
      %v749 = vsel %vm738, %v746, %v748
      %v750 = vrot.slane %v610, 6
      %v751 = vsel %vm738, %v748, %v750
      %v752 = vrot.slane %v611, 6
      %v753 = vsel %vm738, %v750, %v752
      %v754 = vrot.slane %v612, 6
      %v755 = vsel %vm738, %v752, %v754
      %v756 = vrot.slane %v613, 6
      %v757 = vsel %vm738, %v754, %v756
      %v758 = vrot.slane %v614, 6
      %v759 = vsel %vm738, %v756, %v758
      %v760 = vrot.slane %v615, 6
      %v761 = vsel %vm738, %v758, %v760
      %v762 = vrot.slane %v616, 6
      %v763 = vsel %vm738, %v760, %v762
      %v764 = vrot.slane %v617, 6
      %v765 = vsel %vm738, %v762, %v764
      %v766 = vrot.slane %v618, 6
      %v767 = vsel %vm738, %v764, %v766
      %v768 = vrot.slane %v619, 6
      %v769 = vsel %vm738, %v766, %v768
      %v770 = vrot.slane %v620, 6
      %v771 = vsel %vm738, %v768, %v770
      %772 = vrot.lane.b32.xlu0 %v739, 126
      %v773 = vpop.permute.xlu0 %772
      %774 = vrot.lane.b32.xlu0 %v741, 126
      %v775 = vpop.permute.xlu0 %774
      %776 = vrot.lane.b32.xlu0 %v743, 126
      %v777 = vpop.permute.xlu0 %776
      %778 = vrot.lane.b32.xlu0 %v745, 126
      %v779 = vpop.permute.xlu0 %778
      %780 = vrot.lane.b32.xlu0 %v747, 126
      %v781 = vpop.permute.xlu0 %780
      %782 = vrot.lane.b32.xlu0 %v749, 126
      %v783 = vpop.permute.xlu0 %782
      %784 = vrot.lane.b32.xlu0 %v751, 126
      %v785 = vpop.permute.xlu0 %784
      %786 = vrot.lane.b32.xlu0 %v753, 126
      %v787 = vpop.permute.xlu0 %786
      %788 = vrot.lane.b32.xlu0 %v755, 126
      %v789 = vpop.permute.xlu0 %788
      %790 = vrot.lane.b32.xlu0 %v757, 126
      %v791 = vpop.permute.xlu0 %790
      %792 = vrot.lane.b32.xlu0 %v759, 126
      %v793 = vpop.permute.xlu0 %792
      %794 = vrot.lane.b32.xlu0 %v761, 126
      %v795 = vpop.permute.xlu0 %794
      %796 = vrot.lane.b32.xlu0 %v763, 126
      %v797 = vpop.permute.xlu0 %796
      %798 = vrot.lane.b32.xlu0 %v765, 126
      %v799 = vpop.permute.xlu0 %798
      %800 = vrot.lane.b32.xlu0 %v767, 126
      %v801 = vpop.permute.xlu0 %800
      %802 = vrot.lane.b32.xlu0 %v769, 126
      %v803 = vpop.permute.xlu0 %802
      %804 = vrot.lane.b32.xlu0 %v771, 126
      %v805 = vpop.permute.xlu0 %804
      %vm823 = vcmask 1040384
      %v824 = vrot.slane %v604, 7
      %v825 = vrot.slane %v605, 7
      %v826 = vsel %vm823, %v824, %v825
      %v827 = vrot.slane %v606, 7
      %v828 = vsel %vm823, %v825, %v827
      %v829 = vrot.slane %v607, 7
      %v830 = vsel %vm823, %v827, %v829
      %v831 = vrot.slane %v608, 7
      %v832 = vsel %vm823, %v829, %v831
      %v833 = vrot.slane %v609, 7
      %v834 = vsel %vm823, %v831, %v833
      %v835 = vrot.slane %v610, 7
      %v836 = vsel %vm823, %v833, %v835
      %v837 = vrot.slane %v611, 7
      %v838 = vsel %vm823, %v835, %v837
      %v839 = vrot.slane %v612, 7
      %v840 = vsel %vm823, %v837, %v839
      %v841 = vrot.slane %v613, 7
      %v842 = vsel %vm823, %v839, %v841
      %v843 = vrot.slane %v614, 7
      %v844 = vsel %vm823, %v841, %v843
      %v845 = vrot.slane %v615, 7
      %v846 = vsel %vm823, %v843, %v845
      %v847 = vrot.slane %v616, 7
      %v848 = vsel %vm823, %v845, %v847
      %v849 = vrot.slane %v617, 7
      %v850 = vsel %vm823, %v847, %v849
      %v851 = vrot.slane %v618, 7
      %v852 = vsel %vm823, %v849, %v851
      %v853 = vrot.slane %v619, 7
      %v854 = vsel %vm823, %v851, %v853
      %v855 = vrot.slane %v620, 7
      %v856 = vsel %vm823, %v853, %v855
      %891 = vrot.lane.b32.xlu0 %v704, 2
      %v892 = vpop.permute.xlu0 %891
      %893 = vrot.lane.b32.xlu0 %v705, 2
      %v894 = vpop.permute.xlu0 %893
      %895 = vrot.lane.b32.xlu0 %v706, 2
      %v896 = vpop.permute.xlu0 %895
      %897 = vrot.lane.b32.xlu0 %v707, 2
      %v898 = vpop.permute.xlu0 %897
      %899 = vrot.lane.b32.xlu0 %v708, 2
      %v900 = vpop.permute.xlu0 %899
      %901 = vrot.lane.b32.xlu0 %v709, 2
      %v902 = vpop.permute.xlu0 %901
      %903 = vrot.lane.b32.xlu0 %v710, 2
      %v904 = vpop.permute.xlu0 %903
      %905 = vrot.lane.b32.xlu0 %v711, 2
      %v906 = vpop.permute.xlu0 %905
      %907 = vrot.lane.b32.xlu0 %v712, 2
      %v908 = vpop.permute.xlu0 %907
      %909 = vrot.lane.b32.xlu0 %v713, 2
      %v910 = vpop.permute.xlu0 %909
      %911 = vrot.lane.b32.xlu0 %v714, 2
      %v912 = vpop.permute.xlu0 %911
      %913 = vrot.lane.b32.xlu0 %v715, 2
      %v914 = vpop.permute.xlu0 %913
      %915 = vrot.lane.b32.xlu0 %v716, 2
      %v916 = vpop.permute.xlu0 %915
      %917 = vrot.lane.b32.xlu0 %v717, 2
      %v918 = vpop.permute.xlu0 %917
      %919 = vrot.lane.b32.xlu0 %v718, 2
      %v920 = vpop.permute.xlu0 %919
      %921 = vrot.lane.b32.xlu0 %v719, 2
      %v922 = vpop.permute.xlu0 %921
      %923 = vrot.lane.b32.xlu0 %v720, 2
      %v924 = vpop.permute.xlu0 %923
      %vm942 = vcmask 7168
      %v943 = vsel %vm942, %v704, %v773
      %v944 = vsel %vm942, %v705, %v775
      %v945 = vsel %vm942, %v706, %v777
      %v946 = vsel %vm942, %v707, %v779
      %v947 = vsel %vm942, %v708, %v781
      %v948 = vsel %vm942, %v709, %v783
      %v949 = vsel %vm942, %v710, %v785
      %v950 = vsel %vm942, %v711, %v787
      %v951 = vsel %vm942, %v712, %v789
      %v952 = vsel %vm942, %v713, %v791
      %v953 = vsel %vm942, %v714, %v793
      %v954 = vsel %vm942, %v715, %v795
      %v955 = vsel %vm942, %v716, %v797
      %v956 = vsel %vm942, %v717, %v799
      %v957 = vsel %vm942, %v718, %v801
      %v958 = vsel %vm942, %v719, %v803
      %v959 = vsel %vm942, %v720, %v805
      %vm960 = vcmask 15360
      %v961 = vsel %vm960, %v943, %v824
      %v962 = vsel %vm960, %v944, %v826
      %v963 = vsel %vm960, %v945, %v828
      %v964 = vsel %vm960, %v946, %v830
      %v965 = vsel %vm960, %v947, %v832
      %v966 = vsel %vm960, %v948, %v834
      %v967 = vsel %vm960, %v949, %v836
      %v968 = vsel %vm960, %v950, %v838
      %v969 = vsel %vm960, %v951, %v840
      %v970 = vsel %vm960, %v952, %v842
      %v971 = vsel %vm960, %v953, %v844
      %v972 = vsel %vm960, %v954, %v846
      %v973 = vsel %vm960, %v955, %v848
      %v974 = vsel %vm960, %v956, %v850
      %v975 = vsel %vm960, %v957, %v852
      %v976 = vsel %vm960, %v958, %v854
      %v977 = vsel %vm960, %v959, %v856
      %vm978 = vcmask 23552
      %v979 = vsel %vm978, %v961, %v892
      %v980 = vsel %vm978, %v962, %v894
      %v981 = vsel %vm978, %v963, %v896
      %v982 = vsel %vm978, %v964, %v898
      %v983 = vsel %vm978, %v965, %v900
      %v984 = vsel %vm978, %v966, %v902
      %v985 = vsel %vm978, %v967, %v904
      %v986 = vsel %vm978, %v968, %v906
      %v987 = vsel %vm978, %v969, %v908
      %v988 = vsel %vm978, %v970, %v910
      %v989 = vsel %vm978, %v971, %v912
      %v990 = vsel %vm978, %v972, %v914
      %v991 = vsel %vm978, %v973, %v916
      %v992 = vsel %vm978, %v974, %v918
      %v993 = vsel %vm978, %v975, %v920
      %v994 = vsel %vm978, %v976, %v922
      %v995 = vsel %vm978, %v977, %v924
      %v996 = vld [vmem:[%s3] sm:$0x1]
      %v998 = vlaneseq
      %v999 = vshrl.u32 %v998, 7
      %v1000 = vsub.s32 0, %v999
      %v1001 = vrot.slane %v996, %v1000
      %v1003 = vadd.f32 %v979, %v1001
      %v1004 = vadd.f32 %v980, %v1001
      %v1005 = vadd.f32 %v981, %v1001
      %v1006 = vadd.f32 %v982, %v1001
      %v1007 = vadd.f32 %v983, %v1001
      %v1008 = vadd.f32 %v984, %v1001
      %v1009 = vadd.f32 %v985, %v1001
      %v1010 = vadd.f32 %v986, %v1001
      %v1011 = vadd.f32 %v987, %v1001
      %v1012 = vadd.f32 %v988, %v1001
      %v1013 = vadd.f32 %v989, %v1001
      %v1014 = vadd.f32 %v990, %v1001
      %v1015 = vadd.f32 %v991, %v1001
      %v1016 = vadd.f32 %v992, %v1001
      %v1017 = vadd.f32 %v993, %v1001
      %v1018 = vadd.f32 %v994, %v1001
      %v1019 = vadd.f32 %v995, %v1001
      %vm1020 = vcmask 31750
      %1021 = vst.msk [vmem:[%s300 - $0x6] sm:$0xc0] %vm1020, %v1003
      %vm1022 = vcmask 31744
      %1023 = vst.msk [vmem:[%s300 + $0x2] sm:$0xff] %vm1022, %v1004
      %1024 = vst.msk [vmem:[%s300 + $0xa] sm:$0xff] %vm1022, %v1005
      %1025 = vst.msk [vmem:[%s300 + $0x12] sm:$0xff] %vm1022, %v1006
      %1026 = vst.msk [vmem:[%s300 + $0x1a] sm:$0xff] %vm1022, %v1007
      %1027 = vst.msk [vmem:[%s300 + $0x22] sm:$0xff] %vm1022, %v1008
      %1028 = vst.msk [vmem:[%s300 + $0x2a] sm:$0xff] %vm1022, %v1009
      %1029 = vst.msk [vmem:[%s300 + $0x32] sm:$0xff] %vm1022, %v1010
      %1030 = vst.msk [vmem:[%s300 + $0x3a] sm:$0xff] %vm1022, %v1011
      %1031 = vst.msk [vmem:[%s300 + $0x42] sm:$0xff] %vm1022, %v1012
      %1032 = vst.msk [vmem:[%s300 + $0x4a] sm:$0xff] %vm1022, %v1013
      %1033 = vst.msk [vmem:[%s300 + $0x52] sm:$0xff] %vm1022, %v1014
      %1034 = vst.msk [vmem:[%s300 + $0x5a] sm:$0xff] %vm1022, %v1015
      %1035 = vst.msk [vmem:[%s300 + $0x62] sm:$0xff] %vm1022, %v1016
      %1036 = vst.msk [vmem:[%s300 + $0x6a] sm:$0xff] %vm1022, %v1017
      %1037 = vst.msk [vmem:[%s300 + $0x72] sm:$0xff] %vm1022, %v1018
      %vm1038 = vcmask 29696
      %1039 = vst.msk [vmem:[%s300 + $0x7a] sm:$0x3f] %vm1038, %v1019
      %s1040 = smul.u32 16, %s20
      %p1041 = scmp.lt.s32.totalorder %s19, 1
      %s1042 = scalar_select %p1041, %s19, 1
      %p1043 = scmp.lt.s32.totalorder %s1040, 15
      %s1044 = scalar_select %p1043, %s1040, 15
      %s1045 = smul.addr %s1042, 16
      %s1046 = sadd.s32 %s1044, %s1045
      %s1047 = smul.addr %s1046, 8
      %s1048 = scalar_lea.vmem %s4, %s1047
      // Predicated region
      $region37: #{_lambda_.5} parent=35 // pred_check
        %p1049 = pneg %p149
      $region38: #{_lambda_.5} parent=35 // pred_check_branch
        %1051 = sbr.rel (%p1049) target = $region40
      $region39: #{_lambda_.5} parent=35 // pred_region
        %s1052 = smul.u32 16, %s20
      $region40: #{_lambda_.5} parent=35 // pred_fallthru
        _
    $region36: #{_lambda_.5} parent=5 // pred_fallthru
      _
    %p1053 = scmp.le.s32.totalorder 2, %s10
    // Predicated region
    $region41: #{_lambda_.5} parent=5 // pred_check
      %p1054 = pneg %p1053
    $region42: #{_lambda_.5} parent=5 // pred_check_branch
      %1056 = sbr.rel (%p1054) target = $region44
    $region43: #{_lambda_.5} parent=5 // pred_region
      %s1057 = ssub.s32 %s10, 2
      // Predicated region
      $region45: #{_lambda_.5} parent=43 // pred_check
        %p1058 = pneg %p155
      $region46: #{_lambda_.5} parent=43 // pred_check_branch
        %1060 = sbr.rel (%p1058) target = $region48
      $region47: #{_lambda_.5} parent=43 // pred_region
        %s1061 = smul.u32 16, %s22
        %p1062 = scmp.lt.s32.totalorder %s21, 1
        %s1063 = scalar_select %p1062, %s21, 1
        %p1064 = scmp.lt.s32.totalorder %s1061, 15
        %s1065 = scalar_select %p1064, %s1061, 15
        %s1066 = smul.addr %s1063, 16
        %s1067 = sadd.s32 %s1065, %s1066
        %s1068 = smul.addr %s1067, 8
        %s1069 = scalar_lea.vmem %s4, %s1068
      $region48: #{_lambda_.5} parent=43 // pred_fallthru
        _
    $region44: #{_lambda_.5} parent=5 // pred_fallthru
      _
  $region6: #{_lambda_.5} parent=0 // loop_footer
    %s14 = sadd.s32 1, %s10
  $region7: #{_lambda_.5} parent=0 // loop_footer_branch
    %9 = sbr.rel target = $region3
  $region8: #{_lambda_.5} parent=0 // loop_exit
    _

// kernel: _lambda_.4
$region0: #{_lambda_.4}
  #allocation0 [shape = 'u32[]', space=smem, size = 0x4, offset = 0x4, fixed_abs, tag = 'smem constant byte address 0x4 - core index']
  #allocation1 [shape = 'u32[144,128]{1,0:T(1,128)}', space=vmem, size = 0x12000, scoped, tag = 'internal scratch']
  %s0 = inlined_call_operand.vmem [shape: f32[2,40,512], index: 0, kind: input, shape index: {}, may-alias: {0,1}]
  %s1 = inlined_call_operand.vmem [shape: f32[2,40,512], index: 1, kind: input, shape index: {}, may-alias: {0,1}]
  %s2 = inlined_call_operand.hbm [shape: f32[512,1280], index: 2, kind: input, shape index: {}]
  %s3 = inlined_call_operand.vmem [shape: f32[1,512], index: 3, kind: input, shape index: {}]
  %s4 = inlined_call_operand.vmem [shape: f32[2,32,512], index: 4, kind: output, shape index: {}]
  %s5 = sld [smem:[#allocation0]]
  $region53: #{_lambda_.4} parent=0
    _
  %s7 = ssub.s32 1, %s5
  %s8 = scalar_select 0, %s7, %s5
  $region1: #{_lambda_.4} parent=0
    #allocation2 [shape = 'u8[2621440]{0}', space=vmem, size = 0x280000, scoped, tag = 'input window, operand 2, single buffered']
    #allocation3 [shape = 's32[2]{0}', space=sflag, size = 0x8, scoped, tag = 'scoped memory for _lambda_.4']
    %9 = vsyncpa [#allocation3], 0
    loop: start=0, step=1, limit=4
    $region2: #{_lambda_.4} parent=1 // loop_pre_header
      _
    $region3: #{_lambda_.4} parent=1 // loop_header
      %s11 = sphi 0, %s15
      %p12 = scmp.ge.s32.totalorder %s11, 4
      %s18 = sphi 0, %s30
      %s19 = sphi 0, %s26
      %s20 = sphi 0, %s18
      %s21 = sphi 0, %s19
      %s22 = sphi 0, %s20
      %s23 = sphi 0, %s21
      %s35 = sphi 0, %s37
      %s38 = sphi 0, %s35
      %s39 = sphi 0, %s38
      %s55 = sphi 0, %s39
      %s67 = sphi 0, %s69
      %s70 = sphi 0, %s67
      %s71 = sphi 0, %s70
      %s87 = sphi 0, %s71
      %s91 = sphi 0, %s91
      %s93 = sphi 0, %s91
      %s94 = sphi 0, %s93
      %s108 = sphi 0, %s94
      %s112 = sphi 0, %s112
      %s114 = sphi 0, %s112
      %s115 = sphi 0, %s114
      %s129 = sphi 0, %s115
      %s137 = sphi 0, %s139
      %s140 = sphi 0, %s137
      %s141 = sphi 0, %s140
      %s157 = sphi 0, %s141
    $region4: #{_lambda_.4} parent=1 // loop_header_branch
      %14 = sbr.rel (%p12) target = $region8
    $region5: #{_lambda_.4} parent=1 // loop_body
      %s16 = ssub.s32 %s11, 1
      %s17 = ssub.s32 %s11, 2
      %s24 = sadd.s32 1, %s19
      %p25 = scmp.ge.s32.totalorder %s24, 1
      %s26 = scalar_select %p25, 0, %s24
      %s27 = sadd.s32 1, %s18
      %s28 = scalar_select %p25, %s27, %s18
      %p29 = scmp.ge.s32.totalorder %s28, 2
      %s30 = scalar_select %p29, 0, %s28
      %s31 = ssub.s32 %s18, %s30
      %s32 = ssub.s32 %s19, %s26
      %s33 = sor.u32 %s31, %s32
      %p34 = scmp.eq.s32.totalorder %s33, 0
      %s36 = sadd.s32 %s35, 1
      %s37 = scalar_select %p34, %s35, %s36
      %p40 = pneg %p34
      %p41 = scmp.eq.s32.totalorder %s11, 1
      %p42 = por %p40, %p41
      %p43 = scmp.ne.s32.totalorder %s35, %s38
      %p44 = scmp.eq.s32.totalorder %s11, 0
      %p45 = por %p43, %p44
      %p46 = scmp.ne.s32.totalorder %s35, %s38
      %p47 = scmp.eq.s32.totalorder %s16, 1
      %p48 = por %p46, %p47
      %p49 = scmp.ne.s32.totalorder %s38, %s39
      %p50 = scmp.eq.s32.totalorder %s16, 0
      %p51 = por %p49, %p50
      %p52 = scmp.ne.s32.totalorder %s38, %s39
      %p53 = scmp.eq.s32.totalorder %s17, 1
      %p54 = por %p52, %p53
      %p56 = scmp.ne.s32.totalorder %s39, %s55
      %p57 = scmp.eq.s32.totalorder %s17, 0
      %p58 = por %p56, %p57
      %s59 = sadd.s32 %s19, 1
      %s60 = smul.u32 %s59, 4
      %s61 = sadd.s32 %s26, 1
      %s62 = smul.u32 %s61, 4
      %s63 = ssub.s32 %s18, %s30
      %s64 = ssub.s32 %s60, %s62
      %s65 = sor.u32 %s63, %s64
      %p66 = scmp.eq.s32.totalorder %s65, 0
      %s68 = sadd.s32 %s67, 1
      %s69 = scalar_select %p66, %s67, %s68
      %p72 = pneg %p66
      %p73 = scmp.eq.s32.totalorder %s11, 1
      %p74 = por %p72, %p73
      %p75 = scmp.ne.s32.totalorder %s67, %s70
      %p76 = scmp.eq.s32.totalorder %s11, 0
      %p77 = por %p75, %p76
      %p78 = scmp.ne.s32.totalorder %s67, %s70
      %p79 = scmp.eq.s32.totalorder %s16, 1
      %p80 = por %p78, %p79
      %p81 = scmp.ne.s32.totalorder %s70, %s71
      %p82 = scmp.eq.s32.totalorder %s16, 0
      %p83 = por %p81, %p82
      %p84 = scmp.ne.s32.totalorder %s70, %s71
      %p85 = scmp.eq.s32.totalorder %s17, 1
      %p86 = por %p84, %p85
      %p88 = scmp.ne.s32.totalorder %s71, %s87
      %p89 = scmp.eq.s32.totalorder %s17, 0
      %p90 = por %p88, %p89
      %s92 = sadd.s32 %s91, 1
      %p95 = scmp.eq.s32.totalorder %s11, 1
      %p96 = scmp.ne.s32.totalorder %s91, %s93
      %p97 = scmp.eq.s32.totalorder %s11, 0
      %p98 = por %p96, %p97
      %p99 = scmp.ne.s32.totalorder %s91, %s93
      %p100 = scmp.eq.s32.totalorder %s16, 1
      %p101 = por %p99, %p100
      %p102 = scmp.ne.s32.totalorder %s93, %s94
      %p103 = scmp.eq.s32.totalorder %s16, 0
      %p104 = por %p102, %p103
      %p105 = scmp.ne.s32.totalorder %s93, %s94
      %p106 = scmp.eq.s32.totalorder %s17, 1
      %p107 = por %p105, %p106
      %p109 = scmp.ne.s32.totalorder %s94, %s108
      %p110 = scmp.eq.s32.totalorder %s17, 0
      %p111 = por %p109, %p110
      %s113 = sadd.s32 %s112, 1
      %p116 = scmp.eq.s32.totalorder %s11, 1
      %p117 = scmp.ne.s32.totalorder %s112, %s114
      %p118 = scmp.eq.s32.totalorder %s11, 0
      %p119 = por %p117, %p118
      %p120 = scmp.ne.s32.totalorder %s112, %s114
      %p121 = scmp.eq.s32.totalorder %s16, 1
      %p122 = por %p120, %p121
      %p123 = scmp.ne.s32.totalorder %s114, %s115
      %p124 = scmp.eq.s32.totalorder %s16, 0
      %p125 = por %p123, %p124
      %p126 = scmp.ne.s32.totalorder %s114, %s115
      %p127 = scmp.eq.s32.totalorder %s17, 1
      %p128 = por %p126, %p127
      %p130 = scmp.ne.s32.totalorder %s115, %s129
      %p131 = scmp.eq.s32.totalorder %s17, 0
      %p132 = por %p130, %p131
      %s133 = ssub.s32 %s18, %s30
      %s134 = ssub.s32 %s19, %s26
      %s135 = sor.u32 %s133, %s134
      %p136 = scmp.eq.s32.totalorder %s135, 0
      %s138 = sadd.s32 %s137, 1
      %s139 = scalar_select %p136, %s137, %s138
      %p142 = pneg %p136
      %p143 = scmp.eq.s32.totalorder %s11, 1
      %p144 = por %p142, %p143
      %p145 = scmp.ne.s32.totalorder %s137, %s140
      %p146 = scmp.eq.s32.totalorder %s11, 0
      %p147 = por %p145, %p146
      %p148 = scmp.ne.s32.totalorder %s137, %s140
      %p149 = scmp.eq.s32.totalorder %s16, 1
      %p150 = por %p148, %p149
      %p151 = scmp.ne.s32.totalorder %s140, %s141
      %p152 = scmp.eq.s32.totalorder %s16, 0
      %p153 = por %p151, %p152
      %p154 = scmp.ne.s32.totalorder %s140, %s141
      %p155 = scmp.eq.s32.totalorder %s17, 1
      %p156 = por %p154, %p155
      %p158 = scmp.ne.s32.totalorder %s141, %s157
      %p159 = scmp.eq.s32.totalorder %s17, 0
      %p160 = por %p158, %p159
      %p161 = scmp.le.s32.totalorder 1, %s11
      %p162 = scmp.lt.s32.totalorder %s11, 3
      %p163 = pnand %p161, %p162
      %p164 = pneg %p163
      // Predicated region
      $region9: #{_lambda_.4} parent=5 // pred_check
        _
      $region10: #{_lambda_.4} parent=5 // pred_check_branch
        %166 = sbr.rel (%p163) target = $region12
      $region11: #{_lambda_.4} parent=5 // pred_region
        %s167 = ssub.s32 %s11, 1
        // Predicated region
        $region13: #{_lambda_.4} parent=11 // pred_check
          %p168 = pneg %p104
        $region14: #{_lambda_.4} parent=11 // pred_check_branch
          %170 = sbr.rel (%p168) target = $region16
        $region15: #{_lambda_.4} parent=11 // pred_region
          %s172 = ssub.s32 81920, 81920
          %173 = vsyncadd [#allocation3], %s172
          %s174 = sshll.u32 [#allocation2], 4
          %s175 = int_to_ptr.vmem [resolvable:$true] %s174
          %180 = dma.hbm_to_vmem [thread:$0]  %s2, 81920, %s175, [#allocation3], 1280, 1280, 80
        $region16: #{_lambda_.4} parent=11 // pred_fallthru
          _
        // Predicated region
        $region17: #{_lambda_.4} parent=11 // pred_check
          %p181 = pneg %p125
        $region18: #{_lambda_.4} parent=11 // pred_check_branch
          %183 = sbr.rel (%p181) target = $region20
        $region19: #{_lambda_.4} parent=11 // pred_region
          _
        $region20: #{_lambda_.4} parent=11 // pred_fallthru
          _
      $region12: #{_lambda_.4} parent=5 // pred_fallthru
        _
      %p184 = scmp.lt.s32.totalorder %s11, 2
      // Predicated region
      $region21: #{_lambda_.4} parent=5 // pred_check
        %p185 = pneg %p184
      $region22: #{_lambda_.4} parent=5 // pred_check_branch
        %187 = sbr.rel (%p185) target = $region24
      $region23: #{_lambda_.4} parent=5 // pred_region
        // Predicated region
        $region25: #{_lambda_.4} parent=23 // pred_check
          %p188 = pneg %p45
        $region26: #{_lambda_.4} parent=23 // pred_check_branch
          %190 = sbr.rel (%p188) target = $region28
        $region27: #{_lambda_.4} parent=23 // pred_region
          %s191 = smul.u32 4, %s19
          %s192 = ssub.s32 5, %s191
          %p193 = scmp.lt.s32.totalorder %s192, 4
          %s194 = scalar_select %p193, %s192, 4
          %s195 = smul.u32 128, %s194
          %s196 = smul.u32 %s195, 4
          %p197 = scmp.lt.s32.totalorder %s18, 1
          %s198 = scalar_select %p197, %s18, 1
          %p199 = scmp.lt.s32.totalorder %s191, 4
          %s200 = scalar_select %p199, %s191, 4
          %s201 = smul.addr %s200, 4
          %s202 = smul.addr %s198, 20
          %s203 = sadd.s32 %s201, %s202
          %s204 = smul.addr %s203, 8
          %s205 = scalar_lea.vmem %s0, %s204
          %s206 = smul.u32 4, %s19
          %s207 = ssub.s32 5, %s206
          %p208 = scmp.lt.s32.totalorder %s207, 4
          %s209 = scalar_select %p208, %s207, 4
          %s210 = smul.u32 128, %s209
          %s211 = smul.u32 %s210, 4
        $region28: #{_lambda_.4} parent=23 // pred_fallthru
          _
        // Predicated region
        $region29: #{_lambda_.4} parent=23 // pred_check
          %p212 = pneg %p77
        $region30: #{_lambda_.4} parent=23 // pred_check_branch
          %214 = sbr.rel (%p212) target = $region32
        $region31: #{_lambda_.4} parent=23 // pred_region
          %s215 = sadd.s32 %s19, 1
          %s216 = smul.u32 %s215, 4
          %p217 = scmp.lt.s32.totalorder %s18, 1
          %s218 = scalar_select %p217, %s18, 1
          %p219 = scmp.lt.s32.totalorder %s216, 4
          %s220 = scalar_select %p219, %s216, 4
          %s221 = smul.addr %s220, 4
          %s222 = smul.addr %s218, 20
          %s223 = sadd.s32 %s221, %s222
          %s224 = smul.addr %s223, 8
          %s225 = scalar_lea.vmem %s1, %s224
          %s226 = sadd.s32 %s19, 1
          %s227 = smul.u32 %s226, 4
        $region32: #{_lambda_.4} parent=23 // pred_fallthru
          _
      $region24: #{_lambda_.4} parent=5 // pred_fallthru
        _
      %p228 = scmp.le.s32.totalorder 1, %s11
      %p229 = scmp.lt.s32.totalorder %s11, 3
      %p230 = pnand %p228, %p229
      %p231 = pneg %p230
      // Predicated region
      $region33: #{_lambda_.4} parent=5 // pred_check
        _
      $region34: #{_lambda_.4} parent=5 // pred_check_branch
        %233 = sbr.rel (%p230) target = $region36
      $region35: #{_lambda_.4} parent=5 // pred_region
        %s234 = ssub.s32 %s11, 1
        // Predicated region
        $region37: #{_lambda_.4} parent=35 // pred_check
          %p235 = pneg %p104
        $region38: #{_lambda_.4} parent=35 // pred_check_branch
          %237 = sbr.rel (%p235) target = $region40
        $region39: #{_lambda_.4} parent=35 // pred_region
          %238 = dma.done [#allocation3], 81920
        $region40: #{_lambda_.4} parent=35 // pred_fallthru
          _
        %s239 = smul.u32 4, %s21
        %s240 = ssub.s32 5, %s239
        %p241 = scmp.lt.s32.totalorder %s240, 4
        %s242 = scalar_select %p241, %s240, 4
        %s243 = smul.u32 128, %s242
        %s244 = smul.u32 %s243, 4
        %p245 = scmp.lt.s32.totalorder %s20, 1
        %s246 = scalar_select %p245, %s20, 1
        %p247 = scmp.lt.s32.totalorder %s239, 4
        %s248 = scalar_select %p247, %s239, 4
        %s249 = smul.addr %s248, 4
        %s250 = smul.addr %s246, 20
        %s251 = sadd.s32 %s249, %s250
        %s252 = smul.addr %s251, 8
        %s253 = scalar_lea.vmem %s0, %s252
        %p254 = pneg %p51
        %p255 = pneg %p48
        %s256 = sadd.s32 %s21, 1
        %s257 = smul.u32 %s256, 4
        %p258 = scmp.lt.s32.totalorder %s20, 1
        %s259 = scalar_select %p258, %s20, 1
        %p260 = scmp.lt.s32.totalorder %s257, 4
        %s261 = scalar_select %p260, %s257, 4
        %s262 = smul.addr %s261, 4
        %s263 = smul.addr %s259, 20
        %s264 = sadd.s32 %s262, %s263
        %s265 = smul.addr %s264, 8
        %s266 = scalar_lea.vmem %s1, %s265
        %p267 = pneg %p83
        %p268 = pneg %p80
        %p269 = pneg %p104
        %p270 = pneg %p101
        %p271 = pneg %p125
        %p272 = pneg %p122
        %p273 = pneg %p153
        %p274 = pneg %p150
        %s275 = smul.u32 4, %s21
        %p276 = scmp.lt.s32.totalorder %s20, 1
        %s277 = scalar_select %p276, %s20, 1
        %p278 = scmp.lt.s32.totalorder %s275, 3
        %s279 = scalar_select %p278, %s275, 3
        %s280 = smul.addr %s279, 4
        %s281 = smul.addr %s277, 16
        %s282 = sadd.s32 %s280, %s281
        %s283 = smul.addr %s282, 8
        %s284 = scalar_lea.vmem %s4, %s283
        %s285 = smul.u32 4, %s21
        %s286 = ssub.s32 5, %s285
        %p287 = scmp.lt.s32.totalorder %s286, 4
        %s288 = scalar_select %p287, %s286, 4
        %s289 = smul.u32 128, %s288
        %s290 = smul.u32 %s289, 4
        %p291 = scmp.lt.s32.totalorder %s20, 1
        %s292 = scalar_select %p291, %s20, 1
        %p293 = scmp.lt.s32.totalorder %s285, 4
        %s294 = scalar_select %p293, %s285, 4
        %s295 = smul.addr %s294, 4
        %s296 = smul.addr %s292, 20
        %s297 = sadd.s32 %s295, %s296
        %s298 = smul.addr %s297, 8
        %s299 = scalar_lea.vmem %s0, %s298
        %s300 = smul.u32 4, %s21
        %s301 = ssub.s32 5, %s300
        %p302 = scmp.lt.s32.totalorder %s301, 4
        %s303 = scalar_select %p302, %s301, 4
        %s304 = smul.u32 128, %s303
        %s305 = smul.u32 %s304, 4
        %s306 = sadd.s32 %s21, 1
        %s307 = smul.u32 %s306, 4
        %p308 = scmp.lt.s32.totalorder %s20, 1
        %s309 = scalar_select %p308, %s20, 1
        %p310 = scmp.lt.s32.totalorder %s307, 4
        %s311 = scalar_select %p310, %s307, 4
        %s312 = smul.addr %s311, 4
        %s313 = smul.addr %s309, 20
        %s314 = sadd.s32 %s312, %s313
        %s315 = smul.addr %s314, 8
        %s316 = scalar_lea.vmem %s1, %s315
        %s317 = sadd.s32 %s21, 1
        %s318 = smul.u32 %s317, 4
        %s319 = smul.u32 4, %s21
        %p320 = scmp.lt.s32.totalorder %s20, 1
        %s321 = scalar_select %p320, %s20, 1
        %p322 = scmp.lt.s32.totalorder %s319, 3
        %s323 = scalar_select %p322, %s319, 3
        %s324 = smul.addr %s323, 4
        %s325 = smul.addr %s321, 16
        %s326 = sadd.s32 %s324, %s325
        %s327 = smul.addr %s326, 8
        %s328 = scalar_lea.vmem %s4, %s327
        %s329 = smul.u32 4, %s21
        %v330 = vld [vmem:[%s299] sm:$0xff]
        %v331 = vld [vmem:[%s299 + $0x8] sm:$0xff]
        %v332 = vld [vmem:[%s299 + $0x10] sm:$0xff]
        %v333 = vld [vmem:[%s299 + $0x18] sm:$0xff]
        %v334 = vld [vmem:[%s299 + $0x20] sm:$0xff]
        %v335 = vld [vmem:[%s299 + $0x28] sm:$0xff]
        %v336 = vld [vmem:[%s299 + $0x30] sm:$0xff]
        %v337 = vld [vmem:[%s299 + $0x38] sm:$0xff]
        %v338 = vld [vmem:[%s299 + $0x40] sm:$0xff]
        %v339 = vld [vmem:[%s299 + $0x48] sm:$0xff]
        %v340 = vld [vmem:[%s299 + $0x50] sm:$0xff]
        %v341 = vld [vmem:[%s299 + $0x58] sm:$0xff]
        %v342 = vld [vmem:[%s299 + $0x60] sm:$0xff]
        %v343 = vld [vmem:[%s299 + $0x68] sm:$0xff]
        %v344 = vld [vmem:[%s299 + $0x70] sm:$0xff]
        %v345 = vld [vmem:[%s299 + $0x78] sm:$0xff]
        %v346 = vld [vmem:[%s316] sm:$0xff]
        %v347 = vld [vmem:[%s316 + $0x8] sm:$0xff]
        %v348 = vld [vmem:[%s316 + $0x10] sm:$0xff]
        %v349 = vld [vmem:[%s316 + $0x18] sm:$0xff]
        %v350 = vld [vmem:[#allocation2] sm:$0xff]
        %v351 = vld [vmem:[#allocation2 + $0x8] sm:$0xff]
        %v352 = vld [vmem:[#allocation2 + $0x10] sm:$0xff]
        %v353 = vld [vmem:[#allocation2 + $0x18] sm:$0xff]
        %v354 = vld [vmem:[#allocation2 + $0x20] sm:$0xff]
        %v355 = vld [vmem:[#allocation2 + $0x28] sm:$0xff]
        %v356 = vld [vmem:[#allocation2 + $0x30] sm:$0xff]
        %v357 = vld [vmem:[#allocation2 + $0x38] sm:$0xff]
        %v358 = vld [vmem:[#allocation2 + $0x40] sm:$0xff]
        %v359 = vld [vmem:[#allocation2 + $0x48] sm:$0xff]
        %v360 = vld [vmem:[#allocation2 + $0x50] sm:$0xff]
        %v361 = vld [vmem:[#allocation2 + $0x58] sm:$0xff]
        %v362 = vld [vmem:[#allocation2 + $0x60] sm:$0xff]
        %v363 = vld [vmem:[#allocation2 + $0x68] sm:$0xff]
        %v364 = vld [vmem:[#allocation2 + $0x70] sm:$0xff]
        %v365 = vld [vmem:[#allocation2 + $0x78] sm:$0xff]
        %v366 = vld [vmem:[#allocation2 + $0x80] sm:$0xff]
        %v367 = vld [vmem:[#allocation2 + $0x88] sm:$0xff]
        %v368 = vld [vmem:[#allocation2 + $0x90] sm:$0xff]
        %v369 = vld [vmem:[#allocation2 + $0x98] sm:$0xff]
        %v370 = vld [vmem:[#allocation2 + $0xa0] sm:$0xff]
        %v371 = vld [vmem:[#allocation2 + $0xa8] sm:$0xff]
        %v372 = vld [vmem:[#allocation2 + $0xb0] sm:$0xff]
        %v373 = vld [vmem:[#allocation2 + $0xb8] sm:$0xff]
        %v374 = vld [vmem:[#allocation2 + $0xc0] sm:$0xff]
        %v375 = vld [vmem:[#allocation2 + $0xc8] sm:$0xff]
        %v376 = vld [vmem:[#allocation2 + $0xd0] sm:$0xff]
        %v377 = vld [vmem:[#allocation2 + $0xd8] sm:$0xff]
        %v378 = vld [vmem:[#allocation2 + $0xe0] sm:$0xff]
        %v379 = vld [vmem:[#allocation2 + $0xe8] sm:$0xff]
        %v380 = vld [vmem:[#allocation2 + $0xf0] sm:$0xff]
        %v381 = vld [vmem:[#allocation2 + $0xf8] sm:$0xff]
        %v382 = vld [vmem:[#allocation2 + $0x100] sm:$0xff]
        %v383 = vld [vmem:[#allocation2 + $0x108] sm:$0xff]
        %v384 = vld [vmem:[#allocation2 + $0x110] sm:$0xff]
        %v385 = vld [vmem:[#allocation2 + $0x118] sm:$0xff]
        %v386 = vld [vmem:[#allocation2 + $0x120] sm:$0xff]
        %v387 = vld [vmem:[#allocation2 + $0x128] sm:$0xff]
        %v388 = vld [vmem:[#allocation2 + $0x130] sm:$0xff]
        %v389 = vld [vmem:[#allocation2 + $0x138] sm:$0xff]
        %v390 = vld [vmem:[#allocation2 + $0x140] sm:$0xff]
        %v391 = vld [vmem:[#allocation2 + $0x148] sm:$0xff]
        %v392 = vld [vmem:[#allocation2 + $0x150] sm:$0xff]
        %v393 = vld [vmem:[#allocation2 + $0x158] sm:$0xff]
        %v394 = vld [vmem:[#allocation2 + $0x160] sm:$0xff]
        %v395 = vld [vmem:[#allocation2 + $0x168] sm:$0xff]
        %v396 = vld [vmem:[#allocation2 + $0x170] sm:$0xff]
        %v397 = vld [vmem:[#allocation2 + $0x178] sm:$0xff]
        %v398 = vld [vmem:[#allocation2 + $0x180] sm:$0xff]
        %v399 = vld [vmem:[#allocation2 + $0x188] sm:$0xff]
        %v400 = vld [vmem:[#allocation2 + $0x190] sm:$0xff]
        %v401 = vld [vmem:[#allocation2 + $0x198] sm:$0xff]
        %v402 = vld [vmem:[#allocation2 + $0x1a0] sm:$0xff]
        %v403 = vld [vmem:[#allocation2 + $0x1a8] sm:$0xff]
        %v404 = vld [vmem:[#allocation2 + $0x1b0] sm:$0xff]
        %v405 = vld [vmem:[#allocation2 + $0x1b8] sm:$0xff]
        %v406 = vld [vmem:[#allocation2 + $0x1c0] sm:$0xff]
        %v407 = vld [vmem:[#allocation2 + $0x1c8] sm:$0xff]
        %v408 = vld [vmem:[#allocation2 + $0x1d0] sm:$0xff]
        %v409 = vld [vmem:[#allocation2 + $0x1d8] sm:$0xff]
        %v410 = vld [vmem:[#allocation2 + $0x1e0] sm:$0xff]
        %v411 = vld [vmem:[#allocation2 + $0x1e8] sm:$0xff]
        %v412 = vld [vmem:[#allocation2 + $0x1f0] sm:$0xff]
        %v413 = vld [vmem:[#allocation2 + $0x1f8] sm:$0xff]
        %v414 = vld [vmem:[#allocation2 + $0x200] sm:$0xff]
        %v415 = vld [vmem:[#allocation2 + $0x208] sm:$0xff]
        %v416 = vld [vmem:[#allocation2 + $0x210] sm:$0xff]
        %v417 = vld [vmem:[#allocation2 + $0x218] sm:$0xff]
        %v418 = vld [vmem:[#allocation2 + $0x220] sm:$0xff]
        %v419 = vld [vmem:[#allocation2 + $0x228] sm:$0xff]
        %v420 = vld [vmem:[#allocation2 + $0x230] sm:$0xff]
        %v421 = vld [vmem:[#allocation2 + $0x238] sm:$0xff]
        %v422 = vld [vmem:[#allocation2 + $0x240] sm:$0xff]
        %v423 = vld [vmem:[#allocation2 + $0x248] sm:$0xff]
        %v424 = vld [vmem:[#allocation2 + $0x250] sm:$0xff]
        %v425 = vld [vmem:[#allocation2 + $0x258] sm:$0xff]
        %v426 = vld [vmem:[#allocation2 + $0x260] sm:$0xff]
        %v427 = vld [vmem:[#allocation2 + $0x268] sm:$0xff]
        %v428 = vld [vmem:[#allocation2 + $0x270] sm:$0xff]
        %v429 = vld [vmem:[#allocation2 + $0x278] sm:$0xff]
        %v430 = vld [vmem:[#allocation2 + $0x280] sm:$0xff]
        %v431 = vld [vmem:[#allocation2 + $0x288] sm:$0xff]
        %v432 = vld [vmem:[#allocation2 + $0x290] sm:$0xff]
        %v433 = vld [vmem:[#allocation2 + $0x298] sm:$0xff]
        %v434 = vld [vmem:[#allocation2 + $0x2a0] sm:$0xff]
        %v435 = vld [vmem:[#allocation2 + $0x2a8] sm:$0xff]
        %v436 = vld [vmem:[#allocation2 + $0x2b0] sm:$0xff]
        %v437 = vld [vmem:[#allocation2 + $0x2b8] sm:$0xff]
        %v438 = vld [vmem:[#allocation2 + $0x2c0] sm:$0xff]
        %v439 = vld [vmem:[#allocation2 + $0x2c8] sm:$0xff]
        %v440 = vld [vmem:[#allocation2 + $0x2d0] sm:$0xff]
        %v441 = vld [vmem:[#allocation2 + $0x2d8] sm:$0xff]
        %v442 = vld [vmem:[#allocation2 + $0x2e0] sm:$0xff]
        %v443 = vld [vmem:[#allocation2 + $0x2e8] sm:$0xff]
        %v444 = vld [vmem:[#allocation2 + $0x2f0] sm:$0xff]
        %v445 = vld [vmem:[#allocation2 + $0x2f8] sm:$0xff]
        %v446 = vld [vmem:[#allocation2 + $0x300] sm:$0xff]
        %v447 = vld [vmem:[#allocation2 + $0x308] sm:$0xff]
        %v448 = vld [vmem:[#allocation2 + $0x310] sm:$0xff]
        %v449 = vld [vmem:[#allocation2 + $0x318] sm:$0xff]
        %v450 = vld [vmem:[#allocation2 + $0x320] sm:$0xff]
        %v451 = vld [vmem:[#allocation2 + $0x328] sm:$0xff]
        %v452 = vld [vmem:[#allocation2 + $0x330] sm:$0xff]
        %v453 = vld [vmem:[#allocation2 + $0x338] sm:$0xff]
        %v454 = vld [vmem:[#allocation2 + $0x340] sm:$0xff]
        %v455 = vld [vmem:[#allocation2 + $0x348] sm:$0xff]
        %v456 = vld [vmem:[#allocation2 + $0x350] sm:$0xff]
        %v457 = vld [vmem:[#allocation2 + $0x358] sm:$0xff]
        %v458 = vld [vmem:[#allocation2 + $0x360] sm:$0xff]
        %v459 = vld [vmem:[#allocation2 + $0x368] sm:$0xff]
        %v460 = vld [vmem:[#allocation2 + $0x370] sm:$0xff]
        %v461 = vld [vmem:[#allocation2 + $0x378] sm:$0xff]
        %v462 = vld [vmem:[#allocation2 + $0x380] sm:$0xff]
        %v463 = vld [vmem:[#allocation2 + $0x388] sm:$0xff]
        %v464 = vld [vmem:[#allocation2 + $0x390] sm:$0xff]
        %v465 = vld [vmem:[#allocation2 + $0x398] sm:$0xff]
        %v466 = vld [vmem:[#allocation2 + $0x3a0] sm:$0xff]
        %v467 = vld [vmem:[#allocation2 + $0x3a8] sm:$0xff]
        %v468 = vld [vmem:[#allocation2 + $0x3b0] sm:$0xff]
        %v469 = vld [vmem:[#allocation2 + $0x3b8] sm:$0xff]
        %v470 = vld [vmem:[#allocation2 + $0x3c0] sm:$0xff]
        %v471 = vld [vmem:[#allocation2 + $0x3c8] sm:$0xff]
        %v472 = vld [vmem:[#allocation2 + $0x3d0] sm:$0xff]
        %v473 = vld [vmem:[#allocation2 + $0x3d8] sm:$0xff]
        %v474 = vld [vmem:[#allocation2 + $0x3e0] sm:$0xff]
        %v475 = vld [vmem:[#allocation2 + $0x3e8] sm:$0xff]
        %v476 = vld [vmem:[#allocation2 + $0x3f0] sm:$0xff]
        %v477 = vld [vmem:[#allocation2 + $0x3f8] sm:$0xff]
        %v478 = vld [vmem:[#allocation2 + $0x400] sm:$0xff]
        %v479 = vld [vmem:[#allocation2 + $0x408] sm:$0xff]
        %v480 = vld [vmem:[#allocation2 + $0x410] sm:$0xff]
        %v481 = vld [vmem:[#allocation2 + $0x418] sm:$0xff]
        %v482 = vld [vmem:[#allocation2 + $0x420] sm:$0xff]
        %v483 = vld [vmem:[#allocation2 + $0x428] sm:$0xff]
        %v484 = vld [vmem:[#allocation2 + $0x430] sm:$0xff]
        %v485 = vld [vmem:[#allocation2 + $0x438] sm:$0xff]
        %v486 = vld [vmem:[#allocation2 + $0x440] sm:$0xff]
        %v487 = vld [vmem:[#allocation2 + $0x448] sm:$0xff]
        %v488 = vld [vmem:[#allocation2 + $0x450] sm:$0xff]
        %v489 = vld [vmem:[#allocation2 + $0x458] sm:$0xff]
        %v490 = vld [vmem:[#allocation2 + $0x460] sm:$0xff]
        %v491 = vld [vmem:[#allocation2 + $0x468] sm:$0xff]
        %v492 = vld [vmem:[#allocation2 + $0x470] sm:$0xff]
        %v493 = vld [vmem:[#allocation2 + $0x478] sm:$0xff]
        %v494 = vld [vmem:[#allocation2 + $0x480] sm:$0xff]
        %v495 = vld [vmem:[#allocation2 + $0x488] sm:$0xff]
        %v496 = vld [vmem:[#allocation2 + $0x490] sm:$0xff]
        %v497 = vld [vmem:[#allocation2 + $0x498] sm:$0xff]
        %v498 = vld [vmem:[#allocation2 + $0x4a0] sm:$0xff]
        %v499 = vld [vmem:[#allocation2 + $0x4a8] sm:$0xff]
        %v500 = vld [vmem:[#allocation2 + $0x4b0] sm:$0xff]
        %v501 = vld [vmem:[#allocation2 + $0x4b8] sm:$0xff]
        %v502 = vld [vmem:[#allocation2 + $0x4c0] sm:$0xff]
        %v503 = vld [vmem:[#allocation2 + $0x4c8] sm:$0xff]
        %v504 = vld [vmem:[#allocation2 + $0x4d0] sm:$0xff]
        %v505 = vld [vmem:[#allocation2 + $0x4d8] sm:$0xff]
        %v506 = vld [vmem:[#allocation2 + $0x4e0] sm:$0xff]
        %v507 = vld [vmem:[#allocation2 + $0x4e8] sm:$0xff]
        %v508 = vld [vmem:[#allocation2 + $0x4f0] sm:$0xff]
        %v509 = vld [vmem:[#allocation2 + $0x4f8] sm:$0xff]
        %v510 = vld [vmem:[#allocation2 + $0x500] sm:$0xff]
        %v511 = vld [vmem:[#allocation2 + $0x508] sm:$0xff]
        %v512 = vld [vmem:[#allocation2 + $0x510] sm:$0xff]
        %v513 = vld [vmem:[#allocation2 + $0x518] sm:$0xff]
        %v514 = vld [vmem:[#allocation2 + $0x520] sm:$0xff]
        %v515 = vld [vmem:[#allocation2 + $0x528] sm:$0xff]
        %v516 = vld [vmem:[#allocation2 + $0x530] sm:$0xff]
        %v517 = vld [vmem:[#allocation2 + $0x538] sm:$0xff]
        %v518 = vld [vmem:[#allocation2 + $0x540] sm:$0xff]
        %v519 = vld [vmem:[#allocation2 + $0x548] sm:$0xff]
        %v520 = vld [vmem:[#allocation2 + $0x550] sm:$0xff]
        %v521 = vld [vmem:[#allocation2 + $0x558] sm:$0xff]
        %v522 = vld [vmem:[#allocation2 + $0x560] sm:$0xff]
        %v523 = vld [vmem:[#allocation2 + $0x568] sm:$0xff]
        %v524 = vld [vmem:[#allocation2 + $0x570] sm:$0xff]
        %v525 = vld [vmem:[#allocation2 + $0x578] sm:$0xff]
        %v526 = vld [vmem:[#allocation2 + $0x580] sm:$0xff]
        %v527 = vld [vmem:[#allocation2 + $0x588] sm:$0xff]
        %v528 = vld [vmem:[#allocation2 + $0x590] sm:$0xff]
        %v529 = vld [vmem:[#allocation2 + $0x598] sm:$0xff]
        %v530 = vld [vmem:[#allocation2 + $0x5a0] sm:$0xff]
        %v531 = vld [vmem:[#allocation2 + $0x5a8] sm:$0xff]
        %v532 = vld [vmem:[#allocation2 + $0x5b0] sm:$0xff]
        %v533 = vld [vmem:[#allocation2 + $0x5b8] sm:$0xff]
        %v534 = vld [vmem:[#allocation2 + $0x5c0] sm:$0xff]
        %v535 = vld [vmem:[#allocation2 + $0x5c8] sm:$0xff]
        %v536 = vld [vmem:[#allocation2 + $0x5d0] sm:$0xff]
        %v537 = vld [vmem:[#allocation2 + $0x5d8] sm:$0xff]
        %v538 = vld [vmem:[#allocation2 + $0x5e0] sm:$0xff]
        %v539 = vld [vmem:[#allocation2 + $0x5e8] sm:$0xff]
        %v540 = vld [vmem:[#allocation2 + $0x5f0] sm:$0xff]
        %v541 = vld [vmem:[#allocation2 + $0x5f8] sm:$0xff]
        %v542 = vld [vmem:[#allocation2 + $0x600] sm:$0xff]
        %v543 = vld [vmem:[#allocation2 + $0x608] sm:$0xff]
        %v544 = vld [vmem:[#allocation2 + $0x610] sm:$0xff]
        %v545 = vld [vmem:[#allocation2 + $0x618] sm:$0xff]
        %v546 = vld [vmem:[#allocation2 + $0x620] sm:$0xff]
        %v547 = vld [vmem:[#allocation2 + $0x628] sm:$0xff]
        %v548 = vld [vmem:[#allocation2 + $0x630] sm:$0xff]
        %v549 = vld [vmem:[#allocation2 + $0x638] sm:$0xff]
        %v550 = vld [vmem:[#allocation2 + $0x640] sm:$0xff]
        %v551 = vld [vmem:[#allocation2 + $0x648] sm:$0xff]
        %v552 = vld [vmem:[#allocation2 + $0x650] sm:$0xff]
        %v553 = vld [vmem:[#allocation2 + $0x658] sm:$0xff]
        %v554 = vld [vmem:[#allocation2 + $0x660] sm:$0xff]
        %v555 = vld [vmem:[#allocation2 + $0x668] sm:$0xff]
        %v556 = vld [vmem:[#allocation2 + $0x670] sm:$0xff]
        %v557 = vld [vmem:[#allocation2 + $0x678] sm:$0xff]
        %v558 = vld [vmem:[#allocation2 + $0x680] sm:$0xff]
        %v559 = vld [vmem:[#allocation2 + $0x688] sm:$0xff]
        %v560 = vld [vmem:[#allocation2 + $0x690] sm:$0xff]
        %v561 = vld [vmem:[#allocation2 + $0x698] sm:$0xff]
        %v562 = vld [vmem:[#allocation2 + $0x6a0] sm:$0xff]
        %v563 = vld [vmem:[#allocation2 + $0x6a8] sm:$0xff]
        %v564 = vld [vmem:[#allocation2 + $0x6b0] sm:$0xff]
        %v565 = vld [vmem:[#allocation2 + $0x6b8] sm:$0xff]
        %v566 = vld [vmem:[#allocation2 + $0x6c0] sm:$0xff]
        %v567 = vld [vmem:[#allocation2 + $0x6c8] sm:$0xff]
        %v568 = vld [vmem:[#allocation2 + $0x6d0] sm:$0xff]
        %v569 = vld [vmem:[#allocation2 + $0x6d8] sm:$0xff]
        %v570 = vld [vmem:[#allocation2 + $0x6e0] sm:$0xff]
        %v571 = vld [vmem:[#allocation2 + $0x6e8] sm:$0xff]
        %v572 = vld [vmem:[#allocation2 + $0x6f0] sm:$0xff]
        %v573 = vld [vmem:[#allocation2 + $0x6f8] sm:$0xff]
        %v574 = vld [vmem:[#allocation2 + $0x700] sm:$0xff]
        %v575 = vld [vmem:[#allocation2 + $0x708] sm:$0xff]
        %v576 = vld [vmem:[#allocation2 + $0x710] sm:$0xff]
        %v577 = vld [vmem:[#allocation2 + $0x718] sm:$0xff]
        %v578 = vld [vmem:[#allocation2 + $0x720] sm:$0xff]
        %v579 = vld [vmem:[#allocation2 + $0x728] sm:$0xff]
        %v580 = vld [vmem:[#allocation2 + $0x730] sm:$0xff]
        %v581 = vld [vmem:[#allocation2 + $0x738] sm:$0xff]
        %v582 = vld [vmem:[#allocation2 + $0x740] sm:$0xff]
        %v583 = vld [vmem:[#allocation2 + $0x748] sm:$0xff]
        %v584 = vld [vmem:[#allocation2 + $0x750] sm:$0xff]
        %v585 = vld [vmem:[#allocation2 + $0x758] sm:$0xff]
        %v586 = vld [vmem:[#allocation2 + $0x760] sm:$0xff]
        %v587 = vld [vmem:[#allocation2 + $0x768] sm:$0xff]
        %v588 = vld [vmem:[#allocation2 + $0x770] sm:$0xff]
        %v589 = vld [vmem:[#allocation2 + $0x778] sm:$0xff]
        %v590 = vld [vmem:[#allocation2 + $0x780] sm:$0xff]
        %v591 = vld [vmem:[#allocation2 + $0x788] sm:$0xff]
        %v592 = vld [vmem:[#allocation2 + $0x790] sm:$0xff]
        %v593 = vld [vmem:[#allocation2 + $0x798] sm:$0xff]
        %v594 = vld [vmem:[#allocation2 + $0x7a0] sm:$0xff]
        %v595 = vld [vmem:[#allocation2 + $0x7a8] sm:$0xff]
        %v596 = vld [vmem:[#allocation2 + $0x7b0] sm:$0xff]
        %v597 = vld [vmem:[#allocation2 + $0x7b8] sm:$0xff]
        %v598 = vld [vmem:[#allocation2 + $0x7c0] sm:$0xff]
        %v599 = vld [vmem:[#allocation2 + $0x7c8] sm:$0xff]
        %v600 = vld [vmem:[#allocation2 + $0x7d0] sm:$0xff]
        %v601 = vld [vmem:[#allocation2 + $0x7d8] sm:$0xff]
        %v602 = vld [vmem:[#allocation2 + $0x7e0] sm:$0xff]
        %v603 = vld [vmem:[#allocation2 + $0x7e8] sm:$0xff]
        %v604 = vld [vmem:[#allocation2 + $0x7f0] sm:$0xff]
        %v605 = vld [vmem:[#allocation2 + $0x7f8] sm:$0xff]
        %v606 = vld [vmem:[#allocation2 + $0x800] sm:$0xff]
        %v607 = vld [vmem:[#allocation2 + $0x808] sm:$0xff]
        %v608 = vld [vmem:[#allocation2 + $0x810] sm:$0xff]
        %v609 = vld [vmem:[#allocation2 + $0x818] sm:$0xff]
        %v610 = vld [vmem:[#allocation2 + $0x820] sm:$0xff]
        %v611 = vld [vmem:[#allocation2 + $0x828] sm:$0xff]
        %v612 = vld [vmem:[#allocation2 + $0x830] sm:$0xff]
        %v613 = vld [vmem:[#allocation2 + $0x838] sm:$0xff]
        %v614 = vld [vmem:[#allocation2 + $0x840] sm:$0xff]
        %v615 = vld [vmem:[#allocation2 + $0x848] sm:$0xff]
        %v616 = vld [vmem:[#allocation2 + $0x850] sm:$0xff]
        %v617 = vld [vmem:[#allocation2 + $0x858] sm:$0xff]
        %v618 = vld [vmem:[#allocation2 + $0x860] sm:$0xff]
        %v619 = vld [vmem:[#allocation2 + $0x868] sm:$0xff]
        %v620 = vld [vmem:[#allocation2 + $0x870] sm:$0xff]
        %v621 = vld [vmem:[#allocation2 + $0x878] sm:$0xff]
        %v622 = vld [vmem:[#allocation2 + $0x880] sm:$0xff]
        %v623 = vld [vmem:[#allocation2 + $0x888] sm:$0xff]
        %v624 = vld [vmem:[#allocation2 + $0x890] sm:$0xff]
        %v625 = vld [vmem:[#allocation2 + $0x898] sm:$0xff]
        %v626 = vld [vmem:[#allocation2 + $0x8a0] sm:$0xff]
        %v627 = vld [vmem:[#allocation2 + $0x8a8] sm:$0xff]
        %v628 = vld [vmem:[#allocation2 + $0x8b0] sm:$0xff]
        %v629 = vld [vmem:[#allocation2 + $0x8b8] sm:$0xff]
        %v630 = vld [vmem:[#allocation2 + $0x8c0] sm:$0xff]
        %v631 = vld [vmem:[#allocation2 + $0x8c8] sm:$0xff]
        %v632 = vld [vmem:[#allocation2 + $0x8d0] sm:$0xff]
        %v633 = vld [vmem:[#allocation2 + $0x8d8] sm:$0xff]
        %v634 = vld [vmem:[#allocation2 + $0x8e0] sm:$0xff]
        %v635 = vld [vmem:[#allocation2 + $0x8e8] sm:$0xff]
        %v636 = vld [vmem:[#allocation2 + $0x8f0] sm:$0xff]
        %v637 = vld [vmem:[#allocation2 + $0x8f8] sm:$0xff]
        %v638 = vld [vmem:[#allocation2 + $0x900] sm:$0xff]
        %v639 = vld [vmem:[#allocation2 + $0x908] sm:$0xff]
        %v640 = vld [vmem:[#allocation2 + $0x910] sm:$0xff]
        %v641 = vld [vmem:[#allocation2 + $0x918] sm:$0xff]
        %v642 = vld [vmem:[#allocation2 + $0x920] sm:$0xff]
        %v643 = vld [vmem:[#allocation2 + $0x928] sm:$0xff]
        %v644 = vld [vmem:[#allocation2 + $0x930] sm:$0xff]
        %v645 = vld [vmem:[#allocation2 + $0x938] sm:$0xff]
        %v646 = vld [vmem:[#allocation2 + $0x940] sm:$0xff]
        %v647 = vld [vmem:[#allocation2 + $0x948] sm:$0xff]
        %v648 = vld [vmem:[#allocation2 + $0x950] sm:$0xff]
        %v649 = vld [vmem:[#allocation2 + $0x958] sm:$0xff]
        %v650 = vld [vmem:[#allocation2 + $0x960] sm:$0xff]
        %v651 = vld [vmem:[#allocation2 + $0x968] sm:$0xff]
        %v652 = vld [vmem:[#allocation2 + $0x970] sm:$0xff]
        %v653 = vld [vmem:[#allocation2 + $0x978] sm:$0xff]
        %v654 = vld [vmem:[#allocation2 + $0x980] sm:$0xff]
        %v655 = vld [vmem:[#allocation2 + $0x988] sm:$0xff]
        %v656 = vld [vmem:[#allocation2 + $0x990] sm:$0xff]
        %v657 = vld [vmem:[#allocation2 + $0x998] sm:$0xff]
        %v658 = vld [vmem:[#allocation2 + $0x9a0] sm:$0xff]
        %v659 = vld [vmem:[#allocation2 + $0x9a8] sm:$0xff]
        %v660 = vld [vmem:[#allocation2 + $0x9b0] sm:$0xff]
        %v661 = vld [vmem:[#allocation2 + $0x9b8] sm:$0xff]
        %v662 = vld [vmem:[#allocation2 + $0x9c0] sm:$0xff]
        %v663 = vld [vmem:[#allocation2 + $0x9c8] sm:$0xff]
        %v664 = vld [vmem:[#allocation2 + $0x9d0] sm:$0xff]
        %v665 = vld [vmem:[#allocation2 + $0x9d8] sm:$0xff]
        %v666 = vld [vmem:[#allocation2 + $0x9e0] sm:$0xff]
        %v667 = vld [vmem:[#allocation2 + $0x9e8] sm:$0xff]
        %v668 = vld [vmem:[#allocation2 + $0x9f0] sm:$0xff]
        %v669 = vld [vmem:[#allocation2 + $0x9f8] sm:$0xff]
        %v670 = vld [vmem:[#allocation2 + $0xa00] sm:$0xff]
        %v671 = vld [vmem:[#allocation2 + $0xa08] sm:$0xff]
        %v672 = vld [vmem:[#allocation2 + $0xa10] sm:$0xff]
        %v673 = vld [vmem:[#allocation2 + $0xa18] sm:$0xff]
        %v674 = vld [vmem:[#allocation2 + $0xa20] sm:$0xff]
        %v675 = vld [vmem:[#allocation2 + $0xa28] sm:$0xff]
        %v676 = vld [vmem:[#allocation2 + $0xa30] sm:$0xff]
        %v677 = vld [vmem:[#allocation2 + $0xa38] sm:$0xff]
        %v678 = vld [vmem:[#allocation2 + $0xa40] sm:$0xff]
        %v679 = vld [vmem:[#allocation2 + $0xa48] sm:$0xff]
        %v680 = vld [vmem:[#allocation2 + $0xa50] sm:$0xff]
        %v681 = vld [vmem:[#allocation2 + $0xa58] sm:$0xff]
        %v682 = vld [vmem:[#allocation2 + $0xa60] sm:$0xff]
        %v683 = vld [vmem:[#allocation2 + $0xa68] sm:$0xff]
        %v684 = vld [vmem:[#allocation2 + $0xa70] sm:$0xff]
        %v685 = vld [vmem:[#allocation2 + $0xa78] sm:$0xff]
        %v686 = vld [vmem:[#allocation2 + $0xa80] sm:$0xff]
        %v687 = vld [vmem:[#allocation2 + $0xa88] sm:$0xff]
        %v688 = vld [vmem:[#allocation2 + $0xa90] sm:$0xff]
        %v689 = vld [vmem:[#allocation2 + $0xa98] sm:$0xff]
        %v690 = vld [vmem:[#allocation2 + $0xaa0] sm:$0xff]
        %v691 = vld [vmem:[#allocation2 + $0xaa8] sm:$0xff]
        %v692 = vld [vmem:[#allocation2 + $0xab0] sm:$0xff]
        %v693 = vld [vmem:[#allocation2 + $0xab8] sm:$0xff]
        %v694 = vld [vmem:[#allocation2 + $0xac0] sm:$0xff]
        %v695 = vld [vmem:[#allocation2 + $0xac8] sm:$0xff]
        %v696 = vld [vmem:[#allocation2 + $0xad0] sm:$0xff]
        %v697 = vld [vmem:[#allocation2 + $0xad8] sm:$0xff]
        %v698 = vld [vmem:[#allocation2 + $0xae0] sm:$0xff]
        %v699 = vld [vmem:[#allocation2 + $0xae8] sm:$0xff]
        %v700 = vld [vmem:[#allocation2 + $0xaf0] sm:$0xff]
        %v701 = vld [vmem:[#allocation2 + $0xaf8] sm:$0xff]
        %v702 = vld [vmem:[#allocation2 + $0xb00] sm:$0xff]
        %v703 = vld [vmem:[#allocation2 + $0xb08] sm:$0xff]
        %v704 = vld [vmem:[#allocation2 + $0xb10] sm:$0xff]
        %v705 = vld [vmem:[#allocation2 + $0xb18] sm:$0xff]
        %v706 = vld [vmem:[#allocation2 + $0xb20] sm:$0xff]
        %v707 = vld [vmem:[#allocation2 + $0xb28] sm:$0xff]
        %v708 = vld [vmem:[#allocation2 + $0xb30] sm:$0xff]
        %v709 = vld [vmem:[#allocation2 + $0xb38] sm:$0xff]
        %v710 = vld [vmem:[#allocation2 + $0xb40] sm:$0xff]
        %v711 = vld [vmem:[#allocation2 + $0xb48] sm:$0xff]
        %v712 = vld [vmem:[#allocation2 + $0xb50] sm:$0xff]
        %v713 = vld [vmem:[#allocation2 + $0xb58] sm:$0xff]
        %v714 = vld [vmem:[#allocation2 + $0xb60] sm:$0xff]
        %v715 = vld [vmem:[#allocation2 + $0xb68] sm:$0xff]
        %v716 = vld [vmem:[#allocation2 + $0xb70] sm:$0xff]
        %v717 = vld [vmem:[#allocation2 + $0xb78] sm:$0xff]
        %v718 = vld [vmem:[#allocation2 + $0xb80] sm:$0xff]
        %v719 = vld [vmem:[#allocation2 + $0xb88] sm:$0xff]
        %v720 = vld [vmem:[#allocation2 + $0xb90] sm:$0xff]
        %v721 = vld [vmem:[#allocation2 + $0xb98] sm:$0xff]
        %v722 = vld [vmem:[#allocation2 + $0xba0] sm:$0xff]
        %v723 = vld [vmem:[#allocation2 + $0xba8] sm:$0xff]
        %v724 = vld [vmem:[#allocation2 + $0xbb0] sm:$0xff]
        %v725 = vld [vmem:[#allocation2 + $0xbb8] sm:$0xff]
        %v726 = vld [vmem:[#allocation2 + $0xbc0] sm:$0xff]
        %v727 = vld [vmem:[#allocation2 + $0xbc8] sm:$0xff]
        %v728 = vld [vmem:[#allocation2 + $0xbd0] sm:$0xff]
        %v729 = vld [vmem:[#allocation2 + $0xbd8] sm:$0xff]
        %v730 = vld [vmem:[#allocation2 + $0xbe0] sm:$0xff]
        %v731 = vld [vmem:[#allocation2 + $0xbe8] sm:$0xff]
        %v732 = vld [vmem:[#allocation2 + $0xbf0] sm:$0xff]
        %v733 = vld [vmem:[#allocation2 + $0xbf8] sm:$0xff]
        %v734 = vld [vmem:[#allocation2 + $0xc00] sm:$0xff]
        %v735 = vld [vmem:[#allocation2 + $0xc08] sm:$0xff]
        %v736 = vld [vmem:[#allocation2 + $0xc10] sm:$0xff]
        %v737 = vld [vmem:[#allocation2 + $0xc18] sm:$0xff]
        %v738 = vld [vmem:[#allocation2 + $0xc20] sm:$0xff]
        %v739 = vld [vmem:[#allocation2 + $0xc28] sm:$0xff]
        %v740 = vld [vmem:[#allocation2 + $0xc30] sm:$0xff]
        %v741 = vld [vmem:[#allocation2 + $0xc38] sm:$0xff]
        %v742 = vld [vmem:[#allocation2 + $0xc40] sm:$0xff]
        %v743 = vld [vmem:[#allocation2 + $0xc48] sm:$0xff]
        %v744 = vld [vmem:[#allocation2 + $0xc50] sm:$0xff]
        %v745 = vld [vmem:[#allocation2 + $0xc58] sm:$0xff]
        %v746 = vld [vmem:[#allocation2 + $0xc60] sm:$0xff]
        %v747 = vld [vmem:[#allocation2 + $0xc68] sm:$0xff]
        %v748 = vld [vmem:[#allocation2 + $0xc70] sm:$0xff]
        %v749 = vld [vmem:[#allocation2 + $0xc78] sm:$0xff]
        %v750 = vld [vmem:[#allocation2 + $0xc80] sm:$0xff]
        %v751 = vld [vmem:[#allocation2 + $0xc88] sm:$0xff]
        %v752 = vld [vmem:[#allocation2 + $0xc90] sm:$0xff]
        %v753 = vld [vmem:[#allocation2 + $0xc98] sm:$0xff]
        %v754 = vld [vmem:[#allocation2 + $0xca0] sm:$0xff]
        %v755 = vld [vmem:[#allocation2 + $0xca8] sm:$0xff]
        %v756 = vld [vmem:[#allocation2 + $0xcb0] sm:$0xff]
        %v757 = vld [vmem:[#allocation2 + $0xcb8] sm:$0xff]
        %v758 = vld [vmem:[#allocation2 + $0xcc0] sm:$0xff]
        %v759 = vld [vmem:[#allocation2 + $0xcc8] sm:$0xff]
        %v760 = vld [vmem:[#allocation2 + $0xcd0] sm:$0xff]
        %v761 = vld [vmem:[#allocation2 + $0xcd8] sm:$0xff]
        %v762 = vld [vmem:[#allocation2 + $0xce0] sm:$0xff]
        %v763 = vld [vmem:[#allocation2 + $0xce8] sm:$0xff]
        %v764 = vld [vmem:[#allocation2 + $0xcf0] sm:$0xff]
        %v765 = vld [vmem:[#allocation2 + $0xcf8] sm:$0xff]
        %v766 = vld [vmem:[#allocation2 + $0xd00] sm:$0xff]
        %v767 = vld [vmem:[#allocation2 + $0xd08] sm:$0xff]
        %v768 = vld [vmem:[#allocation2 + $0xd10] sm:$0xff]
        %v769 = vld [vmem:[#allocation2 + $0xd18] sm:$0xff]
        %v770 = vld [vmem:[#allocation2 + $0xd20] sm:$0xff]
        %v771 = vld [vmem:[#allocation2 + $0xd28] sm:$0xff]
        %v772 = vld [vmem:[#allocation2 + $0xd30] sm:$0xff]
        %v773 = vld [vmem:[#allocation2 + $0xd38] sm:$0xff]
        %v774 = vld [vmem:[#allocation2 + $0xd40] sm:$0xff]
        %v775 = vld [vmem:[#allocation2 + $0xd48] sm:$0xff]
        %v776 = vld [vmem:[#allocation2 + $0xd50] sm:$0xff]
        %v777 = vld [vmem:[#allocation2 + $0xd58] sm:$0xff]
        %v778 = vld [vmem:[#allocation2 + $0xd60] sm:$0xff]
        %v779 = vld [vmem:[#allocation2 + $0xd68] sm:$0xff]
        %v780 = vld [vmem:[#allocation2 + $0xd70] sm:$0xff]
        %v781 = vld [vmem:[#allocation2 + $0xd78] sm:$0xff]
        %v782 = vld [vmem:[#allocation2 + $0xd80] sm:$0xff]
        %v783 = vld [vmem:[#allocation2 + $0xd88] sm:$0xff]
        %v784 = vld [vmem:[#allocation2 + $0xd90] sm:$0xff]
        %v785 = vld [vmem:[#allocation2 + $0xd98] sm:$0xff]
        %v786 = vld [vmem:[#allocation2 + $0xda0] sm:$0xff]
        %v787 = vld [vmem:[#allocation2 + $0xda8] sm:$0xff]
        %v788 = vld [vmem:[#allocation2 + $0xdb0] sm:$0xff]
        %v789 = vld [vmem:[#allocation2 + $0xdb8] sm:$0xff]
        %v790 = vld [vmem:[#allocation2 + $0xdc0] sm:$0xff]
        %v791 = vld [vmem:[#allocation2 + $0xdc8] sm:$0xff]
        %v792 = vld [vmem:[#allocation2 + $0xdd0] sm:$0xff]
        %v793 = vld [vmem:[#allocation2 + $0xdd8] sm:$0xff]
        %v794 = vld [vmem:[#allocation2 + $0xde0] sm:$0xff]
        %v795 = vld [vmem:[#allocation2 + $0xde8] sm:$0xff]
        %v796 = vld [vmem:[#allocation2 + $0xdf0] sm:$0xff]
        %v797 = vld [vmem:[#allocation2 + $0xdf8] sm:$0xff]
        %v798 = vld [vmem:[#allocation2 + $0xe00] sm:$0xff]
        %v799 = vld [vmem:[#allocation2 + $0xe08] sm:$0xff]
        %v800 = vld [vmem:[#allocation2 + $0xe10] sm:$0xff]
        %v801 = vld [vmem:[#allocation2 + $0xe18] sm:$0xff]
        %v802 = vld [vmem:[#allocation2 + $0xe20] sm:$0xff]
        %v803 = vld [vmem:[#allocation2 + $0xe28] sm:$0xff]
        %v804 = vld [vmem:[#allocation2 + $0xe30] sm:$0xff]
        %v805 = vld [vmem:[#allocation2 + $0xe38] sm:$0xff]
        %v806 = vld [vmem:[#allocation2 + $0xe40] sm:$0xff]
        %v807 = vld [vmem:[#allocation2 + $0xe48] sm:$0xff]
        %v808 = vld [vmem:[#allocation2 + $0xe50] sm:$0xff]
        %v809 = vld [vmem:[#allocation2 + $0xe58] sm:$0xff]
        %v810 = vld [vmem:[#allocation2 + $0xe60] sm:$0xff]
        %v811 = vld [vmem:[#allocation2 + $0xe68] sm:$0xff]
        %v812 = vld [vmem:[#allocation2 + $0xe70] sm:$0xff]
        %v813 = vld [vmem:[#allocation2 + $0xe78] sm:$0xff]
        %v814 = vld [vmem:[#allocation2 + $0xe80] sm:$0xff]
        %v815 = vld [vmem:[#allocation2 + $0xe88] sm:$0xff]
        %v816 = vld [vmem:[#allocation2 + $0xe90] sm:$0xff]
        %v817 = vld [vmem:[#allocation2 + $0xe98] sm:$0xff]
        %v818 = vld [vmem:[#allocation2 + $0xea0] sm:$0xff]
        %v819 = vld [vmem:[#allocation2 + $0xea8] sm:$0xff]
        %v820 = vld [vmem:[#allocation2 + $0xeb0] sm:$0xff]
        %v821 = vld [vmem:[#allocation2 + $0xeb8] sm:$0xff]
        %v822 = vld [vmem:[#allocation2 + $0xec0] sm:$0xff]
        %v823 = vld [vmem:[#allocation2 + $0xec8] sm:$0xff]
        %v824 = vld [vmem:[#allocation2 + $0xed0] sm:$0xff]
        %v825 = vld [vmem:[#allocation2 + $0xed8] sm:$0xff]
        %v826 = vld [vmem:[#allocation2 + $0xee0] sm:$0xff]
        %v827 = vld [vmem:[#allocation2 + $0xee8] sm:$0xff]
        %v828 = vld [vmem:[#allocation2 + $0xef0] sm:$0xff]
        %v829 = vld [vmem:[#allocation2 + $0xef8] sm:$0xff]
        %v830 = vld [vmem:[#allocation2 + $0xf00] sm:$0xff]
        %v831 = vld [vmem:[#allocation2 + $0xf08] sm:$0xff]
        %v832 = vld [vmem:[#allocation2 + $0xf10] sm:$0xff]
        %v833 = vld [vmem:[#allocation2 + $0xf18] sm:$0xff]
        %v834 = vld [vmem:[#allocation2 + $0xf20] sm:$0xff]
        %v835 = vld [vmem:[#allocation2 + $0xf28] sm:$0xff]
        %v836 = vld [vmem:[#allocation2 + $0xf30] sm:$0xff]
        %v837 = vld [vmem:[#allocation2 + $0xf38] sm:$0xff]
        %v838 = vld [vmem:[#allocation2 + $0xf40] sm:$0xff]
        %v839 = vld [vmem:[#allocation2 + $0xf48] sm:$0xff]
        %v840 = vld [vmem:[#allocation2 + $0xf50] sm:$0xff]
        %v841 = vld [vmem:[#allocation2 + $0xf58] sm:$0xff]
        %v842 = vld [vmem:[#allocation2 + $0xf60] sm:$0xff]
        %v843 = vld [vmem:[#allocation2 + $0xf68] sm:$0xff]
        %v844 = vld [vmem:[#allocation2 + $0xf70] sm:$0xff]
        %v845 = vld [vmem:[#allocation2 + $0xf78] sm:$0xff]
        %v846 = vld [vmem:[#allocation2 + $0xf80] sm:$0xff]
        %v847 = vld [vmem:[#allocation2 + $0xf88] sm:$0xff]
        %v848 = vld [vmem:[#allocation2 + $0xf90] sm:$0xff]
        %v849 = vld [vmem:[#allocation2 + $0xf98] sm:$0xff]
        %v850 = vld [vmem:[#allocation2 + $0xfa0] sm:$0xff]
        %v851 = vld [vmem:[#allocation2 + $0xfa8] sm:$0xff]
        %v852 = vld [vmem:[#allocation2 + $0xfb0] sm:$0xff]
        %v853 = vld [vmem:[#allocation2 + $0xfb8] sm:$0xff]
        %v854 = vld [vmem:[#allocation2 + $0xfc0] sm:$0xff]
        %v855 = vld [vmem:[#allocation2 + $0xfc8] sm:$0xff]
        %v856 = vld [vmem:[#allocation2 + $0xfd0] sm:$0xff]
        %v857 = vld [vmem:[#allocation2 + $0xfd8] sm:$0xff]
        %v858 = vld [vmem:[#allocation2 + $0xfe0] sm:$0xff]
        %v859 = vld [vmem:[#allocation2 + $0xfe8] sm:$0xff]
        %v860 = vld [vmem:[#allocation2 + $0xff0] sm:$0xff]
        %v861 = vld [vmem:[#allocation2 + $0xff8] sm:$0xff]
        %v862 = vld [vmem:[#allocation2 + $0x1000] sm:$0xff]
        %v863 = vld [vmem:[#allocation2 + $0x1008] sm:$0xff]
        %v864 = vld [vmem:[#allocation2 + $0x1010] sm:$0xff]
        %v865 = vld [vmem:[#allocation2 + $0x1018] sm:$0xff]
        %v866 = vld [vmem:[#allocation2 + $0x1020] sm:$0xff]
        %v867 = vld [vmem:[#allocation2 + $0x1028] sm:$0xff]
        %v868 = vld [vmem:[#allocation2 + $0x1030] sm:$0xff]
        %v869 = vld [vmem:[#allocation2 + $0x1038] sm:$0xff]
        %v870 = vld [vmem:[#allocation2 + $0x1040] sm:$0xff]
        %v871 = vld [vmem:[#allocation2 + $0x1048] sm:$0xff]
        %v872 = vld [vmem:[#allocation2 + $0x1050] sm:$0xff]
        %v873 = vld [vmem:[#allocation2 + $0x1058] sm:$0xff]
        %v874 = vld [vmem:[#allocation2 + $0x1060] sm:$0xff]
        %v875 = vld [vmem:[#allocation2 + $0x1068] sm:$0xff]
        %v876 = vld [vmem:[#allocation2 + $0x1070] sm:$0xff]
        %v877 = vld [vmem:[#allocation2 + $0x1078] sm:$0xff]
        %v878 = vld [vmem:[#allocation2 + $0x1080] sm:$0xff]
        %v879 = vld [vmem:[#allocation2 + $0x1088] sm:$0xff]
        %v880 = vld [vmem:[#allocation2 + $0x1090] sm:$0xff]
        %v881 = vld [vmem:[#allocation2 + $0x1098] sm:$0xff]
        %v882 = vld [vmem:[#allocation2 + $0x10a0] sm:$0xff]
        %v883 = vld [vmem:[#allocation2 + $0x10a8] sm:$0xff]
        %v884 = vld [vmem:[#allocation2 + $0x10b0] sm:$0xff]
        %v885 = vld [vmem:[#allocation2 + $0x10b8] sm:$0xff]
        %v886 = vld [vmem:[#allocation2 + $0x10c0] sm:$0xff]
        %v887 = vld [vmem:[#allocation2 + $0x10c8] sm:$0xff]
        %v888 = vld [vmem:[#allocation2 + $0x10d0] sm:$0xff]
        %v889 = vld [vmem:[#allocation2 + $0x10d8] sm:$0xff]
        %v890 = vld [vmem:[#allocation2 + $0x10e0] sm:$0xff]
        %v891 = vld [vmem:[#allocation2 + $0x10e8] sm:$0xff]
        %v892 = vld [vmem:[#allocation2 + $0x10f0] sm:$0xff]
        %v893 = vld [vmem:[#allocation2 + $0x10f8] sm:$0xff]
        %v894 = vld [vmem:[#allocation2 + $0x1100] sm:$0xff]
        %v895 = vld [vmem:[#allocation2 + $0x1108] sm:$0xff]
        %v896 = vld [vmem:[#allocation2 + $0x1110] sm:$0xff]
        %v897 = vld [vmem:[#allocation2 + $0x1118] sm:$0xff]
        %v898 = vld [vmem:[#allocation2 + $0x1120] sm:$0xff]
        %v899 = vld [vmem:[#allocation2 + $0x1128] sm:$0xff]
        %v900 = vld [vmem:[#allocation2 + $0x1130] sm:$0xff]
        %v901 = vld [vmem:[#allocation2 + $0x1138] sm:$0xff]
        %v902 = vld [vmem:[#allocation2 + $0x1140] sm:$0xff]
        %v903 = vld [vmem:[#allocation2 + $0x1148] sm:$0xff]
        %v904 = vld [vmem:[#allocation2 + $0x1150] sm:$0xff]
        %v905 = vld [vmem:[#allocation2 + $0x1158] sm:$0xff]
        %v906 = vld [vmem:[#allocation2 + $0x1160] sm:$0xff]
        %v907 = vld [vmem:[#allocation2 + $0x1168] sm:$0xff]
        %v908 = vld [vmem:[#allocation2 + $0x1170] sm:$0xff]
        %v909 = vld [vmem:[#allocation2 + $0x1178] sm:$0xff]
        %v910 = vld [vmem:[#allocation2 + $0x1180] sm:$0xff]
        %v911 = vld [vmem:[#allocation2 + $0x1188] sm:$0xff]
        %v912 = vld [vmem:[#allocation2 + $0x1190] sm:$0xff]
        %v913 = vld [vmem:[#allocation2 + $0x1198] sm:$0xff]
        %v914 = vld [vmem:[#allocation2 + $0x11a0] sm:$0xff]
        %v915 = vld [vmem:[#allocation2 + $0x11a8] sm:$0xff]
        %v916 = vld [vmem:[#allocation2 + $0x11b0] sm:$0xff]
        %v917 = vld [vmem:[#allocation2 + $0x11b8] sm:$0xff]
        %v918 = vld [vmem:[#allocation2 + $0x11c0] sm:$0xff]
        %v919 = vld [vmem:[#allocation2 + $0x11c8] sm:$0xff]
        %v920 = vld [vmem:[#allocation2 + $0x11d0] sm:$0xff]
        %v921 = vld [vmem:[#allocation2 + $0x11d8] sm:$0xff]
        %v922 = vld [vmem:[#allocation2 + $0x11e0] sm:$0xff]
        %v923 = vld [vmem:[#allocation2 + $0x11e8] sm:$0xff]
        %v924 = vld [vmem:[#allocation2 + $0x11f0] sm:$0xff]
        %v925 = vld [vmem:[#allocation2 + $0x11f8] sm:$0xff]
        %v926 = vld [vmem:[#allocation2 + $0x1200] sm:$0xff]
        %v927 = vld [vmem:[#allocation2 + $0x1208] sm:$0xff]
        %v928 = vld [vmem:[#allocation2 + $0x1210] sm:$0xff]
        %v929 = vld [vmem:[#allocation2 + $0x1218] sm:$0xff]
        %v930 = vld [vmem:[#allocation2 + $0x1220] sm:$0xff]
        %v931 = vld [vmem:[#allocation2 + $0x1228] sm:$0xff]
        %v932 = vld [vmem:[#allocation2 + $0x1230] sm:$0xff]
        %v933 = vld [vmem:[#allocation2 + $0x1238] sm:$0xff]
        %v934 = vld [vmem:[#allocation2 + $0x1240] sm:$0xff]
        %v935 = vld [vmem:[#allocation2 + $0x1248] sm:$0xff]
        %v936 = vld [vmem:[#allocation2 + $0x1250] sm:$0xff]
        %v937 = vld [vmem:[#allocation2 + $0x1258] sm:$0xff]
        %v938 = vld [vmem:[#allocation2 + $0x1260] sm:$0xff]
        %v939 = vld [vmem:[#allocation2 + $0x1268] sm:$0xff]
        %v940 = vld [vmem:[#allocation2 + $0x1270] sm:$0xff]
        %v941 = vld [vmem:[#allocation2 + $0x1278] sm:$0xff]
        %v942 = vld [vmem:[#allocation2 + $0x1280] sm:$0xff]
        %v943 = vld [vmem:[#allocation2 + $0x1288] sm:$0xff]
        %v944 = vld [vmem:[#allocation2 + $0x1290] sm:$0xff]
        %v945 = vld [vmem:[#allocation2 + $0x1298] sm:$0xff]
        %v946 = vld [vmem:[#allocation2 + $0x12a0] sm:$0xff]
        %v947 = vld [vmem:[#allocation2 + $0x12a8] sm:$0xff]
        %v948 = vld [vmem:[#allocation2 + $0x12b0] sm:$0xff]
        %v949 = vld [vmem:[#allocation2 + $0x12b8] sm:$0xff]
        %v950 = vld [vmem:[#allocation2 + $0x12c0] sm:$0xff]
        %v951 = vld [vmem:[#allocation2 + $0x12c8] sm:$0xff]
        %v952 = vld [vmem:[#allocation2 + $0x12d0] sm:$0xff]
        %v953 = vld [vmem:[#allocation2 + $0x12d8] sm:$0xff]
        %v954 = vld [vmem:[#allocation2 + $0x12e0] sm:$0xff]
        %v955 = vld [vmem:[#allocation2 + $0x12e8] sm:$0xff]
        %v956 = vld [vmem:[#allocation2 + $0x12f0] sm:$0xff]
        %v957 = vld [vmem:[#allocation2 + $0x12f8] sm:$0xff]
        %v958 = vld [vmem:[#allocation2 + $0x1300] sm:$0xff]
        %v959 = vld [vmem:[#allocation2 + $0x1308] sm:$0xff]
        %v960 = vld [vmem:[#allocation2 + $0x1310] sm:$0xff]
        %v961 = vld [vmem:[#allocation2 + $0x1318] sm:$0xff]
        %v962 = vld [vmem:[#allocation2 + $0x1320] sm:$0xff]
        %v963 = vld [vmem:[#allocation2 + $0x1328] sm:$0xff]
        %v964 = vld [vmem:[#allocation2 + $0x1330] sm:$0xff]
        %v965 = vld [vmem:[#allocation2 + $0x1338] sm:$0xff]
        %v966 = vld [vmem:[#allocation2 + $0x1340] sm:$0xff]
        %v967 = vld [vmem:[#allocation2 + $0x1348] sm:$0xff]
        %v968 = vld [vmem:[#allocation2 + $0x1350] sm:$0xff]
        %v969 = vld [vmem:[#allocation2 + $0x1358] sm:$0xff]
        %v970 = vld [vmem:[#allocation2 + $0x1360] sm:$0xff]
        %v971 = vld [vmem:[#allocation2 + $0x1368] sm:$0xff]
        %v972 = vld [vmem:[#allocation2 + $0x1370] sm:$0xff]
        %v973 = vld [vmem:[#allocation2 + $0x1378] sm:$0xff]
        %v974 = vld [vmem:[#allocation2 + $0x1380] sm:$0xff]
        %v975 = vld [vmem:[#allocation2 + $0x1388] sm:$0xff]
        %v976 = vld [vmem:[#allocation2 + $0x1390] sm:$0xff]
        %v977 = vld [vmem:[#allocation2 + $0x1398] sm:$0xff]
        %v978 = vld [vmem:[#allocation2 + $0x13a0] sm:$0xff]
        %v979 = vld [vmem:[#allocation2 + $0x13a8] sm:$0xff]
        %v980 = vld [vmem:[#allocation2 + $0x13b0] sm:$0xff]
        %v981 = vld [vmem:[#allocation2 + $0x13b8] sm:$0xff]
        %v982 = vld [vmem:[#allocation2 + $0x13c0] sm:$0xff]
        %v983 = vld [vmem:[#allocation2 + $0x13c8] sm:$0xff]
        %v984 = vld [vmem:[#allocation2 + $0x13d0] sm:$0xff]
        %v985 = vld [vmem:[#allocation2 + $0x13d8] sm:$0xff]
        %v986 = vld [vmem:[#allocation2 + $0x13e0] sm:$0xff]
        %v987 = vld [vmem:[#allocation2 + $0x13e8] sm:$0xff]
        %v988 = vld [vmem:[#allocation2 + $0x13f0] sm:$0xff]
        %v989 = vld [vmem:[#allocation2 + $0x13f8] sm:$0xff]
        %990 = vmatprep.subr.mxu0 %v501
        %991 = vmatpush1.msra.mxu0 %v500
        %992 = vmatprep.subr.mxu0 %v491
        %993 = vmatpush1.msra.mxu0 %v490
        %994 = vmatprep.subr.mxu0 %v481
        %995 = vmatpush1.msra.mxu0 %v480
        %996 = vmatprep.subr.mxu0 %v471
        %997 = vmatpush1.msra.mxu0 %v470
        %998 = vmatprep.subr.mxu0 %v461
        %999 = vmatpush1.msra.mxu0 %v460
        %1000 = vmatprep.subr.mxu0 %v451
        %1001 = vmatpush1.msra.mxu0 %v450
        %1002 = vmatprep.subr.mxu0 %v441
        %1003 = vmatpush1.msra.mxu0 %v440
        %1004 = vmatprep.subr.mxu0 %v431
        %1005 = vmatpush1.msra.mxu0 %v430
        %1006 = vmatprep.subr.mxu0 %v421
        %1007 = vmatpush1.msra.mxu0 %v420
        %1008 = vmatprep.subr.mxu0 %v411
        %1009 = vmatpush1.msra.mxu0 %v410
        %1010 = vmatprep.subr.mxu0 %v401
        %1011 = vmatpush1.msra.mxu0 %v400
        %1012 = vmatprep.subr.mxu0 %v391
        %1013 = vmatpush1.msra.mxu0 %v390
        %1014 = vmatprep.subr.mxu0 %v381
        %1015 = vmatpush1.msra.mxu0 %v380
        %1016 = vmatprep.subr.mxu0 %v371
        %1017 = vmatpush1.msra.mxu0 %v370
        %1018 = vmatprep.subr.mxu0 %v361
        %1019 = vmatpush1.msra.mxu0 %v360
        %1020 = vmatprep.subr.mxu0 %v351
        %1021 = vmatpush1.msra.mxu0 %v350
        %1022 = vmatprep.subr.mxu0 %v661
        %1023 = vmatpush2.msra.mxu0 %v660
        %1024 = vmatprep.subr.mxu0 %v651
        %1025 = vmatpush2.msra.mxu0 %v650
        %1026 = vmatprep.subr.mxu0 %v641
        %1027 = vmatpush2.msra.mxu0 %v640
        %1028 = vmatprep.subr.mxu0 %v631
        %1029 = vmatpush2.msra.mxu0 %v630
        %1030 = vmatprep.subr.mxu0 %v621
        %1031 = vmatpush2.msra.mxu0 %v620
        %1032 = vmatprep.subr.mxu0 %v611
        %1033 = vmatpush2.msra.mxu0 %v610
        %1034 = vmatprep.subr.mxu0 %v601
        %1035 = vmatpush2.msra.mxu0 %v600
        %1036 = vmatprep.subr.mxu0 %v591
        %1037 = vmatpush2.msra.mxu0 %v590
        %1038 = vmatprep.subr.mxu0 %v581
        %1039 = vmatpush2.msra.mxu0 %v580
        %1040 = vmatprep.subr.mxu0 %v571
        %1041 = vmatpush2.msra.mxu0 %v570
        %1042 = vmatprep.subr.mxu0 %v561
        %1043 = vmatpush2.msra.mxu0 %v560
        %1044 = vmatprep.subr.mxu0 %v551
        %1045 = vmatpush2.msra.mxu0 %v550
        %1046 = vmatprep.subr.mxu0 %v541
        %1047 = vmatpush2.msra.mxu0 %v540
        %1048 = vmatprep.subr.mxu0 %v531
        %1049 = vmatpush2.msra.mxu0 %v530
        %1050 = vmatprep.subr.mxu0 %v521
        %1051 = vmatpush2.msra.mxu0 %v520
        %1052 = vmatprep.subr.mxu0 %v511
        %1053 = vmatpush2.msra.mxu0 %v510
        %1054 = vmatprep.mubr.f32.mxu0 %v331
        %1055 = vmatmul.mubr.f32.gmra.mxu0 %v330
        %v1056 = vpop.f32.mrf.mxu0
        %v1057 = vadd.f32 0.0, %v1056
        %v1058 = vpop.f32.mrf.mxu0
        %v1059 = vadd.f32 0.0, %v1058
        %1060 = vmatprep.mubr.f32.mxu0 %v335
        %1061 = vmatmul.mubr.f32.gmra.mxu0 %v334
        %v1062 = vpop.f32.mrf.mxu0
        %v1063 = vadd.f32 0.0, %v1062
        %v1064 = vpop.f32.mrf.mxu0
        %v1065 = vadd.f32 0.0, %v1064
        %1066 = vmatprep.mubr.f32.mxu0 %v339
        %1067 = vmatmul.mubr.f32.gmra.mxu0 %v338
        %v1068 = vpop.f32.mrf.mxu0
        %v1069 = vadd.f32 0.0, %v1068
        %v1070 = vpop.f32.mrf.mxu0
        %v1071 = vadd.f32 0.0, %v1070
        %1072 = vmatprep.mubr.f32.mxu0 %v343
        %1073 = vmatmul.mubr.f32.gmra.mxu0 %v342
        %v1074 = vpop.f32.mrf.mxu0
        %v1075 = vadd.f32 0.0, %v1074
        %v1076 = vpop.f32.mrf.mxu0
        %v1077 = vadd.f32 0.0, %v1076
        %1078 = vmatprep.mubr.f32.mxu0 %v347
        %1079 = vmatmul.mubr.f32.gmra.mxu0 %v346
        %v1080 = vpop.f32.mrf.mxu0
        %v1081 = vadd.f32 0.0, %v1080
        %v1082 = vpop.f32.mrf.mxu0
        %v1083 = vadd.f32 0.0, %v1082
        %1084 = vdwg.mxu0
        %1085 = vmatprep.subr.mxu0 %v821
        %1086 = vmatpush1.msra.mxu0 %v820
        %1087 = vmatprep.subr.mxu0 %v811
        %1088 = vmatpush1.msra.mxu0 %v810
        %1089 = vmatprep.subr.mxu0 %v801
        %1090 = vmatpush1.msra.mxu0 %v800
        %1091 = vmatprep.subr.mxu0 %v791
        %1092 = vmatpush1.msra.mxu0 %v790
        %1093 = vmatprep.subr.mxu0 %v781
        %1094 = vmatpush1.msra.mxu0 %v780
        %1095 = vmatprep.subr.mxu0 %v771
        %1096 = vmatpush1.msra.mxu0 %v770
        %1097 = vmatprep.subr.mxu0 %v761
        %1098 = vmatpush1.msra.mxu0 %v760
        %1099 = vmatprep.subr.mxu0 %v751
        %1100 = vmatpush1.msra.mxu0 %v750
        %1101 = vmatprep.subr.mxu0 %v741
        %1102 = vmatpush1.msra.mxu0 %v740
        %1103 = vmatprep.subr.mxu0 %v731
        %1104 = vmatpush1.msra.mxu0 %v730
        %1105 = vmatprep.subr.mxu0 %v721
        %1106 = vmatpush1.msra.mxu0 %v720
        %1107 = vmatprep.subr.mxu0 %v711
        %1108 = vmatpush1.msra.mxu0 %v710
        %1109 = vmatprep.subr.mxu0 %v701
        %1110 = vmatpush1.msra.mxu0 %v700
        %1111 = vmatprep.subr.mxu0 %v691
        %1112 = vmatpush1.msra.mxu0 %v690
        %1113 = vmatprep.subr.mxu0 %v681
        %1114 = vmatpush1.msra.mxu0 %v680
        %1115 = vmatprep.subr.mxu0 %v671
        %1116 = vmatpush1.msra.mxu0 %v670
        %1117 = vmatprep.subr.mxu0 %v981
        %1118 = vmatpush2.msra.mxu0 %v980
        %1119 = vmatprep.subr.mxu0 %v971
        %1120 = vmatpush2.msra.mxu0 %v970
        %1121 = vmatprep.subr.mxu0 %v961
        %1122 = vmatpush2.msra.mxu0 %v960
        %1123 = vmatprep.subr.mxu0 %v951
        %1124 = vmatpush2.msra.mxu0 %v950
        %1125 = vmatprep.subr.mxu0 %v941
        %1126 = vmatpush2.msra.mxu0 %v940
        %1127 = vmatprep.subr.mxu0 %v931
        %1128 = vmatpush2.msra.mxu0 %v930
        %1129 = vmatprep.subr.mxu0 %v921
        %1130 = vmatpush2.msra.mxu0 %v920
        %1131 = vmatprep.subr.mxu0 %v911
        %1132 = vmatpush2.msra.mxu0 %v910
        %1133 = vmatprep.subr.mxu0 %v901
        %1134 = vmatpush2.msra.mxu0 %v900
        %1135 = vmatprep.subr.mxu0 %v891
        %1136 = vmatpush2.msra.mxu0 %v890
        %1137 = vmatprep.subr.mxu0 %v881
        %1138 = vmatpush2.msra.mxu0 %v880
        %1139 = vmatprep.subr.mxu0 %v871
        %1140 = vmatpush2.msra.mxu0 %v870
        %1141 = vmatprep.subr.mxu0 %v861
        %1142 = vmatpush2.msra.mxu0 %v860
        %1143 = vmatprep.subr.mxu0 %v851
        %1144 = vmatpush2.msra.mxu0 %v850
        %1145 = vmatprep.subr.mxu0 %v841
        %1146 = vmatpush2.msra.mxu0 %v840
        %1147 = vmatprep.subr.mxu0 %v831
        %1148 = vmatpush2.msra.mxu0 %v830
        %1149 = vmatprep.mubr.f32.mxu0 %v333
        %1150 = vmatmul.mubr.f32.gmra.mxu0 %v332
        %v1151 = vpop.f32.mrf.mxu0
        %v1152 = vadd.f32 %v1057, %v1151
        %v1153 = vpop.f32.mrf.mxu0
        %v1154 = vadd.f32 %v1059, %v1153
        %1155 = vmatprep.mubr.f32.mxu0 %v337
        %1156 = vmatmul.mubr.f32.gmra.mxu0 %v336
        %v1157 = vpop.f32.mrf.mxu0
        %v1158 = vadd.f32 %v1063, %v1157
        %v1159 = vpop.f32.mrf.mxu0
        %v1160 = vadd.f32 %v1065, %v1159
        %1161 = vmatprep.mubr.f32.mxu0 %v341
        %1162 = vmatmul.mubr.f32.gmra.mxu0 %v340
        %v1163 = vpop.f32.mrf.mxu0
        %v1164 = vadd.f32 %v1069, %v1163
        %v1165 = vpop.f32.mrf.mxu0
        %v1166 = vadd.f32 %v1071, %v1165
        %1167 = vmatprep.mubr.f32.mxu0 %v345
        %1168 = vmatmul.mubr.f32.gmra.mxu0 %v344
        %v1169 = vpop.f32.mrf.mxu0
        %v1170 = vadd.f32 %v1075, %v1169
        %v1171 = vpop.f32.mrf.mxu0
        %v1172 = vadd.f32 %v1077, %v1171
        %1173 = vmatprep.mubr.f32.mxu0 %v349
        %1174 = vmatmul.mubr.f32.gmra.mxu0 %v348
        %v1175 = vpop.f32.mrf.mxu0
        %v1176 = vadd.f32 %v1081, %v1175
        %v1177 = vpop.f32.mrf.mxu0
        %v1178 = vadd.f32 %v1083, %v1177
        %1179 = vdwg.mxu0
        %1180 = vmatprep.subr.mxu0 %v503
        %1181 = vmatpush1.msra.mxu0 %v502
        %1182 = vmatprep.subr.mxu0 %v493
        %1183 = vmatpush1.msra.mxu0 %v492
        %1184 = vmatprep.subr.mxu0 %v483
        %1185 = vmatpush1.msra.mxu0 %v482
        %1186 = vmatprep.subr.mxu0 %v473
        %1187 = vmatpush1.msra.mxu0 %v472
        %1188 = vmatprep.subr.mxu0 %v463
        %1189 = vmatpush1.msra.mxu0 %v462
        %1190 = vmatprep.subr.mxu0 %v453
        %1191 = vmatpush1.msra.mxu0 %v452
        %1192 = vmatprep.subr.mxu0 %v443
        %1193 = vmatpush1.msra.mxu0 %v442
        %1194 = vmatprep.subr.mxu0 %v433
        %1195 = vmatpush1.msra.mxu0 %v432
        %1196 = vmatprep.subr.mxu0 %v423
        %1197 = vmatpush1.msra.mxu0 %v422
        %1198 = vmatprep.subr.mxu0 %v413
        %1199 = vmatpush1.msra.mxu0 %v412
        %1200 = vmatprep.subr.mxu0 %v403
        %1201 = vmatpush1.msra.mxu0 %v402
        %1202 = vmatprep.subr.mxu0 %v393
        %1203 = vmatpush1.msra.mxu0 %v392
        %1204 = vmatprep.subr.mxu0 %v383
        %1205 = vmatpush1.msra.mxu0 %v382
        %1206 = vmatprep.subr.mxu0 %v373
        %1207 = vmatpush1.msra.mxu0 %v372
        %1208 = vmatprep.subr.mxu0 %v363
        %1209 = vmatpush1.msra.mxu0 %v362
        %1210 = vmatprep.subr.mxu0 %v353
        %1211 = vmatpush1.msra.mxu0 %v352
        %1212 = vmatprep.subr.mxu0 %v663
        %1213 = vmatpush2.msra.mxu0 %v662
        %1214 = vmatprep.subr.mxu0 %v653
        %1215 = vmatpush2.msra.mxu0 %v652
        %1216 = vmatprep.subr.mxu0 %v643
        %1217 = vmatpush2.msra.mxu0 %v642
        %1218 = vmatprep.subr.mxu0 %v633
        %1219 = vmatpush2.msra.mxu0 %v632
        %1220 = vmatprep.subr.mxu0 %v623
        %1221 = vmatpush2.msra.mxu0 %v622
        %1222 = vmatprep.subr.mxu0 %v613
        %1223 = vmatpush2.msra.mxu0 %v612
        %1224 = vmatprep.subr.mxu0 %v603
        %1225 = vmatpush2.msra.mxu0 %v602
        %1226 = vmatprep.subr.mxu0 %v593
        %1227 = vmatpush2.msra.mxu0 %v592
        %1228 = vmatprep.subr.mxu0 %v583
        %1229 = vmatpush2.msra.mxu0 %v582
        %1230 = vmatprep.subr.mxu0 %v573
        %1231 = vmatpush2.msra.mxu0 %v572
        %1232 = vmatprep.subr.mxu0 %v563
        %1233 = vmatpush2.msra.mxu0 %v562
        %1234 = vmatprep.subr.mxu0 %v553
        %1235 = vmatpush2.msra.mxu0 %v552
        %1236 = vmatprep.subr.mxu0 %v543
        %1237 = vmatpush2.msra.mxu0 %v542
        %1238 = vmatprep.subr.mxu0 %v533
        %1239 = vmatpush2.msra.mxu0 %v532
        %1240 = vmatprep.subr.mxu0 %v523
        %1241 = vmatpush2.msra.mxu0 %v522
        %1242 = vmatprep.subr.mxu0 %v513
        %1243 = vmatpush2.msra.mxu0 %v512
        %1244 = vmatprep.mubr.f32.mxu0 %v331
        %1245 = vmatmul.mubr.f32.gmra.mxu0 %v330
        %v1246 = vpop.f32.mrf.mxu0
        %v1247 = vadd.f32 0.0, %v1246
        %v1248 = vpop.f32.mrf.mxu0
        %v1249 = vadd.f32 0.0, %v1248
        %1250 = vmatprep.mubr.f32.mxu0 %v335
        %1251 = vmatmul.mubr.f32.gmra.mxu0 %v334
        %v1252 = vpop.f32.mrf.mxu0
        %v1253 = vadd.f32 0.0, %v1252
        %v1254 = vpop.f32.mrf.mxu0
        %v1255 = vadd.f32 0.0, %v1254
        %1256 = vmatprep.mubr.f32.mxu0 %v339
        %1257 = vmatmul.mubr.f32.gmra.mxu0 %v338
        %v1258 = vpop.f32.mrf.mxu0
        %v1259 = vadd.f32 0.0, %v1258
        %v1260 = vpop.f32.mrf.mxu0
        %v1261 = vadd.f32 0.0, %v1260
        %1262 = vmatprep.mubr.f32.mxu0 %v343
        %1263 = vmatmul.mubr.f32.gmra.mxu0 %v342
        %v1264 = vpop.f32.mrf.mxu0
        %v1265 = vadd.f32 0.0, %v1264
        %v1266 = vpop.f32.mrf.mxu0
        %v1267 = vadd.f32 0.0, %v1266
        %1268 = vmatprep.mubr.f32.mxu0 %v347
        %1269 = vmatmul.mubr.f32.gmra.mxu0 %v346
        %v1270 = vpop.f32.mrf.mxu0
        %v1271 = vadd.f32 0.0, %v1270
        %v1272 = vpop.f32.mrf.mxu0
        %v1273 = vadd.f32 0.0, %v1272
        %1274 = vdwg.mxu0
        %1275 = vmatprep.subr.mxu0 %v823
        %1276 = vmatpush1.msra.mxu0 %v822
        %1277 = vmatprep.subr.mxu0 %v813
        %1278 = vmatpush1.msra.mxu0 %v812
        %1279 = vmatprep.subr.mxu0 %v803
        %1280 = vmatpush1.msra.mxu0 %v802
        %1281 = vmatprep.subr.mxu0 %v793
        %1282 = vmatpush1.msra.mxu0 %v792
        %1283 = vmatprep.subr.mxu0 %v783
        %1284 = vmatpush1.msra.mxu0 %v782
        %1285 = vmatprep.subr.mxu0 %v773
        %1286 = vmatpush1.msra.mxu0 %v772
        %1287 = vmatprep.subr.mxu0 %v763
        %1288 = vmatpush1.msra.mxu0 %v762
        %1289 = vmatprep.subr.mxu0 %v753
        %1290 = vmatpush1.msra.mxu0 %v752
        %1291 = vmatprep.subr.mxu0 %v743
        %1292 = vmatpush1.msra.mxu0 %v742
        %1293 = vmatprep.subr.mxu0 %v733
        %1294 = vmatpush1.msra.mxu0 %v732
        %1295 = vmatprep.subr.mxu0 %v723
        %1296 = vmatpush1.msra.mxu0 %v722
        %1297 = vmatprep.subr.mxu0 %v713
        %1298 = vmatpush1.msra.mxu0 %v712
        %1299 = vmatprep.subr.mxu0 %v703
        %1300 = vmatpush1.msra.mxu0 %v702
        %1301 = vmatprep.subr.mxu0 %v693
        %1302 = vmatpush1.msra.mxu0 %v692
        %1303 = vmatprep.subr.mxu0 %v683
        %1304 = vmatpush1.msra.mxu0 %v682
        %1305 = vmatprep.subr.mxu0 %v673
        %1306 = vmatpush1.msra.mxu0 %v672
        %1307 = vmatprep.subr.mxu0 %v983
        %1308 = vmatpush2.msra.mxu0 %v982
        %1309 = vmatprep.subr.mxu0 %v973
        %1310 = vmatpush2.msra.mxu0 %v972
        %1311 = vmatprep.subr.mxu0 %v963
        %1312 = vmatpush2.msra.mxu0 %v962
        %1313 = vmatprep.subr.mxu0 %v953
        %1314 = vmatpush2.msra.mxu0 %v952
        %1315 = vmatprep.subr.mxu0 %v943
        %1316 = vmatpush2.msra.mxu0 %v942
        %1317 = vmatprep.subr.mxu0 %v933
        %1318 = vmatpush2.msra.mxu0 %v932
        %1319 = vmatprep.subr.mxu0 %v923
        %1320 = vmatpush2.msra.mxu0 %v922
        %1321 = vmatprep.subr.mxu0 %v913
        %1322 = vmatpush2.msra.mxu0 %v912
        %1323 = vmatprep.subr.mxu0 %v903
        %1324 = vmatpush2.msra.mxu0 %v902
        %1325 = vmatprep.subr.mxu0 %v893
        %1326 = vmatpush2.msra.mxu0 %v892
        %1327 = vmatprep.subr.mxu0 %v883
        %1328 = vmatpush2.msra.mxu0 %v882
        %1329 = vmatprep.subr.mxu0 %v873
        %1330 = vmatpush2.msra.mxu0 %v872
        %1331 = vmatprep.subr.mxu0 %v863
        %1332 = vmatpush2.msra.mxu0 %v862
        %1333 = vmatprep.subr.mxu0 %v853
        %1334 = vmatpush2.msra.mxu0 %v852
        %1335 = vmatprep.subr.mxu0 %v843
        %1336 = vmatpush2.msra.mxu0 %v842
        %1337 = vmatprep.subr.mxu0 %v833
        %1338 = vmatpush2.msra.mxu0 %v832
        %1339 = vmatprep.mubr.f32.mxu0 %v333
        %1340 = vmatmul.mubr.f32.gmra.mxu0 %v332
        %v1341 = vpop.f32.mrf.mxu0
        %v1342 = vadd.f32 %v1247, %v1341
        %v1343 = vpop.f32.mrf.mxu0
        %v1344 = vadd.f32 %v1249, %v1343
        %1345 = vmatprep.mubr.f32.mxu0 %v337
        %1346 = vmatmul.mubr.f32.gmra.mxu0 %v336
        %v1347 = vpop.f32.mrf.mxu0
        %v1348 = vadd.f32 %v1253, %v1347
        %v1349 = vpop.f32.mrf.mxu0
        %v1350 = vadd.f32 %v1255, %v1349
        %1351 = vmatprep.mubr.f32.mxu0 %v341
        %1352 = vmatmul.mubr.f32.gmra.mxu0 %v340
        %v1353 = vpop.f32.mrf.mxu0
        %v1354 = vadd.f32 %v1259, %v1353
        %v1355 = vpop.f32.mrf.mxu0
        %v1356 = vadd.f32 %v1261, %v1355
        %1357 = vmatprep.mubr.f32.mxu0 %v345
        %1358 = vmatmul.mubr.f32.gmra.mxu0 %v344
        %v1359 = vpop.f32.mrf.mxu0
        %v1360 = vadd.f32 %v1265, %v1359
        %v1361 = vpop.f32.mrf.mxu0
        %v1362 = vadd.f32 %v1267, %v1361
        %1363 = vmatprep.mubr.f32.mxu0 %v349
        %1364 = vmatmul.mubr.f32.gmra.mxu0 %v348
        %v1365 = vpop.f32.mrf.mxu0
        %v1366 = vadd.f32 %v1271, %v1365
        %v1367 = vpop.f32.mrf.mxu0
        %v1368 = vadd.f32 %v1273, %v1367
        %1369 = vdwg.mxu0
        %1370 = vmatprep.subr.mxu0 %v505
        %1371 = vmatpush1.msra.mxu0 %v504
        %1372 = vmatprep.subr.mxu0 %v495
        %1373 = vmatpush1.msra.mxu0 %v494
        %1374 = vmatprep.subr.mxu0 %v485
        %1375 = vmatpush1.msra.mxu0 %v484
        %1376 = vmatprep.subr.mxu0 %v475
        %1377 = vmatpush1.msra.mxu0 %v474
        %1378 = vmatprep.subr.mxu0 %v465
        %1379 = vmatpush1.msra.mxu0 %v464
        %1380 = vmatprep.subr.mxu0 %v455
        %1381 = vmatpush1.msra.mxu0 %v454
        %1382 = vmatprep.subr.mxu0 %v445
        %1383 = vmatpush1.msra.mxu0 %v444
        %1384 = vmatprep.subr.mxu0 %v435
        %1385 = vmatpush1.msra.mxu0 %v434
        %1386 = vmatprep.subr.mxu0 %v425
        %1387 = vmatpush1.msra.mxu0 %v424
        %1388 = vmatprep.subr.mxu0 %v415
        %1389 = vmatpush1.msra.mxu0 %v414
        %1390 = vmatprep.subr.mxu0 %v405
        %1391 = vmatpush1.msra.mxu0 %v404
        %1392 = vmatprep.subr.mxu0 %v395
        %1393 = vmatpush1.msra.mxu0 %v394
        %1394 = vmatprep.subr.mxu0 %v385
        %1395 = vmatpush1.msra.mxu0 %v384
        %1396 = vmatprep.subr.mxu0 %v375
        %1397 = vmatpush1.msra.mxu0 %v374
        %1398 = vmatprep.subr.mxu0 %v365
        %1399 = vmatpush1.msra.mxu0 %v364
        %1400 = vmatprep.subr.mxu0 %v355
        %1401 = vmatpush1.msra.mxu0 %v354
        %1402 = vmatprep.subr.mxu0 %v665
        %1403 = vmatpush2.msra.mxu0 %v664
        %1404 = vmatprep.subr.mxu0 %v655
        %1405 = vmatpush2.msra.mxu0 %v654
        %1406 = vmatprep.subr.mxu0 %v645
        %1407 = vmatpush2.msra.mxu0 %v644
        %1408 = vmatprep.subr.mxu0 %v635
        %1409 = vmatpush2.msra.mxu0 %v634
        %1410 = vmatprep.subr.mxu0 %v625
        %1411 = vmatpush2.msra.mxu0 %v624
        %1412 = vmatprep.subr.mxu0 %v615
        %1413 = vmatpush2.msra.mxu0 %v614
        %1414 = vmatprep.subr.mxu0 %v605
        %1415 = vmatpush2.msra.mxu0 %v604
        %1416 = vmatprep.subr.mxu0 %v595
        %1417 = vmatpush2.msra.mxu0 %v594
        %1418 = vmatprep.subr.mxu0 %v585
        %1419 = vmatpush2.msra.mxu0 %v584
        %1420 = vmatprep.subr.mxu0 %v575
        %1421 = vmatpush2.msra.mxu0 %v574
        %1422 = vmatprep.subr.mxu0 %v565
        %1423 = vmatpush2.msra.mxu0 %v564
        %1424 = vmatprep.subr.mxu0 %v555
        %1425 = vmatpush2.msra.mxu0 %v554
        %1426 = vmatprep.subr.mxu0 %v545
        %1427 = vmatpush2.msra.mxu0 %v544
        %1428 = vmatprep.subr.mxu0 %v535
        %1429 = vmatpush2.msra.mxu0 %v534
        %1430 = vmatprep.subr.mxu0 %v525
        %1431 = vmatpush2.msra.mxu0 %v524
        %1432 = vmatprep.subr.mxu0 %v515
        %1433 = vmatpush2.msra.mxu0 %v514
        %1434 = vmatprep.mubr.f32.mxu0 %v331
        %1435 = vmatmul.mubr.f32.gmra.mxu0 %v330
        %v1436 = vpop.f32.mrf.mxu0
        %v1437 = vadd.f32 0.0, %v1436
        %v1438 = vpop.f32.mrf.mxu0
        %v1439 = vadd.f32 0.0, %v1438
        %1440 = vmatprep.mubr.f32.mxu0 %v335
        %1441 = vmatmul.mubr.f32.gmra.mxu0 %v334
        %v1442 = vpop.f32.mrf.mxu0
        %v1443 = vadd.f32 0.0, %v1442
        %v1444 = vpop.f32.mrf.mxu0
        %v1445 = vadd.f32 0.0, %v1444
        %1446 = vmatprep.mubr.f32.mxu0 %v339
        %1447 = vmatmul.mubr.f32.gmra.mxu0 %v338
        %v1448 = vpop.f32.mrf.mxu0
        %v1449 = vadd.f32 0.0, %v1448
        %v1450 = vpop.f32.mrf.mxu0
        %v1451 = vadd.f32 0.0, %v1450
        %1452 = vmatprep.mubr.f32.mxu0 %v343
        %1453 = vmatmul.mubr.f32.gmra.mxu0 %v342
        %v1454 = vpop.f32.mrf.mxu0
        %v1455 = vadd.f32 0.0, %v1454
        %v1456 = vpop.f32.mrf.mxu0
        %v1457 = vadd.f32 0.0, %v1456
        %1458 = vmatprep.mubr.f32.mxu0 %v347
        %1459 = vmatmul.mubr.f32.gmra.mxu0 %v346
        %v1460 = vpop.f32.mrf.mxu0
        %v1461 = vadd.f32 0.0, %v1460
        %v1462 = vpop.f32.mrf.mxu0
        %v1463 = vadd.f32 0.0, %v1462
        %1464 = vdwg.mxu0
        %1465 = vmatprep.subr.mxu0 %v825
        %1466 = vmatpush1.msra.mxu0 %v824
        %1467 = vmatprep.subr.mxu0 %v815
        %1468 = vmatpush1.msra.mxu0 %v814
        %1469 = vmatprep.subr.mxu0 %v805
        %1470 = vmatpush1.msra.mxu0 %v804
        %1471 = vmatprep.subr.mxu0 %v795
        %1472 = vmatpush1.msra.mxu0 %v794
        %1473 = vmatprep.subr.mxu0 %v785
        %1474 = vmatpush1.msra.mxu0 %v784
        %1475 = vmatprep.subr.mxu0 %v775
        %1476 = vmatpush1.msra.mxu0 %v774
        %1477 = vmatprep.subr.mxu0 %v765
        %1478 = vmatpush1.msra.mxu0 %v764
        %1479 = vmatprep.subr.mxu0 %v755
        %1480 = vmatpush1.msra.mxu0 %v754
        %1481 = vmatprep.subr.mxu0 %v745
        %1482 = vmatpush1.msra.mxu0 %v744
        %1483 = vmatprep.subr.mxu0 %v735
        %1484 = vmatpush1.msra.mxu0 %v734
        %1485 = vmatprep.subr.mxu0 %v725
        %1486 = vmatpush1.msra.mxu0 %v724
        %1487 = vmatprep.subr.mxu0 %v715
        %1488 = vmatpush1.msra.mxu0 %v714
        %1489 = vmatprep.subr.mxu0 %v705
        %1490 = vmatpush1.msra.mxu0 %v704
        %1491 = vmatprep.subr.mxu0 %v695
        %1492 = vmatpush1.msra.mxu0 %v694
        %1493 = vmatprep.subr.mxu0 %v685
        %1494 = vmatpush1.msra.mxu0 %v684
        %1495 = vmatprep.subr.mxu0 %v675
        %1496 = vmatpush1.msra.mxu0 %v674
        %1497 = vmatprep.subr.mxu0 %v985
        %1498 = vmatpush2.msra.mxu0 %v984
        %1499 = vmatprep.subr.mxu0 %v975
        %1500 = vmatpush2.msra.mxu0 %v974
        %1501 = vmatprep.subr.mxu0 %v965
        %1502 = vmatpush2.msra.mxu0 %v964
        %1503 = vmatprep.subr.mxu0 %v955
        %1504 = vmatpush2.msra.mxu0 %v954
        %1505 = vmatprep.subr.mxu0 %v945
        %1506 = vmatpush2.msra.mxu0 %v944
        %1507 = vmatprep.subr.mxu0 %v935
        %1508 = vmatpush2.msra.mxu0 %v934
        %1509 = vmatprep.subr.mxu0 %v925
        %1510 = vmatpush2.msra.mxu0 %v924
        %1511 = vmatprep.subr.mxu0 %v915
        %1512 = vmatpush2.msra.mxu0 %v914
        %1513 = vmatprep.subr.mxu0 %v905
        %1514 = vmatpush2.msra.mxu0 %v904
        %1515 = vmatprep.subr.mxu0 %v895
        %1516 = vmatpush2.msra.mxu0 %v894
        %1517 = vmatprep.subr.mxu0 %v885
        %1518 = vmatpush2.msra.mxu0 %v884
        %1519 = vmatprep.subr.mxu0 %v875
        %1520 = vmatpush2.msra.mxu0 %v874
        %1521 = vmatprep.subr.mxu0 %v865
        %1522 = vmatpush2.msra.mxu0 %v864
        %1523 = vmatprep.subr.mxu0 %v855
        %1524 = vmatpush2.msra.mxu0 %v854
        %1525 = vmatprep.subr.mxu0 %v845
        %1526 = vmatpush2.msra.mxu0 %v844
        %1527 = vmatprep.subr.mxu0 %v835
        %1528 = vmatpush2.msra.mxu0 %v834
        %1529 = vmatprep.mubr.f32.mxu0 %v333
        %1530 = vmatmul.mubr.f32.gmra.mxu0 %v332
        %v1531 = vpop.f32.mrf.mxu0
        %v1532 = vadd.f32 %v1437, %v1531
        %v1533 = vpop.f32.mrf.mxu0
        %v1534 = vadd.f32 %v1439, %v1533
        %1535 = vmatprep.mubr.f32.mxu0 %v337
        %1536 = vmatmul.mubr.f32.gmra.mxu0 %v336
        %v1537 = vpop.f32.mrf.mxu0
        %v1538 = vadd.f32 %v1443, %v1537
        %v1539 = vpop.f32.mrf.mxu0
        %v1540 = vadd.f32 %v1445, %v1539
        %1541 = vmatprep.mubr.f32.mxu0 %v341
        %1542 = vmatmul.mubr.f32.gmra.mxu0 %v340
        %v1543 = vpop.f32.mrf.mxu0
        %v1544 = vadd.f32 %v1449, %v1543
        %v1545 = vpop.f32.mrf.mxu0
        %v1546 = vadd.f32 %v1451, %v1545
        %1547 = vmatprep.mubr.f32.mxu0 %v345
        %1548 = vmatmul.mubr.f32.gmra.mxu0 %v344
        %v1549 = vpop.f32.mrf.mxu0
        %v1550 = vadd.f32 %v1455, %v1549
        %v1551 = vpop.f32.mrf.mxu0
        %v1552 = vadd.f32 %v1457, %v1551
        %1553 = vmatprep.mubr.f32.mxu0 %v349
        %1554 = vmatmul.mubr.f32.gmra.mxu0 %v348
        %v1555 = vpop.f32.mrf.mxu0
        %v1556 = vadd.f32 %v1461, %v1555
        %v1557 = vpop.f32.mrf.mxu0
        %v1558 = vadd.f32 %v1463, %v1557
        %1559 = vdwg.mxu0
        %1560 = vmatprep.subr.mxu0 %v507
        %1561 = vmatpush1.msra.mxu0 %v506
        %1562 = vmatprep.subr.mxu0 %v497
        %1563 = vmatpush1.msra.mxu0 %v496
        %1564 = vmatprep.subr.mxu0 %v487
        %1565 = vmatpush1.msra.mxu0 %v486
        %1566 = vmatprep.subr.mxu0 %v477
        %1567 = vmatpush1.msra.mxu0 %v476
        %1568 = vmatprep.subr.mxu0 %v467
        %1569 = vmatpush1.msra.mxu0 %v466
        %1570 = vmatprep.subr.mxu0 %v457
        %1571 = vmatpush1.msra.mxu0 %v456
        %1572 = vmatprep.subr.mxu0 %v447
        %1573 = vmatpush1.msra.mxu0 %v446
        %1574 = vmatprep.subr.mxu0 %v437
        %1575 = vmatpush1.msra.mxu0 %v436
        %1576 = vmatprep.subr.mxu0 %v427
        %1577 = vmatpush1.msra.mxu0 %v426
        %1578 = vmatprep.subr.mxu0 %v417
        %1579 = vmatpush1.msra.mxu0 %v416
        %1580 = vmatprep.subr.mxu0 %v407
        %1581 = vmatpush1.msra.mxu0 %v406
        %1582 = vmatprep.subr.mxu0 %v397
        %1583 = vmatpush1.msra.mxu0 %v396
        %1584 = vmatprep.subr.mxu0 %v387
        %1585 = vmatpush1.msra.mxu0 %v386
        %1586 = vmatprep.subr.mxu0 %v377
        %1587 = vmatpush1.msra.mxu0 %v376
        %1588 = vmatprep.subr.mxu0 %v367
        %1589 = vmatpush1.msra.mxu0 %v366
        %1590 = vmatprep.subr.mxu0 %v357
        %1591 = vmatpush1.msra.mxu0 %v356
        %1592 = vmatprep.subr.mxu0 %v667
        %1593 = vmatpush2.msra.mxu0 %v666
        %1594 = vmatprep.subr.mxu0 %v657
        %1595 = vmatpush2.msra.mxu0 %v656
        %1596 = vmatprep.subr.mxu0 %v647
        %1597 = vmatpush2.msra.mxu0 %v646
        %1598 = vmatprep.subr.mxu0 %v637
        %1599 = vmatpush2.msra.mxu0 %v636
        %1600 = vmatprep.subr.mxu0 %v627
        %1601 = vmatpush2.msra.mxu0 %v626
        %1602 = vmatprep.subr.mxu0 %v617
        %1603 = vmatpush2.msra.mxu0 %v616
        %1604 = vmatprep.subr.mxu0 %v607
        %1605 = vmatpush2.msra.mxu0 %v606
        %1606 = vmatprep.subr.mxu0 %v597
        %1607 = vmatpush2.msra.mxu0 %v596
        %1608 = vmatprep.subr.mxu0 %v587
        %1609 = vmatpush2.msra.mxu0 %v586
        %1610 = vmatprep.subr.mxu0 %v577
        %1611 = vmatpush2.msra.mxu0 %v576
        %1612 = vmatprep.subr.mxu0 %v567
        %1613 = vmatpush2.msra.mxu0 %v566
        %1614 = vmatprep.subr.mxu0 %v557
        %1615 = vmatpush2.msra.mxu0 %v556
        %1616 = vmatprep.subr.mxu0 %v547
        %1617 = vmatpush2.msra.mxu0 %v546
        %1618 = vmatprep.subr.mxu0 %v537
        %1619 = vmatpush2.msra.mxu0 %v536
        %1620 = vmatprep.subr.mxu0 %v527
        %1621 = vmatpush2.msra.mxu0 %v526
        %1622 = vmatprep.subr.mxu0 %v517
        %1623 = vmatpush2.msra.mxu0 %v516
        %1624 = vmatprep.mubr.f32.mxu0 %v331
        %1625 = vmatmul.mubr.f32.gmra.mxu0 %v330
        %v1626 = vpop.f32.mrf.mxu0
        %v1627 = vadd.f32 0.0, %v1626
        %v1628 = vpop.f32.mrf.mxu0
        %v1629 = vadd.f32 0.0, %v1628
        %1630 = vmatprep.mubr.f32.mxu0 %v335
        %1631 = vmatmul.mubr.f32.gmra.mxu0 %v334
        %v1632 = vpop.f32.mrf.mxu0
        %v1633 = vadd.f32 0.0, %v1632
        %v1634 = vpop.f32.mrf.mxu0
        %v1635 = vadd.f32 0.0, %v1634
        %1636 = vmatprep.mubr.f32.mxu0 %v339
        %1637 = vmatmul.mubr.f32.gmra.mxu0 %v338
        %v1638 = vpop.f32.mrf.mxu0
        %v1639 = vadd.f32 0.0, %v1638
        %v1640 = vpop.f32.mrf.mxu0
        %v1641 = vadd.f32 0.0, %v1640
        %1642 = vmatprep.mubr.f32.mxu0 %v343
        %1643 = vmatmul.mubr.f32.gmra.mxu0 %v342
        %v1644 = vpop.f32.mrf.mxu0
        %v1645 = vadd.f32 0.0, %v1644
        %v1646 = vpop.f32.mrf.mxu0
        %v1647 = vadd.f32 0.0, %v1646
        %1648 = vmatprep.mubr.f32.mxu0 %v347
        %1649 = vmatmul.mubr.f32.gmra.mxu0 %v346
        %v1650 = vpop.f32.mrf.mxu0
        %v1651 = vadd.f32 0.0, %v1650
        %v1652 = vpop.f32.mrf.mxu0
        %v1653 = vadd.f32 0.0, %v1652
        %1654 = vdwg.mxu0
        %1655 = vmatprep.subr.mxu0 %v827
        %1656 = vmatpush1.msra.mxu0 %v826
        %1657 = vmatprep.subr.mxu0 %v817
        %1658 = vmatpush1.msra.mxu0 %v816
        %1659 = vmatprep.subr.mxu0 %v807
        %1660 = vmatpush1.msra.mxu0 %v806
        %1661 = vmatprep.subr.mxu0 %v797
        %1662 = vmatpush1.msra.mxu0 %v796
        %1663 = vmatprep.subr.mxu0 %v787
        %1664 = vmatpush1.msra.mxu0 %v786
        %1665 = vmatprep.subr.mxu0 %v777
        %1666 = vmatpush1.msra.mxu0 %v776
        %1667 = vmatprep.subr.mxu0 %v767
        %1668 = vmatpush1.msra.mxu0 %v766
        %1669 = vmatprep.subr.mxu0 %v757
        %1670 = vmatpush1.msra.mxu0 %v756
        %1671 = vmatprep.subr.mxu0 %v747
        %1672 = vmatpush1.msra.mxu0 %v746
        %1673 = vmatprep.subr.mxu0 %v737
        %1674 = vmatpush1.msra.mxu0 %v736
        %1675 = vmatprep.subr.mxu0 %v727
        %1676 = vmatpush1.msra.mxu0 %v726
        %1677 = vmatprep.subr.mxu0 %v717
        %1678 = vmatpush1.msra.mxu0 %v716
        %1679 = vmatprep.subr.mxu0 %v707
        %1680 = vmatpush1.msra.mxu0 %v706
        %1681 = vmatprep.subr.mxu0 %v697
        %1682 = vmatpush1.msra.mxu0 %v696
        %1683 = vmatprep.subr.mxu0 %v687
        %1684 = vmatpush1.msra.mxu0 %v686
        %1685 = vmatprep.subr.mxu0 %v677
        %1686 = vmatpush1.msra.mxu0 %v676
        %1687 = vmatprep.subr.mxu0 %v987
        %1688 = vmatpush2.msra.mxu0 %v986
        %1689 = vmatprep.subr.mxu0 %v977
        %1690 = vmatpush2.msra.mxu0 %v976
        %1691 = vmatprep.subr.mxu0 %v967
        %1692 = vmatpush2.msra.mxu0 %v966
        %1693 = vmatprep.subr.mxu0 %v957
        %1694 = vmatpush2.msra.mxu0 %v956
        %1695 = vmatprep.subr.mxu0 %v947
        %1696 = vmatpush2.msra.mxu0 %v946
        %1697 = vmatprep.subr.mxu0 %v937
        %1698 = vmatpush2.msra.mxu0 %v936
        %1699 = vmatprep.subr.mxu0 %v927
        %1700 = vmatpush2.msra.mxu0 %v926
        %1701 = vmatprep.subr.mxu0 %v917
        %1702 = vmatpush2.msra.mxu0 %v916
        %1703 = vmatprep.subr.mxu0 %v907
        %1704 = vmatpush2.msra.mxu0 %v906
        %1705 = vmatprep.subr.mxu0 %v897
        %1706 = vmatpush2.msra.mxu0 %v896
        %1707 = vmatprep.subr.mxu0 %v887
        %1708 = vmatpush2.msra.mxu0 %v886
        %1709 = vmatprep.subr.mxu0 %v877
        %1710 = vmatpush2.msra.mxu0 %v876
        %1711 = vmatprep.subr.mxu0 %v867
        %1712 = vmatpush2.msra.mxu0 %v866
        %1713 = vmatprep.subr.mxu0 %v857
        %1714 = vmatpush2.msra.mxu0 %v856
        %1715 = vmatprep.subr.mxu0 %v847
        %1716 = vmatpush2.msra.mxu0 %v846
        %1717 = vmatprep.subr.mxu0 %v837
        %1718 = vmatpush2.msra.mxu0 %v836
        %1719 = vmatprep.mubr.f32.mxu0 %v333
        %1720 = vmatmul.mubr.f32.gmra.mxu0 %v332
        %v1721 = vpop.f32.mrf.mxu0
        %v1722 = vadd.f32 %v1627, %v1721
        %v1723 = vpop.f32.mrf.mxu0
        %v1724 = vadd.f32 %v1629, %v1723
        %1725 = vmatprep.mubr.f32.mxu0 %v337
        %1726 = vmatmul.mubr.f32.gmra.mxu0 %v336
        %v1727 = vpop.f32.mrf.mxu0
        %v1728 = vadd.f32 %v1633, %v1727
        %v1729 = vpop.f32.mrf.mxu0
        %v1730 = vadd.f32 %v1635, %v1729
        %1731 = vmatprep.mubr.f32.mxu0 %v341
        %1732 = vmatmul.mubr.f32.gmra.mxu0 %v340
        %v1733 = vpop.f32.mrf.mxu0
        %v1734 = vadd.f32 %v1639, %v1733
        %v1735 = vpop.f32.mrf.mxu0
        %v1736 = vadd.f32 %v1641, %v1735
        %1737 = vmatprep.mubr.f32.mxu0 %v345
        %1738 = vmatmul.mubr.f32.gmra.mxu0 %v344
        %v1739 = vpop.f32.mrf.mxu0
        %v1740 = vadd.f32 %v1645, %v1739
        %v1741 = vpop.f32.mrf.mxu0
        %v1742 = vadd.f32 %v1647, %v1741
        %1743 = vmatprep.mubr.f32.mxu0 %v349
        %1744 = vmatmul.mubr.f32.gmra.mxu0 %v348
        %v1745 = vpop.f32.mrf.mxu0
        %v1746 = vadd.f32 %v1651, %v1745
        %v1747 = vpop.f32.mrf.mxu0
        %v1748 = vadd.f32 %v1653, %v1747
        %1749 = vdwg.mxu0
        %1750 = vmatprep.subr.mxu0 %v509
        %1751 = vmatpush1.msra.mxu0 %v508
        %1752 = vmatprep.subr.mxu0 %v499
        %1753 = vmatpush1.msra.mxu0 %v498
        %1754 = vmatprep.subr.mxu0 %v489
        %1755 = vmatpush1.msra.mxu0 %v488
        %1756 = vmatprep.subr.mxu0 %v479
        %1757 = vmatpush1.msra.mxu0 %v478
        %1758 = vmatprep.subr.mxu0 %v469
        %1759 = vmatpush1.msra.mxu0 %v468
        %1760 = vmatprep.subr.mxu0 %v459
        %1761 = vmatpush1.msra.mxu0 %v458
        %1762 = vmatprep.subr.mxu0 %v449
        %1763 = vmatpush1.msra.mxu0 %v448
        %1764 = vmatprep.subr.mxu0 %v439
        %1765 = vmatpush1.msra.mxu0 %v438
        %1766 = vmatprep.subr.mxu0 %v429
        %1767 = vmatpush1.msra.mxu0 %v428
        %1768 = vmatprep.subr.mxu0 %v419
        %1769 = vmatpush1.msra.mxu0 %v418
        %1770 = vmatprep.subr.mxu0 %v409
        %1771 = vmatpush1.msra.mxu0 %v408
        %1772 = vmatprep.subr.mxu0 %v399
        %1773 = vmatpush1.msra.mxu0 %v398
        %1774 = vmatprep.subr.mxu0 %v389
        %1775 = vmatpush1.msra.mxu0 %v388
        %1776 = vmatprep.subr.mxu0 %v379
        %1777 = vmatpush1.msra.mxu0 %v378
        %1778 = vmatprep.subr.mxu0 %v369
        %1779 = vmatpush1.msra.mxu0 %v368
        %1780 = vmatprep.subr.mxu0 %v359
        %1781 = vmatpush1.msra.mxu0 %v358
        %1782 = vmatprep.subr.mxu0 %v669
        %1783 = vmatpush2.msra.mxu0 %v668
        %1784 = vmatprep.subr.mxu0 %v659
        %1785 = vmatpush2.msra.mxu0 %v658
        %1786 = vmatprep.subr.mxu0 %v649
        %1787 = vmatpush2.msra.mxu0 %v648
        %1788 = vmatprep.subr.mxu0 %v639
        %1789 = vmatpush2.msra.mxu0 %v638
        %1790 = vmatprep.subr.mxu0 %v629
        %1791 = vmatpush2.msra.mxu0 %v628
        %1792 = vmatprep.subr.mxu0 %v619
        %1793 = vmatpush2.msra.mxu0 %v618
        %1794 = vmatprep.subr.mxu0 %v609
        %1795 = vmatpush2.msra.mxu0 %v608
        %1796 = vmatprep.subr.mxu0 %v599
        %1797 = vmatpush2.msra.mxu0 %v598
        %1798 = vmatprep.subr.mxu0 %v589
        %1799 = vmatpush2.msra.mxu0 %v588
        %1800 = vmatprep.subr.mxu0 %v579
        %1801 = vmatpush2.msra.mxu0 %v578
        %1802 = vmatprep.subr.mxu0 %v569
        %1803 = vmatpush2.msra.mxu0 %v568
        %1804 = vmatprep.subr.mxu0 %v559
        %1805 = vmatpush2.msra.mxu0 %v558
        %1806 = vmatprep.subr.mxu0 %v549
        %1807 = vmatpush2.msra.mxu0 %v548
        %1808 = vmatprep.subr.mxu0 %v539
        %1809 = vmatpush2.msra.mxu0 %v538
        %1810 = vmatprep.subr.mxu0 %v529
        %1811 = vmatpush2.msra.mxu0 %v528
        %1812 = vmatprep.subr.mxu0 %v519
        %1813 = vmatpush2.msra.mxu0 %v518
        %1814 = vmatprep.mubr.f32.mxu0 %v331
        %1815 = vmatmul.mubr.f32.gmra.mxu0 %v330
        %v1816 = vpop.f32.mrf.mxu0
        %v1817 = vadd.f32 0.0, %v1816
        %v1818 = vpop.f32.mrf.mxu0
        %v1819 = vadd.f32 0.0, %v1818
        %1820 = vmatprep.mubr.f32.mxu0 %v335
        %1821 = vmatmul.mubr.f32.gmra.mxu0 %v334
        %v1822 = vpop.f32.mrf.mxu0
        %v1823 = vadd.f32 0.0, %v1822
        %v1824 = vpop.f32.mrf.mxu0
        %v1825 = vadd.f32 0.0, %v1824
        %1826 = vmatprep.mubr.f32.mxu0 %v339
        %1827 = vmatmul.mubr.f32.gmra.mxu0 %v338
        %v1828 = vpop.f32.mrf.mxu0
        %v1829 = vadd.f32 0.0, %v1828
        %v1830 = vpop.f32.mrf.mxu0
        %v1831 = vadd.f32 0.0, %v1830
        %1832 = vmatprep.mubr.f32.mxu0 %v343
        %1833 = vmatmul.mubr.f32.gmra.mxu0 %v342
        %v1834 = vpop.f32.mrf.mxu0
        %v1835 = vadd.f32 0.0, %v1834
        %v1836 = vpop.f32.mrf.mxu0
        %v1837 = vadd.f32 0.0, %v1836
        %1838 = vmatprep.mubr.f32.mxu0 %v347
        %1839 = vmatmul.mubr.f32.gmra.mxu0 %v346
        %v1840 = vpop.f32.mrf.mxu0
        %v1841 = vpop.f32.mrf.mxu0
        %1842 = vdwg.mxu0
        %1843 = vmatprep.subr.mxu0 %v829
        %1844 = vmatpush1.msra.mxu0 %v828
        %1845 = vmatprep.subr.mxu0 %v819
        %1846 = vmatpush1.msra.mxu0 %v818
        %1847 = vmatprep.subr.mxu0 %v809
        %1848 = vmatpush1.msra.mxu0 %v808
        %1849 = vmatprep.subr.mxu0 %v799
        %1850 = vmatpush1.msra.mxu0 %v798
        %1851 = vmatprep.subr.mxu0 %v789
        %1852 = vmatpush1.msra.mxu0 %v788
        %1853 = vmatprep.subr.mxu0 %v779
        %1854 = vmatpush1.msra.mxu0 %v778
        %1855 = vmatprep.subr.mxu0 %v769
        %1856 = vmatpush1.msra.mxu0 %v768
        %1857 = vmatprep.subr.mxu0 %v759
        %1858 = vmatpush1.msra.mxu0 %v758
        %1859 = vmatprep.subr.mxu0 %v749
        %1860 = vmatpush1.msra.mxu0 %v748
        %1861 = vmatprep.subr.mxu0 %v739
        %1862 = vmatpush1.msra.mxu0 %v738
        %1863 = vmatprep.subr.mxu0 %v729
        %1864 = vmatpush1.msra.mxu0 %v728
        %1865 = vmatprep.subr.mxu0 %v719
        %1866 = vmatpush1.msra.mxu0 %v718
        %1867 = vmatprep.subr.mxu0 %v709
        %1868 = vmatpush1.msra.mxu0 %v708
        %1869 = vmatprep.subr.mxu0 %v699
        %1870 = vmatpush1.msra.mxu0 %v698
        %1871 = vmatprep.subr.mxu0 %v689
        %1872 = vmatpush1.msra.mxu0 %v688
        %1873 = vmatprep.subr.mxu0 %v679
        %1874 = vmatpush1.msra.mxu0 %v678
        %1875 = vmatprep.subr.mxu0 %v989
        %1876 = vmatpush2.msra.mxu0 %v988
        %1877 = vmatprep.subr.mxu0 %v979
        %1878 = vmatpush2.msra.mxu0 %v978
        %1879 = vmatprep.subr.mxu0 %v969
        %1880 = vmatpush2.msra.mxu0 %v968
        %1881 = vmatprep.subr.mxu0 %v959
        %1882 = vmatpush2.msra.mxu0 %v958
        %1883 = vmatprep.subr.mxu0 %v949
        %1884 = vmatpush2.msra.mxu0 %v948
        %1885 = vmatprep.subr.mxu0 %v939
        %1886 = vmatpush2.msra.mxu0 %v938
        %1887 = vmatprep.subr.mxu0 %v929
        %1888 = vmatpush2.msra.mxu0 %v928
        %1889 = vmatprep.subr.mxu0 %v919
        %1890 = vmatpush2.msra.mxu0 %v918
        %1891 = vmatprep.subr.mxu0 %v909
        %1892 = vmatpush2.msra.mxu0 %v908
        %1893 = vmatprep.subr.mxu0 %v899
        %1894 = vmatpush2.msra.mxu0 %v898
        %1895 = vmatprep.subr.mxu0 %v889
        %1896 = vmatpush2.msra.mxu0 %v888
        %1897 = vmatprep.subr.mxu0 %v879
        %1898 = vmatpush2.msra.mxu0 %v878
        %1899 = vmatprep.subr.mxu0 %v869
        %1900 = vmatpush2.msra.mxu0 %v868
        %1901 = vmatprep.subr.mxu0 %v859
        %1902 = vmatpush2.msra.mxu0 %v858
        %1903 = vmatprep.subr.mxu0 %v849
        %1904 = vmatpush2.msra.mxu0 %v848
        %1905 = vmatprep.subr.mxu0 %v839
        %1906 = vmatpush2.msra.mxu0 %v838
        %1907 = vmatprep.mubr.f32.mxu0 %v333
        %1908 = vmatmul.mubr.f32.gmra.mxu0 %v332
        %v1909 = vpop.f32.mrf.mxu0
        %v1910 = vadd.f32 %v1817, %v1909
        %v1911 = vpop.f32.mrf.mxu0
        %v1912 = vadd.f32 %v1819, %v1911
        %1913 = vmatprep.mubr.f32.mxu0 %v337
        %1914 = vmatmul.mubr.f32.gmra.mxu0 %v336
        %v1915 = vpop.f32.mrf.mxu0
        %v1916 = vadd.f32 %v1823, %v1915
        %v1917 = vpop.f32.mrf.mxu0
        %v1918 = vadd.f32 %v1825, %v1917
        %1919 = vmatprep.mubr.f32.mxu0 %v341
        %1920 = vmatmul.mubr.f32.gmra.mxu0 %v340
        %v1921 = vpop.f32.mrf.mxu0
        %v1922 = vadd.f32 %v1829, %v1921
        %v1923 = vpop.f32.mrf.mxu0
        %v1924 = vadd.f32 %v1831, %v1923
        %1925 = vmatprep.mubr.f32.mxu0 %v345
        %1926 = vmatmul.mubr.f32.gmra.mxu0 %v344
        %v1927 = vpop.f32.mrf.mxu0
        %v1928 = vadd.f32 %v1835, %v1927
        %v1929 = vpop.f32.mrf.mxu0
        %v1930 = vadd.f32 %v1837, %v1929
        %1931 = vmatprep.mubr.f32.mxu0 %v349
        %1932 = vmatmul.mubr.f32.gmra.mxu0 %v348
        %v1933 = vpop.f32.mrf.mxu0
        %v1934 = vpop.f32.mrf.mxu0
        %1935 = vdwg.mxu0
        %v1936 = vadd.f32 %v1152, 0.0
        %v1937 = vadd.f32 %v1158, 0.0
        %v1938 = vadd.f32 %v1164, 0.0
        %v1939 = vadd.f32 %v1170, 0.0
        %v1940 = vadd.f32 %v1176, 0.0
        %vm1946 = vcmask 1042432
        %v1947 = vrot.slane %v1532, 5
        %v1948 = vrot.slane %v1538, 5
        %v1949 = vsel %vm1946, %v1947, %v1948
        %v1950 = vrot.slane %v1544, 5
        %v1951 = vsel %vm1946, %v1948, %v1950
        %v1952 = vrot.slane %v1550, 5
        %v1953 = vsel %vm1946, %v1950, %v1952
        %v1954 = vrot.slane %v1556, 5
        %v1955 = vsel %vm1946, %v1952, %v1954
        %v1961 = vadd.f32 %v1936, %v1947
        %v1962 = vadd.f32 %v1937, %v1949
        %v1963 = vadd.f32 %v1938, %v1951
        %v1964 = vadd.f32 %v1939, %v1953
        %v1965 = vadd.f32 %v1940, %v1955
        %vm1970 = vcmask 1045504
        %v1971 = vrot.slane %v1910, 2
        %v1972 = vrot.slane %v1916, 2
        %v1973 = vsel %vm1970, %v1971, %v1972
        %v1974 = vrot.slane %v1922, 2
        %v1975 = vsel %vm1970, %v1972, %v1974
        %v1976 = vrot.slane %v1928, 2
        %v1977 = vsel %vm1970, %v1974, %v1976
        %v1983 = vadd.f32 %v1961, %v1971
        %v1984 = vadd.f32 %v1962, %v1973
        %v1985 = vadd.f32 %v1963, %v1975
        %v1986 = vadd.f32 %v1964, %v1977
        %v1987 = vadd.f32 %v1965, %v1976
        %v1988 = vadd.f32 %v1344, 0.0
        %v1989 = vadd.f32 %v1350, 0.0
        %v1990 = vadd.f32 %v1356, 0.0
        %v1991 = vadd.f32 %v1362, 0.0
        %v1992 = vadd.f32 %v1368, 0.0
        %v1998 = vrot.slane %v1724, 5
        %v1999 = vrot.slane %v1730, 5
        %v2000 = vsel %vm1946, %v1998, %v1999
        %v2001 = vrot.slane %v1736, 5
        %v2002 = vsel %vm1946, %v1999, %v2001
        %v2003 = vrot.slane %v1742, 5
        %v2004 = vsel %vm1946, %v2001, %v2003
        %v2005 = vrot.slane %v1748, 5
        %v2006 = vsel %vm1946, %v2003, %v2005
        %v2012 = vadd.f32 %v1988, %v1998
        %v2013 = vadd.f32 %v1989, %v2000
        %v2014 = vadd.f32 %v1990, %v2002
        %v2015 = vadd.f32 %v1991, %v2004
        %v2016 = vadd.f32 %v1992, %v2006
        %v2017 = vadd.f32 %v1342, 0.0
        %v2018 = vadd.f32 %v1348, 0.0
        %v2019 = vadd.f32 %v1354, 0.0
        %v2020 = vadd.f32 %v1360, 0.0
        %v2021 = vadd.f32 %v1366, 0.0
        %v2027 = vrot.slane %v1722, 5
        %v2028 = vrot.slane %v1728, 5
        %v2029 = vsel %vm1946, %v2027, %v2028
        %v2030 = vrot.slane %v1734, 5
        %v2031 = vsel %vm1946, %v2028, %v2030
        %v2032 = vrot.slane %v1740, 5
        %v2033 = vsel %vm1946, %v2030, %v2032
        %v2034 = vrot.slane %v1746, 5
        %v2035 = vsel %vm1946, %v2032, %v2034
        %v2041 = vadd.f32 %v2017, %v2027
        %v2042 = vadd.f32 %v2018, %v2029
        %v2043 = vadd.f32 %v2019, %v2031
        %v2044 = vadd.f32 %v2020, %v2033
        %v2045 = vadd.f32 %v2021, %v2035
        %v2046 = vadd.f32 %v1154, 0.0
        %v2047 = vadd.f32 %v1160, 0.0
        %v2048 = vadd.f32 %v1166, 0.0
        %v2049 = vadd.f32 %v1172, 0.0
        %v2050 = vadd.f32 %v1178, 0.0
        %v2056 = vrot.slane %v1534, 5
        %v2057 = vrot.slane %v1540, 5
        %v2058 = vsel %vm1946, %v2056, %v2057
        %v2059 = vrot.slane %v1546, 5
        %v2060 = vsel %vm1946, %v2057, %v2059
        %v2061 = vrot.slane %v1552, 5
        %v2062 = vsel %vm1946, %v2059, %v2061
        %v2063 = vrot.slane %v1558, 5
        %v2064 = vsel %vm1946, %v2061, %v2063
        %v2070 = vadd.f32 %v2046, %v2056
        %v2071 = vadd.f32 %v2047, %v2058
        %v2072 = vadd.f32 %v2048, %v2060
        %v2073 = vadd.f32 %v2049, %v2062
        %v2074 = vadd.f32 %v2050, %v2064
        %v2079 = vrot.slane %v1912, 2
        %v2080 = vrot.slane %v1918, 2
        %v2081 = vsel %vm1970, %v2079, %v2080
        %v2082 = vrot.slane %v1924, 2
        %v2083 = vsel %vm1970, %v2080, %v2082
        %v2084 = vrot.slane %v1930, 2
        %v2085 = vsel %vm1970, %v2082, %v2084
        %v2091 = vadd.f32 %v2070, %v2079
        %v2092 = vadd.f32 %v2071, %v2081
        %v2093 = vadd.f32 %v2072, %v2083
        %v2094 = vadd.f32 %v2073, %v2085
        %v2095 = vadd.f32 %v2074, %v2084
        %vm2101 = vcmask 1041408
        %v2102 = vrot.slane %v2012, 6
        %v2103 = vrot.slane %v2013, 6
        %v2104 = vsel %vm2101, %v2102, %v2103
        %v2105 = vrot.slane %v2014, 6
        %v2106 = vsel %vm2101, %v2103, %v2105
        %v2107 = vrot.slane %v2015, 6
        %v2108 = vsel %vm2101, %v2105, %v2107
        %v2109 = vrot.slane %v2016, 6
        %v2110 = vsel %vm2101, %v2107, %v2109
        %vm2121 = vcmask 1040384
        %v2122 = vrot.slane %v2041, 7
        %v2123 = vrot.slane %v2042, 7
        %v2124 = vsel %vm2121, %v2122, %v2123
        %v2125 = vrot.slane %v2043, 7
        %v2126 = vsel %vm2121, %v2123, %v2125
        %v2127 = vrot.slane %v2044, 7
        %v2128 = vsel %vm2121, %v2125, %v2127
        %v2129 = vrot.slane %v2045, 7
        %v2130 = vsel %vm2121, %v2127, %v2129
        %v2136 = vld [vmem:[%s3] sm:$0xf]
        %v2138 = vlaneseq
        %v2139 = vshrl.u32 %v2138, 7
        %v2140 = vsub.s32 0, %v2139
        %v2141 = vrot.slane %v2136, %v2140
        %v2142 = vlaneseq
        %v2143 = vshrl.u32 %v2142, 7
        %v2144 = vsub.s32 1, %v2143
        %v2145 = vrot.slane %v2136, %v2144
        %v2146 = vlaneseq
        %v2147 = vshrl.u32 %v2146, 7
        %v2148 = vsub.s32 2, %v2147
        %v2149 = vrot.slane %v2136, %v2148
        %v2150 = vlaneseq
        %v2151 = vshrl.u32 %v2150, 7
        %v2152 = vsub.s32 3, %v2151
        %v2153 = vrot.slane %v2136, %v2152
        %v2158 = vadd.f32 %v1983, %v2141
        %v2159 = vadd.f32 %v2102, %v2145
        %v2160 = vadd.f32 %v2122, %v2149
        %v2161 = vadd.f32 %v2091, %v2153
        %v2162 = vadd.f32 %v1984, %v2141
        %v2163 = vadd.f32 %v2104, %v2145
        %v2164 = vadd.f32 %v2124, %v2149
        %v2165 = vadd.f32 %v2092, %v2153
        %v2166 = vadd.f32 %v1985, %v2141
        %v2167 = vadd.f32 %v2106, %v2145
        %v2168 = vadd.f32 %v2126, %v2149
        %v2169 = vadd.f32 %v2093, %v2153
        %v2170 = vadd.f32 %v1986, %v2141
        %v2171 = vadd.f32 %v2108, %v2145
        %v2172 = vadd.f32 %v2128, %v2149
        %v2173 = vadd.f32 %v2094, %v2153
        %v2174 = vadd.f32 %v1987, %v2141
        %v2175 = vadd.f32 %v2110, %v2145
        %v2176 = vadd.f32 %v2130, %v2149
        %v2177 = vadd.f32 %v2095, %v2153
        %v2178 = vmax.f32 %v2158, 0.0
        %v2179 = vmax.f32 %v2159, 0.0
        %v2180 = vmax.f32 %v2160, 0.0
        %v2181 = vmax.f32 %v2161, 0.0
        %v2182 = vmax.f32 %v2162, 0.0
        %v2183 = vmax.f32 %v2163, 0.0
        %v2184 = vmax.f32 %v2164, 0.0
        %v2185 = vmax.f32 %v2165, 0.0
        %v2186 = vmax.f32 %v2166, 0.0
        %v2187 = vmax.f32 %v2167, 0.0
        %v2188 = vmax.f32 %v2168, 0.0
        %v2189 = vmax.f32 %v2169, 0.0
        %v2190 = vmax.f32 %v2170, 0.0
        %v2191 = vmax.f32 %v2171, 0.0
        %v2192 = vmax.f32 %v2172, 0.0
        %v2193 = vmax.f32 %v2173, 0.0
        %v2194 = vmax.f32 %v2174, 0.0
        %v2195 = vmax.f32 %v2175, 0.0
        %v2196 = vmax.f32 %v2176, 0.0
        %v2197 = vmax.f32 %v2177, 0.0
        %v2218 = vrot.slane %v2178, 6
        %v2219 = vrot.slane %v2182, 6
        %v2220 = vsel %vm2101, %v2218, %v2219
        %v2221 = vrot.slane %v2179, 6
        %v2222 = vrot.slane %v2183, 6
        %v2223 = vsel %vm2101, %v2221, %v2222
        %v2224 = vrot.slane %v2180, 6
        %v2225 = vrot.slane %v2184, 6
        %v2226 = vsel %vm2101, %v2224, %v2225
        %v2227 = vrot.slane %v2181, 6
        %v2228 = vrot.slane %v2185, 6
        %v2229 = vsel %vm2101, %v2227, %v2228
        %v2230 = vrot.slane %v2186, 6
        %v2231 = vsel %vm2101, %v2219, %v2230
        %v2232 = vrot.slane %v2187, 6
        %v2233 = vsel %vm2101, %v2222, %v2232
        %v2234 = vrot.slane %v2188, 6
        %v2235 = vsel %vm2101, %v2225, %v2234
        %v2236 = vrot.slane %v2189, 6
        %v2237 = vsel %vm2101, %v2228, %v2236
        %v2238 = vrot.slane %v2190, 6
        %v2239 = vsel %vm2101, %v2230, %v2238
        %v2240 = vrot.slane %v2191, 6
        %v2241 = vsel %vm2101, %v2232, %v2240
        %v2242 = vrot.slane %v2192, 6
        %v2243 = vsel %vm2101, %v2234, %v2242
        %v2244 = vrot.slane %v2193, 6
        %v2245 = vsel %vm2101, %v2236, %v2244
        %v2246 = vrot.slane %v2194, 6
        %v2247 = vsel %vm2101, %v2238, %v2246
        %v2248 = vrot.slane %v2195, 6
        %v2249 = vsel %vm2101, %v2240, %v2248
        %v2250 = vrot.slane %v2196, 6
        %v2251 = vsel %vm2101, %v2242, %v2250
        %v2252 = vrot.slane %v2197, 6
        %v2253 = vsel %vm2101, %v2244, %v2252
        %2270 = vst [vmem:[%s328] sm:$0xff] %v2220
        %2271 = vst [vmem:[%s328 + $0x8] sm:$0xff] %v2223
        %2272 = vst [vmem:[%s328 + $0x10] sm:$0xff] %v2226
        %2273 = vst [vmem:[%s328 + $0x18] sm:$0xff] %v2229
        %2274 = vst [vmem:[%s328 + $0x20] sm:$0xff] %v2231
        %2275 = vst [vmem:[%s328 + $0x28] sm:$0xff] %v2233
        %2276 = vst [vmem:[%s328 + $0x30] sm:$0xff] %v2235
        %2277 = vst [vmem:[%s328 + $0x38] sm:$0xff] %v2237
        %2278 = vst [vmem:[%s328 + $0x40] sm:$0xff] %v2239
        %2279 = vst [vmem:[%s328 + $0x48] sm:$0xff] %v2241
        %2280 = vst [vmem:[%s328 + $0x50] sm:$0xff] %v2243
        %2281 = vst [vmem:[%s328 + $0x58] sm:$0xff] %v2245
        %2282 = vst [vmem:[%s328 + $0x60] sm:$0xff] %v2247
        %2283 = vst [vmem:[%s328 + $0x68] sm:$0xff] %v2249
        %2284 = vst [vmem:[%s328 + $0x70] sm:$0xff] %v2251
        %2285 = vst [vmem:[%s328 + $0x78] sm:$0xff] %v2253
        %s2286 = smul.u32 4, %s21
        %p2287 = scmp.lt.s32.totalorder %s20, 1
        %s2288 = scalar_select %p2287, %s20, 1
        %p2289 = scmp.lt.s32.totalorder %s2286, 3
        %s2290 = scalar_select %p2289, %s2286, 3
        %s2291 = smul.addr %s2290, 4
        %s2292 = smul.addr %s2288, 16
        %s2293 = sadd.s32 %s2291, %s2292
        %s2294 = smul.addr %s2293, 8
        %s2295 = scalar_lea.vmem %s4, %s2294
        // Predicated region
        $region41: #{_lambda_.4} parent=35 // pred_check
          %p2296 = pneg %p150
        $region42: #{_lambda_.4} parent=35 // pred_check_branch
          %2298 = sbr.rel (%p2296) target = $region44
        $region43: #{_lambda_.4} parent=35 // pred_region
          %s2299 = smul.u32 4, %s21
        $region44: #{_lambda_.4} parent=35 // pred_fallthru
          _
      $region36: #{_lambda_.4} parent=5 // pred_fallthru
        _
      %p2300 = scmp.le.s32.totalorder 2, %s11
      // Predicated region
      $region45: #{_lambda_.4} parent=5 // pred_check
        %p2301 = pneg %p2300
      $region46: #{_lambda_.4} parent=5 // pred_check_branch
        %2303 = sbr.rel (%p2301) target = $region48
      $region47: #{_lambda_.4} parent=5 // pred_region
        %s2304 = ssub.s32 %s11, 2
        // Predicated region
        $region49: #{_lambda_.4} parent=47 // pred_check
          %p2305 = pneg %p156
        $region50: #{_lambda_.4} parent=47 // pred_check_branch
          %2307 = sbr.rel (%p2305) target = $region52
        $region51: #{_lambda_.4} parent=47 // pred_region
          %s2308 = smul.u32 4, %s23
          %p2309 = scmp.lt.s32.totalorder %s22, 1
          %s2310 = scalar_select %p2309, %s22, 1
          %p2311 = scmp.lt.s32.totalorder %s2308, 3
          %s2312 = scalar_select %p2311, %s2308, 3
          %s2313 = smul.addr %s2312, 4
          %s2314 = smul.addr %s2310, 16
          %s2315 = sadd.s32 %s2313, %s2314
          %s2316 = smul.addr %s2315, 8
          %s2317 = scalar_lea.vmem %s4, %s2316
        $region52: #{_lambda_.4} parent=47 // pred_fallthru
          _
      $region48: #{_lambda_.4} parent=5 // pred_fallthru
        _
    $region6: #{_lambda_.4} parent=1 // loop_footer
      %s15 = sadd.s32 1, %s11
    $region7: #{_lambda_.4} parent=1 // loop_footer_branch
      %10 = sbr.rel target = $region3
    $region8: #{_lambda_.4} parent=1 // loop_exit
      _
    %2318 = vsyncpa [#allocation3], 1
    %s2319 = scalar_lea.sflag [#allocation3], 1
    %2320 = vsyncpa %s2319, 1

</llo_original>
